<compile_context>
chip_gen: v5e
topology: v5e:2x2
jax: 0.10.0
libtpu: 0.0.40
codegen_flags: <defaults>
</compile_context>

<pallas_src>
import jax
import jax.numpy as jnp
import numpy as np
from jax.experimental import pallas as pl
from jax.experimental.pallas import tpu as pltpu

BN_EPS = 1e-5
LANES = 128


def _round_up(v, m):
    return (v + m - 1) // m * m


# ------------------------------ fused kernel ---------------------------------

def _make_down_kernel(wq, r_out, n_valid):
    """conv3x3 -> BN -> ReLU -> conv3x3 -> BN -> ReLU, all in one VMEM-resident block."""
    inv_cnt = 1.0 / float(n_valid)
    taps = [(ky, kx) for ky in range(3) for kx in range(3)]

    def kernel(x_ref, w1_ref, g1_ref, b1_ref, w2_ref, g2_ref, b2_ref, m_ref,
               o_ref, h_ref):
        mask = m_ref[...]                                   # (r_out, 1) f32, 1.0 on real pixels

        def conv3x3(src_ref, w_ref):
            # src rows = flattened spatially halo-padded image; the 9 taps of a 3x3
            # pad=1 conv are just row shifts by ky*(Wp+2)+kx (in-VMEM im2col).
            acc = None
            for t, (ky, kx) in enumerate(taps):
                off = ky * wq + kx                          # static row offset
                lhs = src_ref[pl.ds(off, r_out), :].astype(jnp.bfloat16)
                d = jnp.dot(lhs, w_ref[t], preferred_element_type=jnp.float32)
                acc = d if acc is None else acc + d
            return acc                                      # (r_out, CP) f32

        def bn_relu(acc, g_ref, b_ref):
            # Training-mode BatchNorm2d: masked per-channel batch stats in f32
            # (halo/tail rows excluded), biased variance, affine + ReLU.
            mean = jnp.sum(acc * mask, axis=0, keepdims=True) * inv_cnt
            d = acc - mean
            var = jnp.sum(d * d * mask, axis=0, keepdims=True) * inv_cnt
            y = d * jax.lax.rsqrt(var + BN_EPS) * g_ref[...] + b_ref[...]
            return jnp.maximum(y, 0.0) * mask               # zeroed halo rows == conv2 zero pad

        # ---- stage 1: conv1 + BN1 + ReLU, result kept in VMEM scratch ----
        h1 = bn_relu(conv3x3(x_ref, w1_ref), g1_ref, b1_ref)
        h_ref[...] = jnp.zeros_like(h_ref)                  # halo + tail rows stay zero
        h_ref[pl.ds(wq + 1, r_out), :] = h1                 # shift into padded-image layout

        # ---- stage 2: conv2 + BN2 + ReLU, lane-dense (128-wide) output store ----
        o_ref[...] = bn_relu(conv3x3(h_ref, w2_ref), g2_ref, b2_ref)

    return kernel


# ------------------------------- Down.forward --------------------------------

def down_forward(x_nchw, params):
    w1, g1, b1, w2, g2, b2 = params
    n, c_in, h, w = x_nchw.shape
    c_mid, c_out = w1.shape[0], w2.shape[0]
    cp = _round_up(max(c_mid, c_out, 1), LANES)              # lane-dense channel pad

    hp, wp = h // 2, w // 2                                  # pooled spatial dims (even H, W)
    hq, wq = hp + 2, wp + 2                                  # +1 halo on each side
    s = hq * wq
    r_out = n * s                                            # rows computed by the kernel
    r_pad = _round_up(r_out + 2 * wq + 2, 8)                 # + max tap offset, sublane aligned

    # ---- glue (pure data movement): NCHW->NHWC, 2x2 maxpool, halo pad, flatten ----
    # TODO(synk): the maxpool / flatten could also be folded into the kernel to save one
    # small HBM round-trip of the pooled activation.
    xt = jnp.transpose(x_nchw, (0, 2, 3, 1)).astype(jnp.float32)
    pooled = jnp.max(xt.reshape(n, hp, 2, wp, 2, c_in), axis=(2, 4))     # (n, hp, wp, c_in)
    xpad = jnp.pad(pooled, ((0, 0), (1, 1), (1, 1), (0, 0)))             # (n, hq, wq, c_in)
    x_flat = jnp.pad(xpad.reshape(r_out, c_in), ((0, r_pad - r_out), (0, 0)))

    # ---- params: tap-major weights, channels zero-padded to 128 lanes, bf16 for MXU ----
    w1t = jnp.transpose(w1, (2, 3, 1, 0)).reshape(9, c_in, c_mid)
    w1p = jnp.pad(w1t, ((0, 0), (0, 0), (0, cp - c_mid))).astype(jnp.bfloat16)
    w2t = jnp.transpose(w2, (2, 3, 1, 0)).reshape(9, c_mid, c_out)
    w2p = jnp.pad(w2t, ((0, 0), (0, cp - c_mid), (0, cp - c_out))).astype(jnp.bfloat16)
    g1p = jnp.pad(g1.astype(jnp.float32).reshape(1, c_mid), ((0, 0), (0, cp - c_mid)))
    b1p = jnp.pad(b1.astype(jnp.float32).reshape(1, c_mid), ((0, 0), (0, cp - c_mid)))
    g2p = jnp.pad(g2.astype(jnp.float32).reshape(1, c_out), ((0, 0), (0, cp - c_out)))
    b2p = jnp.pad(b2.astype(jnp.float32).reshape(1, c_out), ((0, 0), (0, cp - c_out)))

    # mask = 1.0 on rows corresponding to real output pixels, 0.0 on halo/tail rows.
    rows = jnp.arange(s)
    row_ok = ((rows // wq) < hp) & ((rows % wq) < wp)
    mask = jnp.tile(row_ok, (n,)).astype(jnp.float32).reshape(r_out, 1)

    kernel = _make_down_kernel(wq, r_out, n * hp * wp)

    out_flat = pl.pallas_call(
        kernel,
        out_shape=jax.ShapeDtypeStruct((r_out, cp), jnp.float32),
        grid=(1,),                                           # whole problem fits one VMEM block
        in_specs=[
            pl.BlockSpec((r_pad, c_in), lambda i: (0, 0)),        # flattened pooled input
            pl.BlockSpec((9, c_in, cp), lambda i: (0, 0, 0)),     # conv1 weights (tap-major)
            pl.BlockSpec((1, cp), lambda i: (0, 0)),              # gamma1
            pl.BlockSpec((1, cp), lambda i: (0, 0)),              # beta1
            pl.BlockSpec((9, cp, cp), lambda i: (0, 0, 0)),       # conv2 weights (tap-major)
            pl.BlockSpec((1, cp), lambda i: (0, 0)),              # gamma2
            pl.BlockSpec((1, cp), lambda i: (0, 0)),              # beta2
            pl.BlockSpec((r_out, 1), lambda i: (0, 0)),           # valid-row mask
        ],
        out_specs=pl.BlockSpec((r_out, cp), lambda i: (0, 0)),
        scratch_shapes=[pltpu.VMEM((r_pad, cp), jnp.float32)],    # stage-1 activation (VMEM only)
        compiler_params=pltpu.CompilerParams(
            dimension_semantics=("arbitrary",),
            vmem_limit_bytes=64 * 1024 * 1024),
    )(x_flat, w1p, g1p, b1p, w2p, g2p, b2p, mask)

    # Drop halo rows / padded lanes once, back to NCHW.
    out = out_flat.reshape(n, hq, wq, cp)[:, :hp, :wp, :c_out]
    return jnp.transpose(out, (0, 3, 1, 2))


# ------------------------- pure-JAX reference (check) ------------------------

def _ref_conv_bn_relu(x_nhwc, w_oihw, gamma, beta):
    w_hwio = jnp.transpose(w_oihw, (2, 3, 1, 0))
    y = jax.lax.conv_general_dilated(x_nhwc, w_hwio, (1, 1), 'SAME',
                                     dimension_numbers=('NHWC', 'HWIO', 'NHWC'))
    mean = jnp.mean(y, axis=(0, 1, 2), keepdims=True)
    var = jnp.mean(jnp.square(y - mean), axis=(0, 1, 2), keepdims=True)
    y = (y - mean) * jax.lax.rsqrt(var + BN_EPS)
    y = y * gamma.reshape(1, 1, 1, -1) + beta.reshape(1, 1, 1, -1)
    return jnp.maximum(y, 0.0)


def down_forward_reference(x_nchw, params):
    w1, g1, b1, w2, g2, b2 = params
    x = jnp.transpose(x_nchw, (0, 2, 3, 1)).astype(jnp.float32)
    n, h, w, c = x.shape
    pooled = jnp.max(x.reshape(n, h // 2, 2, w // 2, 2, c), axis=(2, 4))
    h1 = _ref_conv_bn_relu(pooled, w1, g1, b1)
    y = _ref_conv_bn_relu(h1, w2, g2, b2)
    return jnp.transpose(y, (0, 3, 1, 2))


# ----------------------------------- main ------------------------------------

if __name__ == "__main__":
    key = jax.random.PRNGKey(0)
    kx, kw1, kw2 = jax.random.split(key, 3)

    in_channels, out_channels = 4, 8                 # Down(4, 8)
    batch, height, width = 2, 16, 16

    x = jax.random.normal(kx, (batch, in_channels, height, width), jnp.float32)

    # DoubleConv(in_channels=4, out_channels=8, mid_channels=8) parameters.
    w1 = jax.random.normal(kw1, (out_channels, in_channels, 3, 3), jnp.float32) * 0.2
    w2 = jax.random.normal(kw2, (out_channels, out_channels, 3, 3), jnp.float32) * 0.2
    g1 = jnp.ones((out_channels,), jnp.float32)      # BatchNorm2d default init
    b1 = jnp.zeros((out_channels,), jnp.float32)
    g2 = jnp.ones((out_channels,), jnp.float32)
    b2 = jnp.zeros((out_channels,), jnp.float32)
    params = (w1, g1, b1, w2, g2, b2)

    out = jax.jit(down_forward)(x, params)
    out = jax.block_until_ready(out)
    assert out.shape == (batch, out_channels, height // 2, width // 2)

    ref = down_forward_reference(x, params)
    # bf16 MXU operands (f32 accumulation / f32 BN) vs the pure-f32 reference
    # -> relaxed tolerance.
    np.testing.assert_allclose(np.asarray(out), np.asarray(ref), rtol=3e-2, atol=3e-2)
    print("KERNEL_OK")
</pallas_src>

<mosaic_0001>
module attributes {stable_mosaic.version = 11 : i64} {
  func.func @kernel(%arg0: i32, %arg1: memref<224x4xf32, #tpu.memory_space<vmem>>, %arg2: memref<9x4x128xbf16, #tpu.memory_space<vmem>>, %arg3: memref<1x128xf32, #tpu.memory_space<vmem>>, %arg4: memref<1x128xf32, #tpu.memory_space<vmem>>, %arg5: memref<9x128x128xbf16, #tpu.memory_space<vmem>>, %arg6: memref<1x128xf32, #tpu.memory_space<vmem>>, %arg7: memref<1x128xf32, #tpu.memory_space<vmem>>, %arg8: memref<200x1xf32, #tpu.memory_space<vmem>>, %arg9: memref<200x128xf32, #tpu.memory_space<vmem>>, %arg10: memref<224x128xf32, #tpu.memory_space<vmem>>) attributes {dimension_semantics = [#tpu.dimension_semantics<arbitrary>], iteration_bounds = array<i64: 1>, scalar_prefetch = 0 : i64, scratch_operands = 1 : i64, tpu.core_type = #tpu.core_type<tc>, window_params = [{pipeline_mode = #tpu.pipeline_mode<synchronous>, transform_indices = @transform_0, window_bounds = array<i64: 224, 4>}, {pipeline_mode = #tpu.pipeline_mode<synchronous>, transform_indices = @transform_1, window_bounds = array<i64: 9, 4, 128>}, {pipeline_mode = #tpu.pipeline_mode<synchronous>, transform_indices = @transform_2, window_bounds = array<i64: 1, 128>}, {pipeline_mode = #tpu.pipeline_mode<synchronous>, transform_indices = @transform_3, window_bounds = array<i64: 1, 128>}, {pipeline_mode = #tpu.pipeline_mode<synchronous>, transform_indices = @transform_4, window_bounds = array<i64: 9, 128, 128>}, {pipeline_mode = #tpu.pipeline_mode<synchronous>, transform_indices = @transform_5, window_bounds = array<i64: 1, 128>}, {pipeline_mode = #tpu.pipeline_mode<synchronous>, transform_indices = @transform_6, window_bounds = array<i64: 1, 128>}, {pipeline_mode = #tpu.pipeline_mode<synchronous>, transform_indices = @transform_7, window_bounds = array<i64: 200, 1>}, {pipeline_mode = #tpu.pipeline_mode<synchronous>, transform_indices = @transform_8, window_bounds = array<i64: 200, 128>}]} {
    %c0 = arith.constant 0 : index
    %c0_0 = arith.constant 0 : index
    %0 = vector.load %arg8[%c0, %c0_0] : memref<200x1xf32, #tpu.memory_space<vmem>>, vector<200x1xf32>
    %c0_1 = arith.constant 0 : index
    %c0_2 = arith.constant 0 : index
    %1 = vector.load %arg1[%c0_1, %c0_2] : memref<224x4xf32, #tpu.memory_space<vmem>>, vector<200x4xf32>
    %2 = arith.truncf %1 : vector<200x4xf32> to vector<200x4xbf16>
    %c0_3 = arith.constant 0 : index
    %c0_4 = arith.constant 0 : index
    %c0_5 = arith.constant 0 : index
    %3 = vector.load %arg2[%c0_3, %c0_4, %c0_5] : memref<9x4x128xbf16, #tpu.memory_space<vmem>>, vector<1x4x128xbf16>
    %4 = vector.shape_cast %3 : vector<1x4x128xbf16> to vector<4x128xbf16>
    %cst = arith.constant dense<0.000000e+00> : vector<200x128xf32>
    %5 = tpu.matmul %2, %4, %cst {dimension_numbers = #tpu.dot_dimension_numbers<[1], [0], [0], [1], [0, 0, 1, 1], [], []>} : vector<200x4xbf16>, vector<4x128xbf16>, vector<200x128xf32> -> vector<200x128xf32>
    %c1 = arith.constant 1 : index
    %c0_6 = arith.constant 0 : index
    %6 = vector.load %arg1[%c1, %c0_6] : memref<224x4xf32, #tpu.memory_space<vmem>>, vector<200x4xf32>
    %7 = arith.truncf %6 : vector<200x4xf32> to vector<200x4xbf16>
    %c1_7 = arith.constant 1 : index
    %c0_8 = arith.constant 0 : index
    %c0_9 = arith.constant 0 : index
    %8 = vector.load %arg2[%c1_7, %c0_8, %c0_9] : memref<9x4x128xbf16, #tpu.memory_space<vmem>>, vector<1x4x128xbf16>
    %9 = vector.shape_cast %8 : vector<1x4x128xbf16> to vector<4x128xbf16>
    %cst_10 = arith.constant dense<0.000000e+00> : vector<200x128xf32>
    %10 = tpu.matmul %7, %9, %cst_10 {dimension_numbers = #tpu.dot_dimension_numbers<[1], [0], [0], [1], [0, 0, 1, 1], [], []>} : vector<200x4xbf16>, vector<4x128xbf16>, vector<200x128xf32> -> vector<200x128xf32>
    %11 = arith.addf %5, %10 : vector<200x128xf32>
    %c2 = arith.constant 2 : index
    %c0_11 = arith.constant 0 : index
    %12 = vector.load %arg1[%c2, %c0_11] : memref<224x4xf32, #tpu.memory_space<vmem>>, vector<200x4xf32>
    %13 = arith.truncf %12 : vector<200x4xf32> to vector<200x4xbf16>
    %c2_12 = arith.constant 2 : index
    %c0_13 = arith.constant 0 : index
    %c0_14 = arith.constant 0 : index
    %14 = vector.load %arg2[%c2_12, %c0_13, %c0_14] : memref<9x4x128xbf16, #tpu.memory_space<vmem>>, vector<1x4x128xbf16>
    %15 = vector.shape_cast %14 : vector<1x4x128xbf16> to vector<4x128xbf16>
    %cst_15 = arith.constant dense<0.000000e+00> : vector<200x128xf32>
    %16 = tpu.matmul %13, %15, %cst_15 {dimension_numbers = #tpu.dot_dimension_numbers<[1], [0], [0], [1], [0, 0, 1, 1], [], []>} : vector<200x4xbf16>, vector<4x128xbf16>, vector<200x128xf32> -> vector<200x128xf32>
    %17 = arith.addf %11, %16 : vector<200x128xf32>
    %c10 = arith.constant 10 : index
    %c0_16 = arith.constant 0 : index
    %18 = vector.load %arg1[%c10, %c0_16] : memref<224x4xf32, #tpu.memory_space<vmem>>, vector<200x4xf32>
    %19 = arith.truncf %18 : vector<200x4xf32> to vector<200x4xbf16>
    %c3 = arith.constant 3 : index
    %c0_17 = arith.constant 0 : index
    %c0_18 = arith.constant 0 : index
    %20 = vector.load %arg2[%c3, %c0_17, %c0_18] : memref<9x4x128xbf16, #tpu.memory_space<vmem>>, vector<1x4x128xbf16>
    %21 = vector.shape_cast %20 : vector<1x4x128xbf16> to vector<4x128xbf16>
    %cst_19 = arith.constant dense<0.000000e+00> : vector<200x128xf32>
    %22 = tpu.matmul %19, %21, %cst_19 {dimension_numbers = #tpu.dot_dimension_numbers<[1], [0], [0], [1], [0, 0, 1, 1], [], []>} : vector<200x4xbf16>, vector<4x128xbf16>, vector<200x128xf32> -> vector<200x128xf32>
    %23 = arith.addf %17, %22 : vector<200x128xf32>
    %c11 = arith.constant 11 : index
    %c0_20 = arith.constant 0 : index
    %24 = vector.load %arg1[%c11, %c0_20] : memref<224x4xf32, #tpu.memory_space<vmem>>, vector<200x4xf32>
    %25 = arith.truncf %24 : vector<200x4xf32> to vector<200x4xbf16>
    %c4 = arith.constant 4 : index
    %c0_21 = arith.constant 0 : index
    %c0_22 = arith.constant 0 : index
    %26 = vector.load %arg2[%c4, %c0_21, %c0_22] : memref<9x4x128xbf16, #tpu.memory_space<vmem>>, vector<1x4x128xbf16>
    %27 = vector.shape_cast %26 : vector<1x4x128xbf16> to vector<4x128xbf16>
    %cst_23 = arith.constant dense<0.000000e+00> : vector<200x128xf32>
    %28 = tpu.matmul %25, %27, %cst_23 {dimension_numbers = #tpu.dot_dimension_numbers<[1], [0], [0], [1], [0, 0, 1, 1], [], []>} : vector<200x4xbf16>, vector<4x128xbf16>, vector<200x128xf32> -> vector<200x128xf32>
    %29 = arith.addf %23, %28 : vector<200x128xf32>
    %c12 = arith.constant 12 : index
    %c0_24 = arith.constant 0 : index
    %30 = vector.load %arg1[%c12, %c0_24] : memref<224x4xf32, #tpu.memory_space<vmem>>, vector<200x4xf32>
    %31 = arith.truncf %30 : vector<200x4xf32> to vector<200x4xbf16>
    %c5 = arith.constant 5 : index
    %c0_25 = arith.constant 0 : index
    %c0_26 = arith.constant 0 : index
    %32 = vector.load %arg2[%c5, %c0_25, %c0_26] : memref<9x4x128xbf16, #tpu.memory_space<vmem>>, vector<1x4x128xbf16>
    %33 = vector.shape_cast %32 : vector<1x4x128xbf16> to vector<4x128xbf16>
    %cst_27 = arith.constant dense<0.000000e+00> : vector<200x128xf32>
    %34 = tpu.matmul %31, %33, %cst_27 {dimension_numbers = #tpu.dot_dimension_numbers<[1], [0], [0], [1], [0, 0, 1, 1], [], []>} : vector<200x4xbf16>, vector<4x128xbf16>, vector<200x128xf32> -> vector<200x128xf32>
    %35 = arith.addf %29, %34 : vector<200x128xf32>
    %c20 = arith.constant 20 : index
    %c0_28 = arith.constant 0 : index
    %36 = vector.load %arg1[%c20, %c0_28] : memref<224x4xf32, #tpu.memory_space<vmem>>, vector<200x4xf32>
    %37 = arith.truncf %36 : vector<200x4xf32> to vector<200x4xbf16>
    %c6 = arith.constant 6 : index
    %c0_29 = arith.constant 0 : index
    %c0_30 = arith.constant 0 : index
    %38 = vector.load %arg2[%c6, %c0_29, %c0_30] : memref<9x4x128xbf16, #tpu.memory_space<vmem>>, vector<1x4x128xbf16>
    %39 = vector.shape_cast %38 : vector<1x4x128xbf16> to vector<4x128xbf16>
    %cst_31 = arith.constant dense<0.000000e+00> : vector<200x128xf32>
    %40 = tpu.matmul %37, %39, %cst_31 {dimension_numbers = #tpu.dot_dimension_numbers<[1], [0], [0], [1], [0, 0, 1, 1], [], []>} : vector<200x4xbf16>, vector<4x128xbf16>, vector<200x128xf32> -> vector<200x128xf32>
    %41 = arith.addf %35, %40 : vector<200x128xf32>
    %c21 = arith.constant 21 : index
    %c0_32 = arith.constant 0 : index
    %42 = vector.load %arg1[%c21, %c0_32] : memref<224x4xf32, #tpu.memory_space<vmem>>, vector<200x4xf32>
    %43 = arith.truncf %42 : vector<200x4xf32> to vector<200x4xbf16>
    %c7 = arith.constant 7 : index
    %c0_33 = arith.constant 0 : index
    %c0_34 = arith.constant 0 : index
    %44 = vector.load %arg2[%c7, %c0_33, %c0_34] : memref<9x4x128xbf16, #tpu.memory_space<vmem>>, vector<1x4x128xbf16>
    %45 = vector.shape_cast %44 : vector<1x4x128xbf16> to vector<4x128xbf16>
    %cst_35 = arith.constant dense<0.000000e+00> : vector<200x128xf32>
    %46 = tpu.matmul %43, %45, %cst_35 {dimension_numbers = #tpu.dot_dimension_numbers<[1], [0], [0], [1], [0, 0, 1, 1], [], []>} : vector<200x4xbf16>, vector<4x128xbf16>, vector<200x128xf32> -> vector<200x128xf32>
    %47 = arith.addf %41, %46 : vector<200x128xf32>
    %c22 = arith.constant 22 : index
    %c0_36 = arith.constant 0 : index
    %48 = vector.load %arg1[%c22, %c0_36] : memref<224x4xf32, #tpu.memory_space<vmem>>, vector<200x4xf32>
    %49 = arith.truncf %48 : vector<200x4xf32> to vector<200x4xbf16>
    %c8 = arith.constant 8 : index
    %c0_37 = arith.constant 0 : index
    %c0_38 = arith.constant 0 : index
    %50 = vector.load %arg2[%c8, %c0_37, %c0_38] : memref<9x4x128xbf16, #tpu.memory_space<vmem>>, vector<1x4x128xbf16>
    %51 = vector.shape_cast %50 : vector<1x4x128xbf16> to vector<4x128xbf16>
    %cst_39 = arith.constant dense<0.000000e+00> : vector<200x128xf32>
    %52 = tpu.matmul %49, %51, %cst_39 {dimension_numbers = #tpu.dot_dimension_numbers<[1], [0], [0], [1], [0, 0, 1, 1], [], []>} : vector<200x4xbf16>, vector<4x128xbf16>, vector<200x128xf32> -> vector<200x128xf32>
    %53 = arith.addf %47, %52 : vector<200x128xf32>
    %54 = vector.broadcast %0 : vector<200x1xf32> to vector<200x128xf32>
    %55 = arith.mulf %53, %54 : vector<200x128xf32>
    %cst_40 = arith.constant dense<0.000000e+00> : vector<128xf32>
    %56 = vector.multi_reduction <add>, %55, %cst_40 [0] : vector<200x128xf32> to vector<128xf32>
    %57 = vector.shape_cast %56 : vector<128xf32> to vector<1x128xf32>
    %cst_41 = arith.constant 7.812500e-03 : f32
    %58 = vector.broadcast %cst_41 : f32 to vector<1x128xf32>
    %59 = arith.mulf %57, %58 : vector<1x128xf32>
    %60 = vector.broadcast %59 : vector<1x128xf32> to vector<200x128xf32>
    %61 = arith.subf %53, %60 : vector<200x128xf32>
    %62 = arith.mulf %61, %61 : vector<200x128xf32>
    %63 = vector.broadcast %0 : vector<200x1xf32> to vector<200x128xf32>
    %64 = arith.mulf %62, %63 : vector<200x128xf32>
    %cst_42 = arith.constant dense<0.000000e+00> : vector<128xf32>
    %65 = vector.multi_reduction <add>, %64, %cst_42 [0] : vector<200x128xf32> to vector<128xf32>
    %66 = vector.shape_cast %65 : vector<128xf32> to vector<1x128xf32>
    %cst_43 = arith.constant 7.812500e-03 : f32
    %67 = vector.broadcast %cst_43 : f32 to vector<1x128xf32>
    %68 = arith.mulf %66, %67 : vector<1x128xf32>
    %cst_44 = arith.constant 9.99999974E-6 : f32
    %69 = vector.broadcast %cst_44 : f32 to vector<1x128xf32>
    %70 = arith.addf %68, %69 : vector<1x128xf32>
    %71 = math.rsqrt %70 : vector<1x128xf32>
    %72 = vector.broadcast %71 : vector<1x128xf32> to vector<200x128xf32>
    %73 = arith.mulf %61, %72 : vector<200x128xf32>
    %c0_45 = arith.constant 0 : index
    %c0_46 = arith.constant 0 : index
    %74 = vector.load %arg3[%c0_45, %c0_46] : memref<1x128xf32, #tpu.memory_space<vmem>>, vector<1x128xf32>
    %75 = vector.broadcast %74 : vector<1x128xf32> to vector<200x128xf32>
    %76 = arith.mulf %73, %75 : vector<200x128xf32>
    %c0_47 = arith.constant 0 : index
    %c0_48 = arith.constant 0 : index
    %77 = vector.load %arg4[%c0_47, %c0_48] : memref<1x128xf32, #tpu.memory_space<vmem>>, vector<1x128xf32>
    %78 = vector.broadcast %77 : vector<1x128xf32> to vector<200x128xf32>
    %79 = arith.addf %76, %78 : vector<200x128xf32>
    %cst_49 = arith.constant 0.000000e+00 : f32
    %80 = vector.broadcast %cst_49 : f32 to vector<200x128xf32>
    %81 = arith.maximumf %79, %80 : vector<200x128xf32>
    %82 = vector.broadcast %0 : vector<200x1xf32> to vector<200x128xf32>
    %83 = arith.mulf %81, %82 : vector<200x128xf32>
    %cst_50 = arith.constant 0.000000e+00 : f32
    %84 = vector.broadcast %cst_50 : f32 to vector<224x128xf32>
    %c0_51 = arith.constant 0 : index
    %c0_52 = arith.constant 0 : index
    %85 = vector.load %arg10[%c0_51, %c0_52] : memref<224x128xf32, #tpu.memory_space<vmem>>, vector<224x128xf32>
    tpu.vector_store %arg10[%c0_51, %c0_52], %84 {strides = array<i32>} : memref<224x128xf32, #tpu.memory_space<vmem>>, vector<224x128xf32>,
    %c11_53 = arith.constant 11 : index
    %c0_54 = arith.constant 0 : index
    %86 = vector.load %arg10[%c11_53, %c0_54] : memref<224x128xf32, #tpu.memory_space<vmem>>, vector<200x128xf32>
    tpu.vector_store %arg10[%c11_53, %c0_54], %83 {strides = array<i32>} : memref<224x128xf32, #tpu.memory_space<vmem>>, vector<200x128xf32>,
    %c0_55 = arith.constant 0 : index
    %c0_56 = arith.constant 0 : index
    %87 = vector.load %arg10[%c0_55, %c0_56] : memref<224x128xf32, #tpu.memory_space<vmem>>, vector<200x128xf32>
    %88 = arith.truncf %87 : vector<200x128xf32> to vector<200x128xbf16>
    %c0_57 = arith.constant 0 : index
    %c0_58 = arith.constant 0 : index
    %c0_59 = arith.constant 0 : index
    %89 = vector.load %arg5[%c0_57, %c0_58, %c0_59] : memref<9x128x128xbf16, #tpu.memory_space<vmem>>, vector<1x128x128xbf16>
    %90 = vector.shape_cast %89 : vector<1x128x128xbf16> to vector<128x128xbf16>
    %cst_60 = arith.constant dense<0.000000e+00> : vector<200x128xf32>
    %91 = tpu.matmul %88, %90, %cst_60 {dimension_numbers = #tpu.dot_dimension_numbers<[1], [0], [0], [1], [0, 0, 1, 1], [], []>} : vector<200x128xbf16>, vector<128x128xbf16>, vector<200x128xf32> -> vector<200x128xf32>
    %c1_61 = arith.constant 1 : index
    %c0_62 = arith.constant 0 : index
    %92 = vector.load %arg10[%c1_61, %c0_62] : memref<224x128xf32, #tpu.memory_space<vmem>>, vector<200x128xf32>
    %93 = arith.truncf %92 : vector<200x128xf32> to vector<200x128xbf16>
    %c1_63 = arith.constant 1 : index
    %c0_64 = arith.constant 0 : index
    %c0_65 = arith.constant 0 : index
    %94 = vector.load %arg5[%c1_63, %c0_64, %c0_65] : memref<9x128x128xbf16, #tpu.memory_space<vmem>>, vector<1x128x128xbf16>
    %95 = vector.shape_cast %94 : vector<1x128x128xbf16> to vector<128x128xbf16>
    %cst_66 = arith.constant dense<0.000000e+00> : vector<200x128xf32>
    %96 = tpu.matmul %93, %95, %cst_66 {dimension_numbers = #tpu.dot_dimension_numbers<[1], [0], [0], [1], [0, 0, 1, 1], [], []>} : vector<200x128xbf16>, vector<128x128xbf16>, vector<200x128xf32> -> vector<200x128xf32>
    %97 = arith.addf %91, %96 : vector<200x128xf32>
    %c2_67 = arith.constant 2 : index
    %c0_68 = arith.constant 0 : index
    %98 = vector.load %arg10[%c2_67, %c0_68] : memref<224x128xf32, #tpu.memory_space<vmem>>, vector<200x128xf32>
    %99 = arith.truncf %98 : vector<200x128xf32> to vector<200x128xbf16>
    %c2_69 = arith.constant 2 : index
    %c0_70 = arith.constant 0 : index
    %c0_71 = arith.constant 0 : index
    %100 = vector.load %arg5[%c2_69, %c0_70, %c0_71] : memref<9x128x128xbf16, #tpu.memory_space<vmem>>, vector<1x128x128xbf16>
    %101 = vector.shape_cast %100 : vector<1x128x128xbf16> to vector<128x128xbf16>
    %cst_72 = arith.constant dense<0.000000e+00> : vector<200x128xf32>
    %102 = tpu.matmul %99, %101, %cst_72 {dimension_numbers = #tpu.dot_dimension_numbers<[1], [0], [0], [1], [0, 0, 1, 1], [], []>} : vector<200x128xbf16>, vector<128x128xbf16>, vector<200x128xf32> -> vector<200x128xf32>
    %103 = arith.addf %97, %102 : vector<200x128xf32>
    %c10_73 = arith.constant 10 : index
    %c0_74 = arith.constant 0 : index
    %104 = vector.load %arg10[%c10_73, %c0_74] : memref<224x128xf32, #tpu.memory_space<vmem>>, vector<200x128xf32>
    %105 = arith.truncf %104 : vector<200x128xf32> to vector<200x128xbf16>
    %c3_75 = arith.constant 3 : index
    %c0_76 = arith.constant 0 : index
    %c0_77 = arith.constant 0 : index
    %106 = vector.load %arg5[%c3_75, %c0_76, %c0_77] : memref<9x128x128xbf16, #tpu.memory_space<vmem>>, vector<1x128x128xbf16>
    %107 = vector.shape_cast %106 : vector<1x128x128xbf16> to vector<128x128xbf16>
    %cst_78 = arith.constant dense<0.000000e+00> : vector<200x128xf32>
    %108 = tpu.matmul %105, %107, %cst_78 {dimension_numbers = #tpu.dot_dimension_numbers<[1], [0], [0], [1], [0, 0, 1, 1], [], []>} : vector<200x128xbf16>, vector<128x128xbf16>, vector<200x128xf32> -> vector<200x128xf32>
    %109 = arith.addf %103, %108 : vector<200x128xf32>
    %c11_79 = arith.constant 11 : index
    %c0_80 = arith.constant 0 : index
    %110 = vector.load %arg10[%c11_79, %c0_80] : memref<224x128xf32, #tpu.memory_space<vmem>>, vector<200x128xf32>
    %111 = arith.truncf %110 : vector<200x128xf32> to vector<200x128xbf16>
    %c4_81 = arith.constant 4 : index
    %c0_82 = arith.constant 0 : index
    %c0_83 = arith.constant 0 : index
    %112 = vector.load %arg5[%c4_81, %c0_82, %c0_83] : memref<9x128x128xbf16, #tpu.memory_space<vmem>>, vector<1x128x128xbf16>
    %113 = vector.shape_cast %112 : vector<1x128x128xbf16> to vector<128x128xbf16>
    %cst_84 = arith.constant dense<0.000000e+00> : vector<200x128xf32>
    %114 = tpu.matmul %111, %113, %cst_84 {dimension_numbers = #tpu.dot_dimension_numbers<[1], [0], [0], [1], [0, 0, 1, 1], [], []>} : vector<200x128xbf16>, vector<128x128xbf16>, vector<200x128xf32> -> vector<200x128xf32>
    %115 = arith.addf %109, %114 : vector<200x128xf32>
    %c12_85 = arith.constant 12 : index
    %c0_86 = arith.constant 0 : index
    %116 = vector.load %arg10[%c12_85, %c0_86] : memref<224x128xf32, #tpu.memory_space<vmem>>, vector<200x128xf32>
    %117 = arith.truncf %116 : vector<200x128xf32> to vector<200x128xbf16>
    %c5_87 = arith.constant 5 : index
    %c0_88 = arith.constant 0 : index
    %c0_89 = arith.constant 0 : index
    %118 = vector.load %arg5[%c5_87, %c0_88, %c0_89] : memref<9x128x128xbf16, #tpu.memory_space<vmem>>, vector<1x128x128xbf16>
    %119 = vector.shape_cast %118 : vector<1x128x128xbf16> to vector<128x128xbf16>
    %cst_90 = arith.constant dense<0.000000e+00> : vector<200x128xf32>
    %120 = tpu.matmul %117, %119, %cst_90 {dimension_numbers = #tpu.dot_dimension_numbers<[1], [0], [0], [1], [0, 0, 1, 1], [], []>} : vector<200x128xbf16>, vector<128x128xbf16>, vector<200x128xf32> -> vector<200x128xf32>
    %121 = arith.addf %115, %120 : vector<200x128xf32>
    %c20_91 = arith.constant 20 : index
    %c0_92 = arith.constant 0 : index
    %122 = vector.load %arg10[%c20_91, %c0_92] : memref<224x128xf32, #tpu.memory_space<vmem>>, vector<200x128xf32>
    %123 = arith.truncf %122 : vector<200x128xf32> to vector<200x128xbf16>
    %c6_93 = arith.constant 6 : index
    %c0_94 = arith.constant 0 : index
    %c0_95 = arith.constant 0 : index
    %124 = vector.load %arg5[%c6_93, %c0_94, %c0_95] : memref<9x128x128xbf16, #tpu.memory_space<vmem>>, vector<1x128x128xbf16>
    %125 = vector.shape_cast %124 : vector<1x128x128xbf16> to vector<128x128xbf16>
    %cst_96 = arith.constant dense<0.000000e+00> : vector<200x128xf32>
    %126 = tpu.matmul %123, %125, %cst_96 {dimension_numbers = #tpu.dot_dimension_numbers<[1], [0], [0], [1], [0, 0, 1, 1], [], []>} : vector<200x128xbf16>, vector<128x128xbf16>, vector<200x128xf32> -> vector<200x128xf32>
    %127 = arith.addf %121, %126 : vector<200x128xf32>
    %c21_97 = arith.constant 21 : index
    %c0_98 = arith.constant 0 : index
    %128 = vector.load %arg10[%c21_97, %c0_98] : memref<224x128xf32, #tpu.memory_space<vmem>>, vector<200x128xf32>
    %129 = arith.truncf %128 : vector<200x128xf32> to vector<200x128xbf16>
    %c7_99 = arith.constant 7 : index
    %c0_100 = arith.constant 0 : index
    %c0_101 = arith.constant 0 : index
    %130 = vector.load %arg5[%c7_99, %c0_100, %c0_101] : memref<9x128x128xbf16, #tpu.memory_space<vmem>>, vector<1x128x128xbf16>
    %131 = vector.shape_cast %130 : vector<1x128x128xbf16> to vector<128x128xbf16>
    %cst_102 = arith.constant dense<0.000000e+00> : vector<200x128xf32>
    %132 = tpu.matmul %129, %131, %cst_102 {dimension_numbers = #tpu.dot_dimension_numbers<[1], [0], [0], [1], [0, 0, 1, 1], [], []>} : vector<200x128xbf16>, vector<128x128xbf16>, vector<200x128xf32> -> vector<200x128xf32>
    %133 = arith.addf %127, %132 : vector<200x128xf32>
    %c22_103 = arith.constant 22 : index
    %c0_104 = arith.constant 0 : index
    %134 = vector.load %arg10[%c22_103, %c0_104] : memref<224x128xf32, #tpu.memory_space<vmem>>, vector<200x128xf32>
    %135 = arith.truncf %134 : vector<200x128xf32> to vector<200x128xbf16>
    %c8_105 = arith.constant 8 : index
    %c0_106 = arith.constant 0 : index
    %c0_107 = arith.constant 0 : index
    %136 = vector.load %arg5[%c8_105, %c0_106, %c0_107] : memref<9x128x128xbf16, #tpu.memory_space<vmem>>, vector<1x128x128xbf16>
    %137 = vector.shape_cast %136 : vector<1x128x128xbf16> to vector<128x128xbf16>
    %cst_108 = arith.constant dense<0.000000e+00> : vector<200x128xf32>
    %138 = tpu.matmul %135, %137, %cst_108 {dimension_numbers = #tpu.dot_dimension_numbers<[1], [0], [0], [1], [0, 0, 1, 1], [], []>} : vector<200x128xbf16>, vector<128x128xbf16>, vector<200x128xf32> -> vector<200x128xf32>
    %139 = arith.addf %133, %138 : vector<200x128xf32>
    %140 = vector.broadcast %0 : vector<200x1xf32> to vector<200x128xf32>
    %141 = arith.mulf %139, %140 : vector<200x128xf32>
    %cst_109 = arith.constant dense<0.000000e+00> : vector<128xf32>
    %142 = vector.multi_reduction <add>, %141, %cst_109 [0] : vector<200x128xf32> to vector<128xf32>
    %143 = vector.shape_cast %142 : vector<128xf32> to vector<1x128xf32>
    %cst_110 = arith.constant 7.812500e-03 : f32
    %144 = vector.broadcast %cst_110 : f32 to vector<1x128xf32>
    %145 = arith.mulf %143, %144 : vector<1x128xf32>
    %146 = vector.broadcast %145 : vector<1x128xf32> to vector<200x128xf32>
    %147 = arith.subf %139, %146 : vector<200x128xf32>
    %148 = arith.mulf %147, %147 : vector<200x128xf32>
    %149 = vector.broadcast %0 : vector<200x1xf32> to vector<200x128xf32>
    %150 = arith.mulf %148, %149 : vector<200x128xf32>
    %cst_111 = arith.constant dense<0.000000e+00> : vector<128xf32>
    %151 = vector.multi_reduction <add>, %150, %cst_111 [0] : vector<200x128xf32> to vector<128xf32>
    %152 = vector.shape_cast %151 : vector<128xf32> to vector<1x128xf32>
    %cst_112 = arith.constant 7.812500e-03 : f32
    %153 = vector.broadcast %cst_112 : f32 to vector<1x128xf32>
    %154 = arith.mulf %152, %153 : vector<1x128xf32>
    %cst_113 = arith.constant 9.99999974E-6 : f32
    %155 = vector.broadcast %cst_113 : f32 to vector<1x128xf32>
    %156 = arith.addf %154, %155 : vector<1x128xf32>
    %157 = math.rsqrt %156 : vector<1x128xf32>
    %158 = vector.broadcast %157 : vector<1x128xf32> to vector<200x128xf32>
    %159 = arith.mulf %147, %158 : vector<200x128xf32>
    %c0_114 = arith.constant 0 : index
    %c0_115 = arith.constant 0 : index
    %160 = vector.load %arg6[%c0_114, %c0_115] : memref<1x128xf32, #tpu.memory_space<vmem>>, vector<1x128xf32>
    %161 = vector.broadcast %160 : vector<1x128xf32> to vector<200x128xf32>
    %162 = arith.mulf %159, %161 : vector<200x128xf32>
    %c0_116 = arith.constant 0 : index
    %c0_117 = arith.constant 0 : index
    %163 = vector.load %arg7[%c0_116, %c0_117] : memref<1x128xf32, #tpu.memory_space<vmem>>, vector<1x128xf32>
    %164 = vector.broadcast %163 : vector<1x128xf32> to vector<200x128xf32>
    %165 = arith.addf %162, %164 : vector<200x128xf32>
    %cst_118 = arith.constant 0.000000e+00 : f32
    %166 = vector.broadcast %cst_118 : f32 to vector<200x128xf32>
    %167 = arith.maximumf %165, %166 : vector<200x128xf32>
    %168 = vector.broadcast %0 : vector<200x1xf32> to vector<200x128xf32>
    %169 = arith.mulf %167, %168 : vector<200x128xf32>
    %c0_119 = arith.constant 0 : index
    %c0_120 = arith.constant 0 : index
    %170 = vector.load %arg9[%c0_119, %c0_120] : memref<200x128xf32, #tpu.memory_space<vmem>>, vector<200x128xf32>
    tpu.vector_store %arg9[%c0_119, %c0_120], %169 {strides = array<i32>} : memref<200x128xf32, #tpu.memory_space<vmem>>, vector<200x128xf32>,
    return
  }
  func.func @transform_0(%arg0: i32) -> (i32, i32) {
    %c0_i32 = arith.constant 0 : i32
    %c0_i32_0 = arith.constant 0 : i32
    %c0_i32_1 = arith.constant 0 : i32
    return %c0_i32, %c0_i32_0 : i32, i32
  }
  func.func @transform_1(%arg0: i32) -> (i32, i32, i32) {
    %c0_i32 = arith.constant 0 : i32
    %c0_i32_0 = arith.constant 0 : i32
    %c0_i32_1 = arith.constant 0 : i32
    %c0_i32_2 = arith.constant 0 : i32
    return %c0_i32, %c0_i32_0, %c0_i32_1 : i32, i32, i32
  }
  func.func @transform_2(%arg0: i32) -> (i32, i32) {
    %c0_i32 = arith.constant 0 : i32
    %c0_i32_0 = arith.constant 0 : i32
    %c0_i32_1 = arith.constant 0 : i32
    return %c0_i32, %c0_i32_0 : i32, i32
  }
  func.func @transform_3(%arg0: i32) -> (i32, i32) {
    %c0_i32 = arith.constant 0 : i32
    %c0_i32_0 = arith.constant 0 : i32
    %c0_i32_1 = arith.constant 0 : i32
    return %c0_i32, %c0_i32_0 : i32, i32
  }
  func.func @transform_4(%arg0: i32) -> (i32, i32, i32) {
    %c0_i32 = arith.constant 0 : i32
    %c0_i32_0 = arith.constant 0 : i32
    %c0_i32_1 = arith.constant 0 : i32
    %c0_i32_2 = arith.constant 0 : i32
    return %c0_i32, %c0_i32_0, %c0_i32_1 : i32, i32, i32
  }
  func.func @transform_5(%arg0: i32) -> (i32, i32) {
    %c0_i32 = arith.constant 0 : i32
    %c0_i32_0 = arith.constant 0 : i32
    %c0_i32_1 = arith.constant 0 : i32
    return %c0_i32, %c0_i32_0 : i32, i32
  }
  func.func @transform_6(%arg0: i32) -> (i32, i32) {
    %c0_i32 = arith.constant 0 : i32
    %c0_i32_0 = arith.constant 0 : i32
    %c0_i32_1 = arith.constant 0 : i32
    return %c0_i32, %c0_i32_0 : i32, i32
  }
  func.func @transform_7(%arg0: i32) -> (i32, i32) {
    %c0_i32 = arith.constant 0 : i32
    %c0_i32_0 = arith.constant 0 : i32
    %c0_i32_1 = arith.constant 0 : i32
    return %c0_i32, %c0_i32_0 : i32, i32
  }
  func.func @transform_8(%arg0: i32) -> (i32, i32) {
    %c0_i32 = arith.constant 0 : i32
    %c0_i32_0 = arith.constant 0 : i32
    %c0_i32_1 = arith.constant 0 : i32
    return %c0_i32, %c0_i32_0 : i32, i32
  }
}

</mosaic_0001>

<llo_original>
// kernel: down_forward.1
$region0: #{down_forward.1}
  #allocation0 [shape = 'u32[]', space=smem, size = 0x4, offset = 0x4, fixed_abs, tag = 'smem constant byte address 0x4 - core index']
  #allocation1 [shape = 'u32[72,128]{1,0:T(1,128)}', space=vmem, size = 0x9000, scoped, tag = 'internal scratch']
  #allocation2 [shape = 'f32[224,128]{1,0:T(8,128)}', space=vmem, size = 0x1c000, scoped, tag = 'scratch operand']
  %s0 = inlined_call_operand.vmem [shape: f32[224,4], index: 0, kind: input, shape index: {}]
  %s1 = inlined_call_operand.vmem [shape: bf16[9,4,128], index: 1, kind: input, shape index: {}]
  %s2 = inlined_call_operand.vmem [shape: f32[1,128], index: 2, kind: input, shape index: {}]
  %s3 = inlined_call_operand.vmem [shape: f32[1,128], index: 3, kind: input, shape index: {}]
  %s4 = inlined_call_operand.vmem [shape: bf16[9,128,128], index: 4, kind: input, shape index: {}]
  %s5 = inlined_call_operand.vmem [shape: f32[1,128], index: 5, kind: input, shape index: {}]
  %s6 = inlined_call_operand.vmem [shape: f32[1,128], index: 6, kind: input, shape index: {}]
  %s7 = inlined_call_operand.vmem [shape: f32[200,1], index: 7, kind: input, shape index: {}]
  %s8 = inlined_call_operand.vmem [shape: f32[200,128], index: 8, kind: output, shape index: {}]
  %s9 = sld [smem:[#allocation0]]
  $region42: #{down_forward.1} parent=0
    _
  %s11 = ssub.s32 1, %s9
  %s12 = scalar_select 0, %s11, %s9
  // Predicated region
  $region2: #{down_forward.1} parent=0 // pred_check
    _
  $region3: #{down_forward.1} parent=0 // pred_check_branch
    %14 = sbr.rel (0) target = $region5
  $region4: #{down_forward.1} parent=0 // pred_region
    _
  $region5: #{down_forward.1} parent=0 // pred_fallthru
    _
  // Predicated region
  $region6: #{down_forward.1} parent=0 // pred_check
    _
  $region7: #{down_forward.1} parent=0 // pred_check_branch
    %16 = sbr.rel (0) target = $region9
  $region8: #{down_forward.1} parent=0 // pred_region
    _
  $region9: #{down_forward.1} parent=0 // pred_fallthru
    _
  // Predicated region
  $region10: #{down_forward.1} parent=0 // pred_check
    _
  $region11: #{down_forward.1} parent=0 // pred_check_branch
    %18 = sbr.rel (0) target = $region13
  $region12: #{down_forward.1} parent=0 // pred_region
    _
  $region13: #{down_forward.1} parent=0 // pred_fallthru
    _
  // Predicated region
  $region14: #{down_forward.1} parent=0 // pred_check
    _
  $region15: #{down_forward.1} parent=0 // pred_check_branch
    %20 = sbr.rel (0) target = $region17
  $region16: #{down_forward.1} parent=0 // pred_region
    _
  $region17: #{down_forward.1} parent=0 // pred_fallthru
    _
  // Predicated region
  $region18: #{down_forward.1} parent=0 // pred_check
    _
  $region19: #{down_forward.1} parent=0 // pred_check_branch
    %22 = sbr.rel (0) target = $region21
  $region20: #{down_forward.1} parent=0 // pred_region
    _
  $region21: #{down_forward.1} parent=0 // pred_fallthru
    _
  // Predicated region
  $region22: #{down_forward.1} parent=0 // pred_check
    _
  $region23: #{down_forward.1} parent=0 // pred_check_branch
    %24 = sbr.rel (0) target = $region25
  $region24: #{down_forward.1} parent=0 // pred_region
    _
  $region25: #{down_forward.1} parent=0 // pred_fallthru
    _
  // Predicated region
  $region26: #{down_forward.1} parent=0 // pred_check
    _
  $region27: #{down_forward.1} parent=0 // pred_check_branch
    %26 = sbr.rel (0) target = $region29
  $region28: #{down_forward.1} parent=0 // pred_region
    _
  $region29: #{down_forward.1} parent=0 // pred_fallthru
    _
  // Predicated region
  $region30: #{down_forward.1} parent=0 // pred_check
    _
  $region31: #{down_forward.1} parent=0 // pred_check_branch
    %28 = sbr.rel (0) target = $region33
  $region32: #{down_forward.1} parent=0 // pred_region
    _
  $region33: #{down_forward.1} parent=0 // pred_fallthru
    _
  %v30 = vld [vmem:[%s7] sm:$0xff]
  %v31 = vld [vmem:[%s7 + $0x8] sm:$0xff]
  %v32 = vld [vmem:[%s7 + $0x10] sm:$0xff]
  %v33 = vld [vmem:[%s7 + $0x18] sm:$0xff]
  %v34 = vld [vmem:[%s7 + $0x20] sm:$0xff]
  %v35 = vld [vmem:[%s7 + $0x28] sm:$0xff]
  %v36 = vld [vmem:[%s7 + $0x30] sm:$0xff]
  %v37 = vld [vmem:[%s7 + $0x38] sm:$0xff]
  %v38 = vld [vmem:[%s7 + $0x40] sm:$0xff]
  %v39 = vld [vmem:[%s7 + $0x48] sm:$0xff]
  %v40 = vld [vmem:[%s7 + $0x50] sm:$0xff]
  %v41 = vld [vmem:[%s7 + $0x58] sm:$0xff]
  %v42 = vld [vmem:[%s7 + $0x60] sm:$0xff]
  %v43 = vld [vmem:[%s7 + $0x68] sm:$0xff]
  %v44 = vld [vmem:[%s7 + $0x70] sm:$0xff]
  %v45 = vld [vmem:[%s7 + $0x78] sm:$0xff]
  %v46 = vld [vmem:[%s7 + $0x80] sm:$0xff]
  %v47 = vld [vmem:[%s7 + $0x88] sm:$0xff]
  %v48 = vld [vmem:[%s7 + $0x90] sm:$0xff]
  %v49 = vld [vmem:[%s7 + $0x98] sm:$0xff]
  %v50 = vld [vmem:[%s7 + $0xa0] sm:$0xff]
  %v51 = vld [vmem:[%s7 + $0xa8] sm:$0xff]
  %v52 = vld [vmem:[%s7 + $0xb0] sm:$0xff]
  %v53 = vld [vmem:[%s7 + $0xb8] sm:$0xff]
  %v54 = vld [vmem:[%s7 + $0xc0] sm:$0xff]
  %v55 = vld [vmem:[%s0] sm:$0xff]
  %v56 = vld [vmem:[%s0 + $0x8] sm:$0xff]
  %v57 = vld [vmem:[%s0 + $0x10] sm:$0xff]
  %v58 = vld [vmem:[%s0 + $0x18] sm:$0xff]
  %v59 = vld [vmem:[%s0 + $0x20] sm:$0xff]
  %v60 = vld [vmem:[%s0 + $0x28] sm:$0xff]
  %v61 = vld [vmem:[%s0 + $0x30] sm:$0xff]
  %v62 = vld [vmem:[%s0 + $0x38] sm:$0xff]
  %v63 = vld [vmem:[%s0 + $0x40] sm:$0xff]
  %v64 = vld [vmem:[%s0 + $0x48] sm:$0xff]
  %v65 = vld [vmem:[%s0 + $0x50] sm:$0xff]
  %v66 = vld [vmem:[%s0 + $0x58] sm:$0xff]
  %v67 = vld [vmem:[%s0 + $0x60] sm:$0xff]
  %v68 = vld [vmem:[%s0 + $0x68] sm:$0xff]
  %v69 = vld [vmem:[%s0 + $0x70] sm:$0xff]
  %v70 = vld [vmem:[%s0 + $0x78] sm:$0xff]
  %v71 = vld [vmem:[%s0 + $0x80] sm:$0xff]
  %v72 = vld [vmem:[%s0 + $0x88] sm:$0xff]
  %v73 = vld [vmem:[%s0 + $0x90] sm:$0xff]
  %v74 = vld [vmem:[%s0 + $0x98] sm:$0xff]
  %v75 = vld [vmem:[%s0 + $0xa0] sm:$0xff]
  %v76 = vld [vmem:[%s0 + $0xa8] sm:$0xff]
  %v77 = vld [vmem:[%s0 + $0xb0] sm:$0xff]
  %v78 = vld [vmem:[%s0 + $0xb8] sm:$0xff]
  %v79 = vld [vmem:[%s0 + $0xc0] sm:$0xff]
  %v80 = vpack.c.bf16 %v56, %v55
  %v81 = vpack.c.bf16 %v58, %v57
  %v82 = vpack.c.bf16 %v60, %v59
  %v83 = vpack.c.bf16 %v62, %v61
  %v84 = vpack.c.bf16 %v64, %v63
  %v85 = vpack.c.bf16 %v66, %v65
  %v86 = vpack.c.bf16 %v68, %v67
  %v87 = vpack.c.bf16 %v70, %v69
  %v88 = vpack.c.bf16 %v72, %v71
  %v89 = vpack.c.bf16 %v74, %v73
  %v90 = vpack.c.bf16 %v76, %v75
  %v91 = vpack.c.bf16 %v78, %v77
  %v92 = vpack.c.bf16 %v79, %v79
  %v93 = vld [vmem:[%s1] sm:$0x3]
  %v94 = vld [vmem:[%s0 + $0x1] sm:$0xff]
  %v95 = vld [vmem:[%s0 + $0x9] sm:$0xff]
  %v96 = vld [vmem:[%s0 + $0x11] sm:$0xff]
  %v97 = vld [vmem:[%s0 + $0x19] sm:$0xff]
  %v98 = vld [vmem:[%s0 + $0x21] sm:$0xff]
  %v99 = vld [vmem:[%s0 + $0x29] sm:$0xff]
  %v100 = vld [vmem:[%s0 + $0x31] sm:$0xff]
  %v101 = vld [vmem:[%s0 + $0x39] sm:$0xff]
  %v102 = vld [vmem:[%s0 + $0x41] sm:$0xff]
  %v103 = vld [vmem:[%s0 + $0x49] sm:$0xff]
  %v104 = vld [vmem:[%s0 + $0x51] sm:$0xff]
  %v105 = vld [vmem:[%s0 + $0x59] sm:$0xff]
  %v106 = vld [vmem:[%s0 + $0x61] sm:$0xff]
  %v107 = vld [vmem:[%s0 + $0x69] sm:$0xff]
  %v108 = vld [vmem:[%s0 + $0x71] sm:$0xff]
  %v109 = vld [vmem:[%s0 + $0x79] sm:$0xff]
  %v110 = vld [vmem:[%s0 + $0x81] sm:$0xff]
  %v111 = vld [vmem:[%s0 + $0x89] sm:$0xff]
  %v112 = vld [vmem:[%s0 + $0x91] sm:$0xff]
  %v113 = vld [vmem:[%s0 + $0x99] sm:$0xff]
  %v114 = vld [vmem:[%s0 + $0xa1] sm:$0xff]
  %v115 = vld [vmem:[%s0 + $0xa9] sm:$0xff]
  %v116 = vld [vmem:[%s0 + $0xb1] sm:$0xff]
  %v117 = vld [vmem:[%s0 + $0xb9] sm:$0xff]
  %v118 = vld [vmem:[%s0 + $0xc1] sm:$0xff]
  %v119 = vpack.c.bf16 %v95, %v94
  %v120 = vpack.c.bf16 %v97, %v96
  %v121 = vpack.c.bf16 %v99, %v98
  %v122 = vpack.c.bf16 %v101, %v100
  %v123 = vpack.c.bf16 %v103, %v102
  %v124 = vpack.c.bf16 %v105, %v104
  %v125 = vpack.c.bf16 %v107, %v106
  %v126 = vpack.c.bf16 %v109, %v108
  %v127 = vpack.c.bf16 %v111, %v110
  %v128 = vpack.c.bf16 %v113, %v112
  %v129 = vpack.c.bf16 %v115, %v114
  %v130 = vpack.c.bf16 %v117, %v116
  %v131 = vpack.c.bf16 %v118, %v118
  %s132 = scalar_lea.vmem %s1, 2
  %v133 = vld [vmem:[%s132] sm:$0x3]
  %vm134 = vcmask 31744
  %v136 = vsel %vm134, %v119, 0
  %v139 = vsel %vm134, %v120, 0
  %v142 = vsel %vm134, %v121, 0
  %v145 = vsel %vm134, %v122, 0
  %v148 = vsel %vm134, %v123, 0
  %v151 = vsel %vm134, %v124, 0
  %v154 = vsel %vm134, %v125, 0
  %v157 = vsel %vm134, %v126, 0
  %v160 = vsel %vm134, %v127, 0
  %v163 = vsel %vm134, %v128, 0
  %v166 = vsel %vm134, %v129, 0
  %v169 = vsel %vm134, %v130, 0
  %v172 = vsel %vm134, %v131, 0
  %vm174 = vcmask 1041408
  %v176 = vsel %vm174, %v133, 0
  %178 = vmatpush.bf16.msra.mxu0 0
  %179 = vmatpush.bf16.msra.mxu0 0
  %180 = vmatpush.bf16.msra.mxu0 0
  %181 = vmatpush.bf16.msra.mxu0 0
  %182 = vmatpush.bf16.msra.mxu0 0
  %183 = vmatpush.bf16.msra.mxu0 0
  %184 = vmatpush.bf16.msra.mxu0 0
  %185 = vmatpush.bf16.msra.mxu0 %v176
  %186 = vmatmul.bf16.gmra.mxu0 %v136
  %v187 = vpop.f32.mrf.mxu0
  %v188 = vadd.f32 0.0, %v187
  %v189 = vpop.f32.mrf.mxu0
  %v190 = vadd.f32 0.0, %v189
  %191 = vmatmul.bf16.gmra.mxu0 %v139
  %v192 = vpop.f32.mrf.mxu0
  %v193 = vadd.f32 0.0, %v192
  %v194 = vpop.f32.mrf.mxu0
  %v195 = vadd.f32 0.0, %v194
  %196 = vmatmul.bf16.gmra.mxu0 %v142
  %v197 = vpop.f32.mrf.mxu0
  %v198 = vadd.f32 0.0, %v197
  %v199 = vpop.f32.mrf.mxu0
  %v200 = vadd.f32 0.0, %v199
  %201 = vmatmul.bf16.gmra.mxu0 %v145
  %v202 = vpop.f32.mrf.mxu0
  %v203 = vadd.f32 0.0, %v202
  %v204 = vpop.f32.mrf.mxu0
  %v205 = vadd.f32 0.0, %v204
  %206 = vmatmul.bf16.gmra.mxu0 %v148
  %v207 = vpop.f32.mrf.mxu0
  %v208 = vadd.f32 0.0, %v207
  %v209 = vpop.f32.mrf.mxu0
  %v210 = vadd.f32 0.0, %v209
  %211 = vmatmul.bf16.gmra.mxu0 %v151
  %v212 = vpop.f32.mrf.mxu0
  %v213 = vadd.f32 0.0, %v212
  %v214 = vpop.f32.mrf.mxu0
  %v215 = vadd.f32 0.0, %v214
  %216 = vmatmul.bf16.gmra.mxu0 %v154
  %v217 = vpop.f32.mrf.mxu0
  %v218 = vadd.f32 0.0, %v217
  %v219 = vpop.f32.mrf.mxu0
  %v220 = vadd.f32 0.0, %v219
  %221 = vmatmul.bf16.gmra.mxu0 %v157
  %v222 = vpop.f32.mrf.mxu0
  %v223 = vadd.f32 0.0, %v222
  %v224 = vpop.f32.mrf.mxu0
  %v225 = vadd.f32 0.0, %v224
  %226 = vmatmul.bf16.gmra.mxu0 %v160
  %v227 = vpop.f32.mrf.mxu0
  %v228 = vadd.f32 0.0, %v227
  %v229 = vpop.f32.mrf.mxu0
  %v230 = vadd.f32 0.0, %v229
  %231 = vmatmul.bf16.gmra.mxu0 %v163
  %v232 = vpop.f32.mrf.mxu0
  %v233 = vadd.f32 0.0, %v232
  %v234 = vpop.f32.mrf.mxu0
  %v235 = vadd.f32 0.0, %v234
  %236 = vmatmul.bf16.gmra.mxu0 %v166
  %v237 = vpop.f32.mrf.mxu0
  %v238 = vadd.f32 0.0, %v237
  %v239 = vpop.f32.mrf.mxu0
  %v240 = vadd.f32 0.0, %v239
  %241 = vmatmul.bf16.gmra.mxu0 %v169
  %v242 = vpop.f32.mrf.mxu0
  %v243 = vadd.f32 0.0, %v242
  %v244 = vpop.f32.mrf.mxu0
  %v245 = vadd.f32 0.0, %v244
  %246 = vmatmul.bf16.gmra.mxu0 %v172
  %v247 = vpop.f32.mrf.mxu0
  %v248 = vadd.f32 0.0, %v247
  %v249 = vpop.f32.mrf.mxu0
  %250 = vdwg.mxu0
  %v252 = vsel %vm134, %v80, 0
  %v255 = vsel %vm134, %v81, 0
  %v258 = vsel %vm134, %v82, 0
  %v261 = vsel %vm134, %v83, 0
  %v264 = vsel %vm134, %v84, 0
  %v267 = vsel %vm134, %v85, 0
  %v270 = vsel %vm134, %v86, 0
  %v273 = vsel %vm134, %v87, 0
  %v276 = vsel %vm134, %v88, 0
  %v279 = vsel %vm134, %v89, 0
  %v282 = vsel %vm134, %v90, 0
  %v285 = vsel %vm134, %v91, 0
  %v288 = vsel %vm134, %v92, 0
  %v291 = vsel %vm174, %v93, 0
  %293 = vmatpush.bf16.msra.mxu0 0
  %294 = vmatpush.bf16.msra.mxu0 0
  %295 = vmatpush.bf16.msra.mxu0 0
  %296 = vmatpush.bf16.msra.mxu0 0
  %297 = vmatpush.bf16.msra.mxu0 0
  %298 = vmatpush.bf16.msra.mxu0 0
  %299 = vmatpush.bf16.msra.mxu0 0
  %300 = vmatpush.bf16.msra.mxu0 %v291
  %301 = vmatmul.bf16.gmra.mxu0 %v252
  %v302 = vpop.f32.mrf.mxu0
  %v303 = vadd.f32 %v188, %v302
  %v304 = vpop.f32.mrf.mxu0
  %v305 = vadd.f32 %v190, %v304
  %306 = vmatmul.bf16.gmra.mxu0 %v255
  %v307 = vpop.f32.mrf.mxu0
  %v308 = vadd.f32 %v193, %v307
  %v309 = vpop.f32.mrf.mxu0
  %v310 = vadd.f32 %v195, %v309
  %311 = vmatmul.bf16.gmra.mxu0 %v258
  %v312 = vpop.f32.mrf.mxu0
  %v313 = vadd.f32 %v198, %v312
  %v314 = vpop.f32.mrf.mxu0
  %v315 = vadd.f32 %v200, %v314
  %316 = vmatmul.bf16.gmra.mxu0 %v261
  %v317 = vpop.f32.mrf.mxu0
  %v318 = vadd.f32 %v203, %v317
  %v319 = vpop.f32.mrf.mxu0
  %v320 = vadd.f32 %v205, %v319
  %321 = vmatmul.bf16.gmra.mxu0 %v264
  %v322 = vpop.f32.mrf.mxu0
  %v323 = vadd.f32 %v208, %v322
  %v324 = vpop.f32.mrf.mxu0
  %v325 = vadd.f32 %v210, %v324
  %326 = vmatmul.bf16.gmra.mxu0 %v267
  %v327 = vpop.f32.mrf.mxu0
  %v328 = vadd.f32 %v213, %v327
  %v329 = vpop.f32.mrf.mxu0
  %v330 = vadd.f32 %v215, %v329
  %331 = vmatmul.bf16.gmra.mxu0 %v270
  %v332 = vpop.f32.mrf.mxu0
  %v333 = vadd.f32 %v218, %v332
  %v334 = vpop.f32.mrf.mxu0
  %v335 = vadd.f32 %v220, %v334
  %336 = vmatmul.bf16.gmra.mxu0 %v273
  %v337 = vpop.f32.mrf.mxu0
  %v338 = vadd.f32 %v223, %v337
  %v339 = vpop.f32.mrf.mxu0
  %v340 = vadd.f32 %v225, %v339
  %341 = vmatmul.bf16.gmra.mxu0 %v276
  %v342 = vpop.f32.mrf.mxu0
  %v343 = vadd.f32 %v228, %v342
  %v344 = vpop.f32.mrf.mxu0
  %v345 = vadd.f32 %v230, %v344
  %346 = vmatmul.bf16.gmra.mxu0 %v279
  %v347 = vpop.f32.mrf.mxu0
  %v348 = vadd.f32 %v233, %v347
  %v349 = vpop.f32.mrf.mxu0
  %v350 = vadd.f32 %v235, %v349
  %351 = vmatmul.bf16.gmra.mxu0 %v282
  %v352 = vpop.f32.mrf.mxu0
  %v353 = vadd.f32 %v238, %v352
  %v354 = vpop.f32.mrf.mxu0
  %v355 = vadd.f32 %v240, %v354
  %356 = vmatmul.bf16.gmra.mxu0 %v285
  %v357 = vpop.f32.mrf.mxu0
  %v358 = vadd.f32 %v243, %v357
  %v359 = vpop.f32.mrf.mxu0
  %v360 = vadd.f32 %v245, %v359
  %361 = vmatmul.bf16.gmra.mxu0 %v288
  %v362 = vpop.f32.mrf.mxu0
  %v363 = vadd.f32 %v248, %v362
  %v364 = vpop.f32.mrf.mxu0
  %365 = vdwg.mxu0
  %v366 = vld [vmem:[%s0 + $0x2] sm:$0xff]
  %v367 = vld [vmem:[%s0 + $0xa] sm:$0xff]
  %v368 = vld [vmem:[%s0 + $0x12] sm:$0xff]
  %v369 = vld [vmem:[%s0 + $0x1a] sm:$0xff]
  %v370 = vld [vmem:[%s0 + $0x22] sm:$0xff]
  %v371 = vld [vmem:[%s0 + $0x2a] sm:$0xff]
  %v372 = vld [vmem:[%s0 + $0x32] sm:$0xff]
  %v373 = vld [vmem:[%s0 + $0x3a] sm:$0xff]
  %v374 = vld [vmem:[%s0 + $0x42] sm:$0xff]
  %v375 = vld [vmem:[%s0 + $0x4a] sm:$0xff]
  %v376 = vld [vmem:[%s0 + $0x52] sm:$0xff]
  %v377 = vld [vmem:[%s0 + $0x5a] sm:$0xff]
  %v378 = vld [vmem:[%s0 + $0x62] sm:$0xff]
  %v379 = vld [vmem:[%s0 + $0x6a] sm:$0xff]
  %v380 = vld [vmem:[%s0 + $0x72] sm:$0xff]
  %v381 = vld [vmem:[%s0 + $0x7a] sm:$0xff]
  %v382 = vld [vmem:[%s0 + $0x82] sm:$0xff]
  %v383 = vld [vmem:[%s0 + $0x8a] sm:$0xff]
  %v384 = vld [vmem:[%s0 + $0x92] sm:$0xff]
  %v385 = vld [vmem:[%s0 + $0x9a] sm:$0xff]
  %v386 = vld [vmem:[%s0 + $0xa2] sm:$0xff]
  %v387 = vld [vmem:[%s0 + $0xaa] sm:$0xff]
  %v388 = vld [vmem:[%s0 + $0xb2] sm:$0xff]
  %v389 = vld [vmem:[%s0 + $0xba] sm:$0xff]
  %v390 = vld [vmem:[%s0 + $0xc2] sm:$0xff]
  %v391 = vpack.c.bf16 %v367, %v366
  %v392 = vpack.c.bf16 %v369, %v368
  %v393 = vpack.c.bf16 %v371, %v370
  %v394 = vpack.c.bf16 %v373, %v372
  %v395 = vpack.c.bf16 %v375, %v374
  %v396 = vpack.c.bf16 %v377, %v376
  %v397 = vpack.c.bf16 %v379, %v378
  %v398 = vpack.c.bf16 %v381, %v380
  %v399 = vpack.c.bf16 %v383, %v382
  %v400 = vpack.c.bf16 %v385, %v384
  %v401 = vpack.c.bf16 %v387, %v386
  %v402 = vpack.c.bf16 %v389, %v388
  %v403 = vpack.c.bf16 %v390, %v390
  %s404 = scalar_lea.vmem %s1, 4
  %v405 = vld [vmem:[%s404] sm:$0x3]
  %v407 = vsel %vm134, %v391, 0
  %v410 = vsel %vm134, %v392, 0
  %v413 = vsel %vm134, %v393, 0
  %v416 = vsel %vm134, %v394, 0
  %v419 = vsel %vm134, %v395, 0
  %v422 = vsel %vm134, %v396, 0
  %v425 = vsel %vm134, %v397, 0
  %v428 = vsel %vm134, %v398, 0
  %v431 = vsel %vm134, %v399, 0
  %v434 = vsel %vm134, %v400, 0
  %v437 = vsel %vm134, %v401, 0
  %v440 = vsel %vm134, %v402, 0
  %v443 = vsel %vm134, %v403, 0
  %v446 = vsel %vm174, %v405, 0
  %448 = vmatpush.bf16.msra.mxu0 0
  %449 = vmatpush.bf16.msra.mxu0 0
  %450 = vmatpush.bf16.msra.mxu0 0
  %451 = vmatpush.bf16.msra.mxu0 0
  %452 = vmatpush.bf16.msra.mxu0 0
  %453 = vmatpush.bf16.msra.mxu0 0
  %454 = vmatpush.bf16.msra.mxu0 0
  %455 = vmatpush.bf16.msra.mxu0 %v446
  %456 = vmatmul.bf16.gmra.mxu0 %v407
  %v457 = vpop.f32.mrf.mxu0
  %v458 = vadd.f32 0.0, %v457
  %v459 = vpop.f32.mrf.mxu0
  %v460 = vadd.f32 0.0, %v459
  %461 = vmatmul.bf16.gmra.mxu0 %v410
  %v462 = vpop.f32.mrf.mxu0
  %v463 = vadd.f32 0.0, %v462
  %v464 = vpop.f32.mrf.mxu0
  %v465 = vadd.f32 0.0, %v464
  %466 = vmatmul.bf16.gmra.mxu0 %v413
  %v467 = vpop.f32.mrf.mxu0
  %v468 = vadd.f32 0.0, %v467
  %v469 = vpop.f32.mrf.mxu0
  %v470 = vadd.f32 0.0, %v469
  %471 = vmatmul.bf16.gmra.mxu0 %v416
  %v472 = vpop.f32.mrf.mxu0
  %v473 = vadd.f32 0.0, %v472
  %v474 = vpop.f32.mrf.mxu0
  %v475 = vadd.f32 0.0, %v474
  %476 = vmatmul.bf16.gmra.mxu0 %v419
  %v477 = vpop.f32.mrf.mxu0
  %v478 = vadd.f32 0.0, %v477
  %v479 = vpop.f32.mrf.mxu0
  %v480 = vadd.f32 0.0, %v479
  %481 = vmatmul.bf16.gmra.mxu0 %v422
  %v482 = vpop.f32.mrf.mxu0
  %v483 = vadd.f32 0.0, %v482
  %v484 = vpop.f32.mrf.mxu0
  %v485 = vadd.f32 0.0, %v484
  %486 = vmatmul.bf16.gmra.mxu0 %v425
  %v487 = vpop.f32.mrf.mxu0
  %v488 = vadd.f32 0.0, %v487
  %v489 = vpop.f32.mrf.mxu0
  %v490 = vadd.f32 0.0, %v489
  %491 = vmatmul.bf16.gmra.mxu0 %v428
  %v492 = vpop.f32.mrf.mxu0
  %v493 = vadd.f32 0.0, %v492
  %v494 = vpop.f32.mrf.mxu0
  %v495 = vadd.f32 0.0, %v494
  %496 = vmatmul.bf16.gmra.mxu0 %v431
  %v497 = vpop.f32.mrf.mxu0
  %v498 = vadd.f32 0.0, %v497
  %v499 = vpop.f32.mrf.mxu0
  %v500 = vadd.f32 0.0, %v499
  %501 = vmatmul.bf16.gmra.mxu0 %v434
  %v502 = vpop.f32.mrf.mxu0
  %v503 = vadd.f32 0.0, %v502
  %v504 = vpop.f32.mrf.mxu0
  %v505 = vadd.f32 0.0, %v504
  %506 = vmatmul.bf16.gmra.mxu0 %v437
  %v507 = vpop.f32.mrf.mxu0
  %v508 = vadd.f32 0.0, %v507
  %v509 = vpop.f32.mrf.mxu0
  %v510 = vadd.f32 0.0, %v509
  %511 = vmatmul.bf16.gmra.mxu0 %v440
  %v512 = vpop.f32.mrf.mxu0
  %v513 = vadd.f32 0.0, %v512
  %v514 = vpop.f32.mrf.mxu0
  %v515 = vadd.f32 0.0, %v514
  %516 = vmatmul.bf16.gmra.mxu0 %v443
  %v517 = vpop.f32.mrf.mxu0
  %v518 = vadd.f32 0.0, %v517
  %v519 = vpop.f32.mrf.mxu0
  %520 = vdwg.mxu0
  %v521 = vadd.f32 %v303, %v458
  %v522 = vadd.f32 %v305, %v460
  %v523 = vadd.f32 %v308, %v463
  %v524 = vadd.f32 %v310, %v465
  %v525 = vadd.f32 %v313, %v468
  %v526 = vadd.f32 %v315, %v470
  %v527 = vadd.f32 %v318, %v473
  %v528 = vadd.f32 %v320, %v475
  %v529 = vadd.f32 %v323, %v478
  %v530 = vadd.f32 %v325, %v480
  %v531 = vadd.f32 %v328, %v483
  %v532 = vadd.f32 %v330, %v485
  %v533 = vadd.f32 %v333, %v488
  %v534 = vadd.f32 %v335, %v490
  %v535 = vadd.f32 %v338, %v493
  %v536 = vadd.f32 %v340, %v495
  %v537 = vadd.f32 %v343, %v498
  %v538 = vadd.f32 %v345, %v500
  %v539 = vadd.f32 %v348, %v503
  %v540 = vadd.f32 %v350, %v505
  %v541 = vadd.f32 %v353, %v508
  %v542 = vadd.f32 %v355, %v510
  %v543 = vadd.f32 %v358, %v513
  %v544 = vadd.f32 %v360, %v515
  %v545 = vadd.f32 %v363, %v518
  %v546 = vld [vmem:[%s0 + $0xa] sm:$0xff]
  %v547 = vld [vmem:[%s0 + $0x12] sm:$0xff]
  %v548 = vld [vmem:[%s0 + $0x1a] sm:$0xff]
  %v549 = vld [vmem:[%s0 + $0x22] sm:$0xff]
  %v550 = vld [vmem:[%s0 + $0x2a] sm:$0xff]
  %v551 = vld [vmem:[%s0 + $0x32] sm:$0xff]
  %v552 = vld [vmem:[%s0 + $0x3a] sm:$0xff]
  %v553 = vld [vmem:[%s0 + $0x42] sm:$0xff]
  %v554 = vld [vmem:[%s0 + $0x4a] sm:$0xff]
  %v555 = vld [vmem:[%s0 + $0x52] sm:$0xff]
  %v556 = vld [vmem:[%s0 + $0x5a] sm:$0xff]
  %v557 = vld [vmem:[%s0 + $0x62] sm:$0xff]
  %v558 = vld [vmem:[%s0 + $0x6a] sm:$0xff]
  %v559 = vld [vmem:[%s0 + $0x72] sm:$0xff]
  %v560 = vld [vmem:[%s0 + $0x7a] sm:$0xff]
  %v561 = vld [vmem:[%s0 + $0x82] sm:$0xff]
  %v562 = vld [vmem:[%s0 + $0x8a] sm:$0xff]
  %v563 = vld [vmem:[%s0 + $0x92] sm:$0xff]
  %v564 = vld [vmem:[%s0 + $0x9a] sm:$0xff]
  %v565 = vld [vmem:[%s0 + $0xa2] sm:$0xff]
  %v566 = vld [vmem:[%s0 + $0xaa] sm:$0xff]
  %v567 = vld [vmem:[%s0 + $0xb2] sm:$0xff]
  %v568 = vld [vmem:[%s0 + $0xba] sm:$0xff]
  %v569 = vld [vmem:[%s0 + $0xc2] sm:$0xff]
  %v570 = vld [vmem:[%s0 + $0xca] sm:$0xff]
  %v571 = vpack.c.bf16 %v547, %v546
  %v572 = vpack.c.bf16 %v549, %v548
  %v573 = vpack.c.bf16 %v551, %v550
  %v574 = vpack.c.bf16 %v553, %v552
  %v575 = vpack.c.bf16 %v555, %v554
  %v576 = vpack.c.bf16 %v557, %v556
  %v577 = vpack.c.bf16 %v559, %v558
  %v578 = vpack.c.bf16 %v561, %v560
  %v579 = vpack.c.bf16 %v563, %v562
  %v580 = vpack.c.bf16 %v565, %v564
  %v581 = vpack.c.bf16 %v567, %v566
  %v582 = vpack.c.bf16 %v569, %v568
  %v583 = vpack.c.bf16 %v570, %v570
  %s584 = scalar_lea.vmem %s1, 6
  %v585 = vld [vmem:[%s584] sm:$0x3]
  %v587 = vsel %vm134, %v571, 0
  %v590 = vsel %vm134, %v572, 0
  %v593 = vsel %vm134, %v573, 0
  %v596 = vsel %vm134, %v574, 0
  %v599 = vsel %vm134, %v575, 0
  %v602 = vsel %vm134, %v576, 0
  %v605 = vsel %vm134, %v577, 0
  %v608 = vsel %vm134, %v578, 0
  %v611 = vsel %vm134, %v579, 0
  %v614 = vsel %vm134, %v580, 0
  %v617 = vsel %vm134, %v581, 0
  %v620 = vsel %vm134, %v582, 0
  %v623 = vsel %vm134, %v583, 0
  %v626 = vsel %vm174, %v585, 0
  %628 = vmatpush.bf16.msra.mxu0 0
  %629 = vmatpush.bf16.msra.mxu0 0
  %630 = vmatpush.bf16.msra.mxu0 0
  %631 = vmatpush.bf16.msra.mxu0 0
  %632 = vmatpush.bf16.msra.mxu0 0
  %633 = vmatpush.bf16.msra.mxu0 0
  %634 = vmatpush.bf16.msra.mxu0 0
  %635 = vmatpush.bf16.msra.mxu0 %v626
  %636 = vmatmul.bf16.gmra.mxu0 %v587
  %v637 = vpop.f32.mrf.mxu0
  %v638 = vadd.f32 0.0, %v637
  %v639 = vpop.f32.mrf.mxu0
  %v640 = vadd.f32 0.0, %v639
  %641 = vmatmul.bf16.gmra.mxu0 %v590
  %v642 = vpop.f32.mrf.mxu0
  %v643 = vadd.f32 0.0, %v642
  %v644 = vpop.f32.mrf.mxu0
  %v645 = vadd.f32 0.0, %v644
  %646 = vmatmul.bf16.gmra.mxu0 %v593
  %v647 = vpop.f32.mrf.mxu0
  %v648 = vadd.f32 0.0, %v647
  %v649 = vpop.f32.mrf.mxu0
  %v650 = vadd.f32 0.0, %v649
  %651 = vmatmul.bf16.gmra.mxu0 %v596
  %v652 = vpop.f32.mrf.mxu0
  %v653 = vadd.f32 0.0, %v652
  %v654 = vpop.f32.mrf.mxu0
  %v655 = vadd.f32 0.0, %v654
  %656 = vmatmul.bf16.gmra.mxu0 %v599
  %v657 = vpop.f32.mrf.mxu0
  %v658 = vadd.f32 0.0, %v657
  %v659 = vpop.f32.mrf.mxu0
  %v660 = vadd.f32 0.0, %v659
  %661 = vmatmul.bf16.gmra.mxu0 %v602
  %v662 = vpop.f32.mrf.mxu0
  %v663 = vadd.f32 0.0, %v662
  %v664 = vpop.f32.mrf.mxu0
  %v665 = vadd.f32 0.0, %v664
  %666 = vmatmul.bf16.gmra.mxu0 %v605
  %v667 = vpop.f32.mrf.mxu0
  %v668 = vadd.f32 0.0, %v667
  %v669 = vpop.f32.mrf.mxu0
  %v670 = vadd.f32 0.0, %v669
  %671 = vmatmul.bf16.gmra.mxu0 %v608
  %v672 = vpop.f32.mrf.mxu0
  %v673 = vadd.f32 0.0, %v672
  %v674 = vpop.f32.mrf.mxu0
  %v675 = vadd.f32 0.0, %v674
  %676 = vmatmul.bf16.gmra.mxu0 %v611
  %v677 = vpop.f32.mrf.mxu0
  %v678 = vadd.f32 0.0, %v677
  %v679 = vpop.f32.mrf.mxu0
  %v680 = vadd.f32 0.0, %v679
  %681 = vmatmul.bf16.gmra.mxu0 %v614
  %v682 = vpop.f32.mrf.mxu0
  %v683 = vadd.f32 0.0, %v682
  %v684 = vpop.f32.mrf.mxu0
  %v685 = vadd.f32 0.0, %v684
  %686 = vmatmul.bf16.gmra.mxu0 %v617
  %v687 = vpop.f32.mrf.mxu0
  %v688 = vadd.f32 0.0, %v687
  %v689 = vpop.f32.mrf.mxu0
  %v690 = vadd.f32 0.0, %v689
  %691 = vmatmul.bf16.gmra.mxu0 %v620
  %v692 = vpop.f32.mrf.mxu0
  %v693 = vadd.f32 0.0, %v692
  %v694 = vpop.f32.mrf.mxu0
  %v695 = vadd.f32 0.0, %v694
  %696 = vmatmul.bf16.gmra.mxu0 %v623
  %v697 = vpop.f32.mrf.mxu0
  %v698 = vadd.f32 0.0, %v697
  %v699 = vpop.f32.mrf.mxu0
  %700 = vdwg.mxu0
  %v701 = vadd.f32 %v521, %v638
  %v702 = vadd.f32 %v522, %v640
  %v703 = vadd.f32 %v523, %v643
  %v704 = vadd.f32 %v524, %v645
  %v705 = vadd.f32 %v525, %v648
  %v706 = vadd.f32 %v526, %v650
  %v707 = vadd.f32 %v527, %v653
  %v708 = vadd.f32 %v528, %v655
  %v709 = vadd.f32 %v529, %v658
  %v710 = vadd.f32 %v530, %v660
  %v711 = vadd.f32 %v531, %v663
  %v712 = vadd.f32 %v532, %v665
  %v713 = vadd.f32 %v533, %v668
  %v714 = vadd.f32 %v534, %v670
  %v715 = vadd.f32 %v535, %v673
  %v716 = vadd.f32 %v536, %v675
  %v717 = vadd.f32 %v537, %v678
  %v718 = vadd.f32 %v538, %v680
  %v719 = vadd.f32 %v539, %v683
  %v720 = vadd.f32 %v540, %v685
  %v721 = vadd.f32 %v541, %v688
  %v722 = vadd.f32 %v542, %v690
  %v723 = vadd.f32 %v543, %v693
  %v724 = vadd.f32 %v544, %v695
  %v725 = vadd.f32 %v545, %v698
  %v726 = vld [vmem:[%s0 + $0xb] sm:$0xff]
  %v727 = vld [vmem:[%s0 + $0x13] sm:$0xff]
  %v728 = vld [vmem:[%s0 + $0x1b] sm:$0xff]
  %v729 = vld [vmem:[%s0 + $0x23] sm:$0xff]
  %v730 = vld [vmem:[%s0 + $0x2b] sm:$0xff]
  %v731 = vld [vmem:[%s0 + $0x33] sm:$0xff]
  %v732 = vld [vmem:[%s0 + $0x3b] sm:$0xff]
  %v733 = vld [vmem:[%s0 + $0x43] sm:$0xff]
  %v734 = vld [vmem:[%s0 + $0x4b] sm:$0xff]
  %v735 = vld [vmem:[%s0 + $0x53] sm:$0xff]
  %v736 = vld [vmem:[%s0 + $0x5b] sm:$0xff]
  %v737 = vld [vmem:[%s0 + $0x63] sm:$0xff]
  %v738 = vld [vmem:[%s0 + $0x6b] sm:$0xff]
  %v739 = vld [vmem:[%s0 + $0x73] sm:$0xff]
  %v740 = vld [vmem:[%s0 + $0x7b] sm:$0xff]
  %v741 = vld [vmem:[%s0 + $0x83] sm:$0xff]
  %v742 = vld [vmem:[%s0 + $0x8b] sm:$0xff]
  %v743 = vld [vmem:[%s0 + $0x93] sm:$0xff]
  %v744 = vld [vmem:[%s0 + $0x9b] sm:$0xff]
  %v745 = vld [vmem:[%s0 + $0xa3] sm:$0xff]
  %v746 = vld [vmem:[%s0 + $0xab] sm:$0xff]
  %v747 = vld [vmem:[%s0 + $0xb3] sm:$0xff]
  %v748 = vld [vmem:[%s0 + $0xbb] sm:$0xff]
  %v749 = vld [vmem:[%s0 + $0xc3] sm:$0xff]
  %v750 = vld [vmem:[%s0 + $0xcb] sm:$0xff]
  %v751 = vpack.c.bf16 %v727, %v726
  %v752 = vpack.c.bf16 %v729, %v728
  %v753 = vpack.c.bf16 %v731, %v730
  %v754 = vpack.c.bf16 %v733, %v732
  %v755 = vpack.c.bf16 %v735, %v734
  %v756 = vpack.c.bf16 %v737, %v736
  %v757 = vpack.c.bf16 %v739, %v738
  %v758 = vpack.c.bf16 %v741, %v740
  %v759 = vpack.c.bf16 %v743, %v742
  %v760 = vpack.c.bf16 %v745, %v744
  %v761 = vpack.c.bf16 %v747, %v746
  %v762 = vpack.c.bf16 %v749, %v748
  %v763 = vpack.c.bf16 %v750, %v750
  %s764 = scalar_lea.vmem %s1, 8
  %v765 = vld [vmem:[%s764] sm:$0x3]
  %v767 = vsel %vm134, %v751, 0
  %v770 = vsel %vm134, %v752, 0
  %v773 = vsel %vm134, %v753, 0
  %v776 = vsel %vm134, %v754, 0
  %v779 = vsel %vm134, %v755, 0
  %v782 = vsel %vm134, %v756, 0
  %v785 = vsel %vm134, %v757, 0
  %v788 = vsel %vm134, %v758, 0
  %v791 = vsel %vm134, %v759, 0
  %v794 = vsel %vm134, %v760, 0
  %v797 = vsel %vm134, %v761, 0
  %v800 = vsel %vm134, %v762, 0
  %v803 = vsel %vm134, %v763, 0
  %v806 = vsel %vm174, %v765, 0
  %808 = vmatpush.bf16.msra.mxu0 0
  %809 = vmatpush.bf16.msra.mxu0 0
  %810 = vmatpush.bf16.msra.mxu0 0
  %811 = vmatpush.bf16.msra.mxu0 0
  %812 = vmatpush.bf16.msra.mxu0 0
  %813 = vmatpush.bf16.msra.mxu0 0
  %814 = vmatpush.bf16.msra.mxu0 0
  %815 = vmatpush.bf16.msra.mxu0 %v806
  %816 = vmatmul.bf16.gmra.mxu0 %v767
  %v817 = vpop.f32.mrf.mxu0
  %v818 = vadd.f32 0.0, %v817
  %v819 = vpop.f32.mrf.mxu0
  %v820 = vadd.f32 0.0, %v819
  %821 = vmatmul.bf16.gmra.mxu0 %v770
  %v822 = vpop.f32.mrf.mxu0
  %v823 = vadd.f32 0.0, %v822
  %v824 = vpop.f32.mrf.mxu0
  %v825 = vadd.f32 0.0, %v824
  %826 = vmatmul.bf16.gmra.mxu0 %v773
  %v827 = vpop.f32.mrf.mxu0
  %v828 = vadd.f32 0.0, %v827
  %v829 = vpop.f32.mrf.mxu0
  %v830 = vadd.f32 0.0, %v829
  %831 = vmatmul.bf16.gmra.mxu0 %v776
  %v832 = vpop.f32.mrf.mxu0
  %v833 = vadd.f32 0.0, %v832
  %v834 = vpop.f32.mrf.mxu0
  %v835 = vadd.f32 0.0, %v834
  %836 = vmatmul.bf16.gmra.mxu0 %v779
  %v837 = vpop.f32.mrf.mxu0
  %v838 = vadd.f32 0.0, %v837
  %v839 = vpop.f32.mrf.mxu0
  %v840 = vadd.f32 0.0, %v839
  %841 = vmatmul.bf16.gmra.mxu0 %v782
  %v842 = vpop.f32.mrf.mxu0
  %v843 = vadd.f32 0.0, %v842
  %v844 = vpop.f32.mrf.mxu0
  %v845 = vadd.f32 0.0, %v844
  %846 = vmatmul.bf16.gmra.mxu0 %v785
  %v847 = vpop.f32.mrf.mxu0
  %v848 = vadd.f32 0.0, %v847
  %v849 = vpop.f32.mrf.mxu0
  %v850 = vadd.f32 0.0, %v849
  %851 = vmatmul.bf16.gmra.mxu0 %v788
  %v852 = vpop.f32.mrf.mxu0
  %v853 = vadd.f32 0.0, %v852
  %v854 = vpop.f32.mrf.mxu0
  %v855 = vadd.f32 0.0, %v854
  %856 = vmatmul.bf16.gmra.mxu0 %v791
  %v857 = vpop.f32.mrf.mxu0
  %v858 = vadd.f32 0.0, %v857
  %v859 = vpop.f32.mrf.mxu0
  %v860 = vadd.f32 0.0, %v859
  %861 = vmatmul.bf16.gmra.mxu0 %v794
  %v862 = vpop.f32.mrf.mxu0
  %v863 = vadd.f32 0.0, %v862
  %v864 = vpop.f32.mrf.mxu0
  %v865 = vadd.f32 0.0, %v864
  %866 = vmatmul.bf16.gmra.mxu0 %v797
  %v867 = vpop.f32.mrf.mxu0
  %v868 = vadd.f32 0.0, %v867
  %v869 = vpop.f32.mrf.mxu0
  %v870 = vadd.f32 0.0, %v869
  %871 = vmatmul.bf16.gmra.mxu0 %v800
  %v872 = vpop.f32.mrf.mxu0
  %v873 = vadd.f32 0.0, %v872
  %v874 = vpop.f32.mrf.mxu0
  %v875 = vadd.f32 0.0, %v874
  %876 = vmatmul.bf16.gmra.mxu0 %v803
  %v877 = vpop.f32.mrf.mxu0
  %v878 = vadd.f32 0.0, %v877
  %v879 = vpop.f32.mrf.mxu0
  %880 = vdwg.mxu0
  %v881 = vadd.f32 %v701, %v818
  %v882 = vadd.f32 %v702, %v820
  %v883 = vadd.f32 %v703, %v823
  %v884 = vadd.f32 %v704, %v825
  %v885 = vadd.f32 %v705, %v828
  %v886 = vadd.f32 %v706, %v830
  %v887 = vadd.f32 %v707, %v833
  %v888 = vadd.f32 %v708, %v835
  %v889 = vadd.f32 %v709, %v838
  %v890 = vadd.f32 %v710, %v840
  %v891 = vadd.f32 %v711, %v843
  %v892 = vadd.f32 %v712, %v845
  %v893 = vadd.f32 %v713, %v848
  %v894 = vadd.f32 %v714, %v850
  %v895 = vadd.f32 %v715, %v853
  %v896 = vadd.f32 %v716, %v855
  %v897 = vadd.f32 %v717, %v858
  %v898 = vadd.f32 %v718, %v860
  %v899 = vadd.f32 %v719, %v863
  %v900 = vadd.f32 %v720, %v865
  %v901 = vadd.f32 %v721, %v868
  %v902 = vadd.f32 %v722, %v870
  %v903 = vadd.f32 %v723, %v873
  %v904 = vadd.f32 %v724, %v875
  %v905 = vadd.f32 %v725, %v878
  %v906 = vld [vmem:[%s0 + $0xc] sm:$0xff]
  %v907 = vld [vmem:[%s0 + $0x14] sm:$0xff]
  %v908 = vld [vmem:[%s0 + $0x1c] sm:$0xff]
  %v909 = vld [vmem:[%s0 + $0x24] sm:$0xff]
  %v910 = vld [vmem:[%s0 + $0x2c] sm:$0xff]
  %v911 = vld [vmem:[%s0 + $0x34] sm:$0xff]
  %v912 = vld [vmem:[%s0 + $0x3c] sm:$0xff]
  %v913 = vld [vmem:[%s0 + $0x44] sm:$0xff]
  %v914 = vld [vmem:[%s0 + $0x4c] sm:$0xff]
  %v915 = vld [vmem:[%s0 + $0x54] sm:$0xff]
  %v916 = vld [vmem:[%s0 + $0x5c] sm:$0xff]
  %v917 = vld [vmem:[%s0 + $0x64] sm:$0xff]
  %v918 = vld [vmem:[%s0 + $0x6c] sm:$0xff]
  %v919 = vld [vmem:[%s0 + $0x74] sm:$0xff]
  %v920 = vld [vmem:[%s0 + $0x7c] sm:$0xff]
  %v921 = vld [vmem:[%s0 + $0x84] sm:$0xff]
  %v922 = vld [vmem:[%s0 + $0x8c] sm:$0xff]
  %v923 = vld [vmem:[%s0 + $0x94] sm:$0xff]
  %v924 = vld [vmem:[%s0 + $0x9c] sm:$0xff]
  %v925 = vld [vmem:[%s0 + $0xa4] sm:$0xff]
  %v926 = vld [vmem:[%s0 + $0xac] sm:$0xff]
  %v927 = vld [vmem:[%s0 + $0xb4] sm:$0xff]
  %v928 = vld [vmem:[%s0 + $0xbc] sm:$0xff]
  %v929 = vld [vmem:[%s0 + $0xc4] sm:$0xff]
  %v930 = vld [vmem:[%s0 + $0xcc] sm:$0xff]
  %v931 = vpack.c.bf16 %v907, %v906
  %v932 = vpack.c.bf16 %v909, %v908
  %v933 = vpack.c.bf16 %v911, %v910
  %v934 = vpack.c.bf16 %v913, %v912
  %v935 = vpack.c.bf16 %v915, %v914
  %v936 = vpack.c.bf16 %v917, %v916
  %v937 = vpack.c.bf16 %v919, %v918
  %v938 = vpack.c.bf16 %v921, %v920
  %v939 = vpack.c.bf16 %v923, %v922
  %v940 = vpack.c.bf16 %v925, %v924
  %v941 = vpack.c.bf16 %v927, %v926
  %v942 = vpack.c.bf16 %v929, %v928
  %v943 = vpack.c.bf16 %v930, %v930
  %s944 = scalar_lea.vmem %s1, 10
  %v945 = vld [vmem:[%s944] sm:$0x3]
  %v947 = vsel %vm134, %v931, 0
  %v950 = vsel %vm134, %v932, 0
  %v953 = vsel %vm134, %v933, 0
  %v956 = vsel %vm134, %v934, 0
  %v959 = vsel %vm134, %v935, 0
  %v962 = vsel %vm134, %v936, 0
  %v965 = vsel %vm134, %v937, 0
  %v968 = vsel %vm134, %v938, 0
  %v971 = vsel %vm134, %v939, 0
  %v974 = vsel %vm134, %v940, 0
  %v977 = vsel %vm134, %v941, 0
  %v980 = vsel %vm134, %v942, 0
  %v983 = vsel %vm134, %v943, 0
  %v986 = vsel %vm174, %v945, 0
  %988 = vmatpush.bf16.msra.mxu0 0
  %989 = vmatpush.bf16.msra.mxu0 0
  %990 = vmatpush.bf16.msra.mxu0 0
  %991 = vmatpush.bf16.msra.mxu0 0
  %992 = vmatpush.bf16.msra.mxu0 0
  %993 = vmatpush.bf16.msra.mxu0 0
  %994 = vmatpush.bf16.msra.mxu0 0
  %995 = vmatpush.bf16.msra.mxu0 %v986
  %996 = vmatmul.bf16.gmra.mxu0 %v947
  %v997 = vpop.f32.mrf.mxu0
  %v998 = vadd.f32 0.0, %v997
  %v999 = vpop.f32.mrf.mxu0
  %v1000 = vadd.f32 0.0, %v999
  %1001 = vmatmul.bf16.gmra.mxu0 %v950
  %v1002 = vpop.f32.mrf.mxu0
  %v1003 = vadd.f32 0.0, %v1002
  %v1004 = vpop.f32.mrf.mxu0
  %v1005 = vadd.f32 0.0, %v1004
  %1006 = vmatmul.bf16.gmra.mxu0 %v953
  %v1007 = vpop.f32.mrf.mxu0
  %v1008 = vadd.f32 0.0, %v1007
  %v1009 = vpop.f32.mrf.mxu0
  %v1010 = vadd.f32 0.0, %v1009
  %1011 = vmatmul.bf16.gmra.mxu0 %v956
  %v1012 = vpop.f32.mrf.mxu0
  %v1013 = vadd.f32 0.0, %v1012
  %v1014 = vpop.f32.mrf.mxu0
  %v1015 = vadd.f32 0.0, %v1014
  %1016 = vmatmul.bf16.gmra.mxu0 %v959
  %v1017 = vpop.f32.mrf.mxu0
  %v1018 = vadd.f32 0.0, %v1017
  %v1019 = vpop.f32.mrf.mxu0
  %v1020 = vadd.f32 0.0, %v1019
  %1021 = vmatmul.bf16.gmra.mxu0 %v962
  %v1022 = vpop.f32.mrf.mxu0
  %v1023 = vadd.f32 0.0, %v1022
  %v1024 = vpop.f32.mrf.mxu0
  %v1025 = vadd.f32 0.0, %v1024
  %1026 = vmatmul.bf16.gmra.mxu0 %v965
  %v1027 = vpop.f32.mrf.mxu0
  %v1028 = vadd.f32 0.0, %v1027
  %v1029 = vpop.f32.mrf.mxu0
  %v1030 = vadd.f32 0.0, %v1029
  %1031 = vmatmul.bf16.gmra.mxu0 %v968
  %v1032 = vpop.f32.mrf.mxu0
  %v1033 = vadd.f32 0.0, %v1032
  %v1034 = vpop.f32.mrf.mxu0
  %v1035 = vadd.f32 0.0, %v1034
  %1036 = vmatmul.bf16.gmra.mxu0 %v971
  %v1037 = vpop.f32.mrf.mxu0
  %v1038 = vadd.f32 0.0, %v1037
  %v1039 = vpop.f32.mrf.mxu0
  %v1040 = vadd.f32 0.0, %v1039
  %1041 = vmatmul.bf16.gmra.mxu0 %v974
  %v1042 = vpop.f32.mrf.mxu0
  %v1043 = vadd.f32 0.0, %v1042
  %v1044 = vpop.f32.mrf.mxu0
  %v1045 = vadd.f32 0.0, %v1044
  %1046 = vmatmul.bf16.gmra.mxu0 %v977
  %v1047 = vpop.f32.mrf.mxu0
  %v1048 = vadd.f32 0.0, %v1047
  %v1049 = vpop.f32.mrf.mxu0
  %v1050 = vadd.f32 0.0, %v1049
  %1051 = vmatmul.bf16.gmra.mxu0 %v980
  %v1052 = vpop.f32.mrf.mxu0
  %v1053 = vadd.f32 0.0, %v1052
  %v1054 = vpop.f32.mrf.mxu0
  %v1055 = vadd.f32 0.0, %v1054
  %1056 = vmatmul.bf16.gmra.mxu0 %v983
  %v1057 = vpop.f32.mrf.mxu0
  %v1058 = vadd.f32 0.0, %v1057
  %v1059 = vpop.f32.mrf.mxu0
  %1060 = vdwg.mxu0
  %v1061 = vadd.f32 %v881, %v998
  %v1062 = vadd.f32 %v882, %v1000
  %v1063 = vadd.f32 %v883, %v1003
  %v1064 = vadd.f32 %v884, %v1005
  %v1065 = vadd.f32 %v885, %v1008
  %v1066 = vadd.f32 %v886, %v1010
  %v1067 = vadd.f32 %v887, %v1013
  %v1068 = vadd.f32 %v888, %v1015
  %v1069 = vadd.f32 %v889, %v1018
  %v1070 = vadd.f32 %v890, %v1020
  %v1071 = vadd.f32 %v891, %v1023
  %v1072 = vadd.f32 %v892, %v1025
  %v1073 = vadd.f32 %v893, %v1028
  %v1074 = vadd.f32 %v894, %v1030
  %v1075 = vadd.f32 %v895, %v1033
  %v1076 = vadd.f32 %v896, %v1035
  %v1077 = vadd.f32 %v897, %v1038
  %v1078 = vadd.f32 %v898, %v1040
  %v1079 = vadd.f32 %v899, %v1043
  %v1080 = vadd.f32 %v900, %v1045
  %v1081 = vadd.f32 %v901, %v1048
  %v1082 = vadd.f32 %v902, %v1050
  %v1083 = vadd.f32 %v903, %v1053
  %v1084 = vadd.f32 %v904, %v1055
  %v1085 = vadd.f32 %v905, %v1058
  %v1086 = vld [vmem:[%s0 + $0x14] sm:$0xff]
  %v1087 = vld [vmem:[%s0 + $0x1c] sm:$0xff]
  %v1088 = vld [vmem:[%s0 + $0x24] sm:$0xff]
  %v1089 = vld [vmem:[%s0 + $0x2c] sm:$0xff]
  %v1090 = vld [vmem:[%s0 + $0x34] sm:$0xff]
  %v1091 = vld [vmem:[%s0 + $0x3c] sm:$0xff]
  %v1092 = vld [vmem:[%s0 + $0x44] sm:$0xff]
  %v1093 = vld [vmem:[%s0 + $0x4c] sm:$0xff]
  %v1094 = vld [vmem:[%s0 + $0x54] sm:$0xff]
  %v1095 = vld [vmem:[%s0 + $0x5c] sm:$0xff]
  %v1096 = vld [vmem:[%s0 + $0x64] sm:$0xff]
  %v1097 = vld [vmem:[%s0 + $0x6c] sm:$0xff]
  %v1098 = vld [vmem:[%s0 + $0x74] sm:$0xff]
  %v1099 = vld [vmem:[%s0 + $0x7c] sm:$0xff]
  %v1100 = vld [vmem:[%s0 + $0x84] sm:$0xff]
  %v1101 = vld [vmem:[%s0 + $0x8c] sm:$0xff]
  %v1102 = vld [vmem:[%s0 + $0x94] sm:$0xff]
  %v1103 = vld [vmem:[%s0 + $0x9c] sm:$0xff]
  %v1104 = vld [vmem:[%s0 + $0xa4] sm:$0xff]
  %v1105 = vld [vmem:[%s0 + $0xac] sm:$0xff]
  %v1106 = vld [vmem:[%s0 + $0xb4] sm:$0xff]
  %v1107 = vld [vmem:[%s0 + $0xbc] sm:$0xff]
  %v1108 = vld [vmem:[%s0 + $0xc4] sm:$0xff]
  %v1109 = vld [vmem:[%s0 + $0xcc] sm:$0xff]
  %v1110 = vld [vmem:[%s0 + $0xd4] sm:$0xff]
  %v1111 = vpack.c.bf16 %v1087, %v1086
  %v1112 = vpack.c.bf16 %v1089, %v1088
  %v1113 = vpack.c.bf16 %v1091, %v1090
  %v1114 = vpack.c.bf16 %v1093, %v1092
  %v1115 = vpack.c.bf16 %v1095, %v1094
  %v1116 = vpack.c.bf16 %v1097, %v1096
  %v1117 = vpack.c.bf16 %v1099, %v1098
  %v1118 = vpack.c.bf16 %v1101, %v1100
  %v1119 = vpack.c.bf16 %v1103, %v1102
  %v1120 = vpack.c.bf16 %v1105, %v1104
  %v1121 = vpack.c.bf16 %v1107, %v1106
  %v1122 = vpack.c.bf16 %v1109, %v1108
  %v1123 = vpack.c.bf16 %v1110, %v1110
  %s1124 = scalar_lea.vmem %s1, 12
  %v1125 = vld [vmem:[%s1124] sm:$0x3]
  %v1127 = vsel %vm134, %v1111, 0
  %v1130 = vsel %vm134, %v1112, 0
  %v1133 = vsel %vm134, %v1113, 0
  %v1136 = vsel %vm134, %v1114, 0
  %v1139 = vsel %vm134, %v1115, 0
  %v1142 = vsel %vm134, %v1116, 0
  %v1145 = vsel %vm134, %v1117, 0
  %v1148 = vsel %vm134, %v1118, 0
  %v1151 = vsel %vm134, %v1119, 0
  %v1154 = vsel %vm134, %v1120, 0
  %v1157 = vsel %vm134, %v1121, 0
  %v1160 = vsel %vm134, %v1122, 0
  %v1163 = vsel %vm134, %v1123, 0
  %v1166 = vsel %vm174, %v1125, 0
  %1168 = vmatpush.bf16.msra.mxu0 0
  %1169 = vmatpush.bf16.msra.mxu0 0
  %1170 = vmatpush.bf16.msra.mxu0 0
  %1171 = vmatpush.bf16.msra.mxu0 0
  %1172 = vmatpush.bf16.msra.mxu0 0
  %1173 = vmatpush.bf16.msra.mxu0 0
  %1174 = vmatpush.bf16.msra.mxu0 0
  %1175 = vmatpush.bf16.msra.mxu0 %v1166
  %1176 = vmatmul.bf16.gmra.mxu0 %v1127
  %v1177 = vpop.f32.mrf.mxu0
  %v1178 = vadd.f32 0.0, %v1177
  %v1179 = vpop.f32.mrf.mxu0
  %v1180 = vadd.f32 0.0, %v1179
  %1181 = vmatmul.bf16.gmra.mxu0 %v1130
  %v1182 = vpop.f32.mrf.mxu0
  %v1183 = vadd.f32 0.0, %v1182
  %v1184 = vpop.f32.mrf.mxu0
  %v1185 = vadd.f32 0.0, %v1184
  %1186 = vmatmul.bf16.gmra.mxu0 %v1133
  %v1187 = vpop.f32.mrf.mxu0
  %v1188 = vadd.f32 0.0, %v1187
  %v1189 = vpop.f32.mrf.mxu0
  %v1190 = vadd.f32 0.0, %v1189
  %1191 = vmatmul.bf16.gmra.mxu0 %v1136
  %v1192 = vpop.f32.mrf.mxu0
  %v1193 = vadd.f32 0.0, %v1192
  %v1194 = vpop.f32.mrf.mxu0
  %v1195 = vadd.f32 0.0, %v1194
  %1196 = vmatmul.bf16.gmra.mxu0 %v1139
  %v1197 = vpop.f32.mrf.mxu0
  %v1198 = vadd.f32 0.0, %v1197
  %v1199 = vpop.f32.mrf.mxu0
  %v1200 = vadd.f32 0.0, %v1199
  %1201 = vmatmul.bf16.gmra.mxu0 %v1142
  %v1202 = vpop.f32.mrf.mxu0
  %v1203 = vadd.f32 0.0, %v1202
  %v1204 = vpop.f32.mrf.mxu0
  %v1205 = vadd.f32 0.0, %v1204
  %1206 = vmatmul.bf16.gmra.mxu0 %v1145
  %v1207 = vpop.f32.mrf.mxu0
  %v1208 = vadd.f32 0.0, %v1207
  %v1209 = vpop.f32.mrf.mxu0
  %v1210 = vadd.f32 0.0, %v1209
  %1211 = vmatmul.bf16.gmra.mxu0 %v1148
  %v1212 = vpop.f32.mrf.mxu0
  %v1213 = vadd.f32 0.0, %v1212
  %v1214 = vpop.f32.mrf.mxu0
  %v1215 = vadd.f32 0.0, %v1214
  %1216 = vmatmul.bf16.gmra.mxu0 %v1151
  %v1217 = vpop.f32.mrf.mxu0
  %v1218 = vadd.f32 0.0, %v1217
  %v1219 = vpop.f32.mrf.mxu0
  %v1220 = vadd.f32 0.0, %v1219
  %1221 = vmatmul.bf16.gmra.mxu0 %v1154
  %v1222 = vpop.f32.mrf.mxu0
  %v1223 = vadd.f32 0.0, %v1222
  %v1224 = vpop.f32.mrf.mxu0
  %v1225 = vadd.f32 0.0, %v1224
  %1226 = vmatmul.bf16.gmra.mxu0 %v1157
  %v1227 = vpop.f32.mrf.mxu0
  %v1228 = vadd.f32 0.0, %v1227
  %v1229 = vpop.f32.mrf.mxu0
  %v1230 = vadd.f32 0.0, %v1229
  %1231 = vmatmul.bf16.gmra.mxu0 %v1160
  %v1232 = vpop.f32.mrf.mxu0
  %v1233 = vadd.f32 0.0, %v1232
  %v1234 = vpop.f32.mrf.mxu0
  %v1235 = vadd.f32 0.0, %v1234
  %1236 = vmatmul.bf16.gmra.mxu0 %v1163
  %v1237 = vpop.f32.mrf.mxu0
  %v1238 = vadd.f32 0.0, %v1237
  %v1239 = vpop.f32.mrf.mxu0
  %1240 = vdwg.mxu0
  %v1241 = vadd.f32 %v1061, %v1178
  %v1242 = vadd.f32 %v1062, %v1180
  %v1243 = vadd.f32 %v1063, %v1183
  %v1244 = vadd.f32 %v1064, %v1185
  %v1245 = vadd.f32 %v1065, %v1188
  %v1246 = vadd.f32 %v1066, %v1190
  %v1247 = vadd.f32 %v1067, %v1193
  %v1248 = vadd.f32 %v1068, %v1195
  %v1249 = vadd.f32 %v1069, %v1198
  %v1250 = vadd.f32 %v1070, %v1200
  %v1251 = vadd.f32 %v1071, %v1203
  %v1252 = vadd.f32 %v1072, %v1205
  %v1253 = vadd.f32 %v1073, %v1208
  %v1254 = vadd.f32 %v1074, %v1210
  %v1255 = vadd.f32 %v1075, %v1213
  %v1256 = vadd.f32 %v1076, %v1215
  %v1257 = vadd.f32 %v1077, %v1218
  %v1258 = vadd.f32 %v1078, %v1220
  %v1259 = vadd.f32 %v1079, %v1223
  %v1260 = vadd.f32 %v1080, %v1225
  %v1261 = vadd.f32 %v1081, %v1228
  %v1262 = vadd.f32 %v1082, %v1230
  %v1263 = vadd.f32 %v1083, %v1233
  %v1264 = vadd.f32 %v1084, %v1235
  %v1265 = vadd.f32 %v1085, %v1238
  %v1266 = vld [vmem:[%s0 + $0x15] sm:$0xff]
  %v1267 = vld [vmem:[%s0 + $0x1d] sm:$0xff]
  %v1268 = vld [vmem:[%s0 + $0x25] sm:$0xff]
  %v1269 = vld [vmem:[%s0 + $0x2d] sm:$0xff]
  %v1270 = vld [vmem:[%s0 + $0x35] sm:$0xff]
  %v1271 = vld [vmem:[%s0 + $0x3d] sm:$0xff]
  %v1272 = vld [vmem:[%s0 + $0x45] sm:$0xff]
  %v1273 = vld [vmem:[%s0 + $0x4d] sm:$0xff]
  %v1274 = vld [vmem:[%s0 + $0x55] sm:$0xff]
  %v1275 = vld [vmem:[%s0 + $0x5d] sm:$0xff]
  %v1276 = vld [vmem:[%s0 + $0x65] sm:$0xff]
  %v1277 = vld [vmem:[%s0 + $0x6d] sm:$0xff]
  %v1278 = vld [vmem:[%s0 + $0x75] sm:$0xff]
  %v1279 = vld [vmem:[%s0 + $0x7d] sm:$0xff]
  %v1280 = vld [vmem:[%s0 + $0x85] sm:$0xff]
  %v1281 = vld [vmem:[%s0 + $0x8d] sm:$0xff]
  %v1282 = vld [vmem:[%s0 + $0x95] sm:$0xff]
  %v1283 = vld [vmem:[%s0 + $0x9d] sm:$0xff]
  %v1284 = vld [vmem:[%s0 + $0xa5] sm:$0xff]
  %v1285 = vld [vmem:[%s0 + $0xad] sm:$0xff]
  %v1286 = vld [vmem:[%s0 + $0xb5] sm:$0xff]
  %v1287 = vld [vmem:[%s0 + $0xbd] sm:$0xff]
  %v1288 = vld [vmem:[%s0 + $0xc5] sm:$0xff]
  %v1289 = vld [vmem:[%s0 + $0xcd] sm:$0xff]
  %v1290 = vld [vmem:[%s0 + $0xd5] sm:$0xff]
  %v1291 = vpack.c.bf16 %v1267, %v1266
  %v1292 = vpack.c.bf16 %v1269, %v1268
  %v1293 = vpack.c.bf16 %v1271, %v1270
  %v1294 = vpack.c.bf16 %v1273, %v1272
  %v1295 = vpack.c.bf16 %v1275, %v1274
  %v1296 = vpack.c.bf16 %v1277, %v1276
  %v1297 = vpack.c.bf16 %v1279, %v1278
  %v1298 = vpack.c.bf16 %v1281, %v1280
  %v1299 = vpack.c.bf16 %v1283, %v1282
  %v1300 = vpack.c.bf16 %v1285, %v1284
  %v1301 = vpack.c.bf16 %v1287, %v1286
  %v1302 = vpack.c.bf16 %v1289, %v1288
  %v1303 = vpack.c.bf16 %v1290, %v1290
  %s1304 = scalar_lea.vmem %s1, 14
  %v1305 = vld [vmem:[%s1304] sm:$0x3]
  %v1307 = vsel %vm134, %v1291, 0
  %v1310 = vsel %vm134, %v1292, 0
  %v1313 = vsel %vm134, %v1293, 0
  %v1316 = vsel %vm134, %v1294, 0
  %v1319 = vsel %vm134, %v1295, 0
  %v1322 = vsel %vm134, %v1296, 0
  %v1325 = vsel %vm134, %v1297, 0
  %v1328 = vsel %vm134, %v1298, 0
  %v1331 = vsel %vm134, %v1299, 0
  %v1334 = vsel %vm134, %v1300, 0
  %v1337 = vsel %vm134, %v1301, 0
  %v1340 = vsel %vm134, %v1302, 0
  %v1343 = vsel %vm134, %v1303, 0
  %v1346 = vsel %vm174, %v1305, 0
  %1348 = vmatpush.bf16.msra.mxu0 0
  %1349 = vmatpush.bf16.msra.mxu0 0
  %1350 = vmatpush.bf16.msra.mxu0 0
  %1351 = vmatpush.bf16.msra.mxu0 0
  %1352 = vmatpush.bf16.msra.mxu0 0
  %1353 = vmatpush.bf16.msra.mxu0 0
  %1354 = vmatpush.bf16.msra.mxu0 0
  %1355 = vmatpush.bf16.msra.mxu0 %v1346
  %1356 = vmatmul.bf16.gmra.mxu0 %v1307
  %v1357 = vpop.f32.mrf.mxu0
  %v1358 = vadd.f32 0.0, %v1357
  %v1359 = vpop.f32.mrf.mxu0
  %v1360 = vadd.f32 0.0, %v1359
  %1361 = vmatmul.bf16.gmra.mxu0 %v1310
  %v1362 = vpop.f32.mrf.mxu0
  %v1363 = vadd.f32 0.0, %v1362
  %v1364 = vpop.f32.mrf.mxu0
  %v1365 = vadd.f32 0.0, %v1364
  %1366 = vmatmul.bf16.gmra.mxu0 %v1313
  %v1367 = vpop.f32.mrf.mxu0
  %v1368 = vadd.f32 0.0, %v1367
  %v1369 = vpop.f32.mrf.mxu0
  %v1370 = vadd.f32 0.0, %v1369
  %1371 = vmatmul.bf16.gmra.mxu0 %v1316
  %v1372 = vpop.f32.mrf.mxu0
  %v1373 = vadd.f32 0.0, %v1372
  %v1374 = vpop.f32.mrf.mxu0
  %v1375 = vadd.f32 0.0, %v1374
  %1376 = vmatmul.bf16.gmra.mxu0 %v1319
  %v1377 = vpop.f32.mrf.mxu0
  %v1378 = vadd.f32 0.0, %v1377
  %v1379 = vpop.f32.mrf.mxu0
  %v1380 = vadd.f32 0.0, %v1379
  %1381 = vmatmul.bf16.gmra.mxu0 %v1322
  %v1382 = vpop.f32.mrf.mxu0
  %v1383 = vadd.f32 0.0, %v1382
  %v1384 = vpop.f32.mrf.mxu0
  %v1385 = vadd.f32 0.0, %v1384
  %1386 = vmatmul.bf16.gmra.mxu0 %v1325
  %v1387 = vpop.f32.mrf.mxu0
  %v1388 = vadd.f32 0.0, %v1387
  %v1389 = vpop.f32.mrf.mxu0
  %v1390 = vadd.f32 0.0, %v1389
  %1391 = vmatmul.bf16.gmra.mxu0 %v1328
  %v1392 = vpop.f32.mrf.mxu0
  %v1393 = vadd.f32 0.0, %v1392
  %v1394 = vpop.f32.mrf.mxu0
  %v1395 = vadd.f32 0.0, %v1394
  %1396 = vmatmul.bf16.gmra.mxu0 %v1331
  %v1397 = vpop.f32.mrf.mxu0
  %v1398 = vadd.f32 0.0, %v1397
  %v1399 = vpop.f32.mrf.mxu0
  %v1400 = vadd.f32 0.0, %v1399
  %1401 = vmatmul.bf16.gmra.mxu0 %v1334
  %v1402 = vpop.f32.mrf.mxu0
  %v1403 = vadd.f32 0.0, %v1402
  %v1404 = vpop.f32.mrf.mxu0
  %v1405 = vadd.f32 0.0, %v1404
  %1406 = vmatmul.bf16.gmra.mxu0 %v1337
  %v1407 = vpop.f32.mrf.mxu0
  %v1408 = vadd.f32 0.0, %v1407
  %v1409 = vpop.f32.mrf.mxu0
  %v1410 = vadd.f32 0.0, %v1409
  %1411 = vmatmul.bf16.gmra.mxu0 %v1340
  %v1412 = vpop.f32.mrf.mxu0
  %v1413 = vadd.f32 0.0, %v1412
  %v1414 = vpop.f32.mrf.mxu0
  %v1415 = vadd.f32 0.0, %v1414
  %1416 = vmatmul.bf16.gmra.mxu0 %v1343
  %v1417 = vpop.f32.mrf.mxu0
  %v1418 = vadd.f32 0.0, %v1417
  %v1419 = vpop.f32.mrf.mxu0
  %1420 = vdwg.mxu0
  %v1421 = vadd.f32 %v1241, %v1358
  %v1422 = vadd.f32 %v1242, %v1360
  %v1423 = vadd.f32 %v1243, %v1363
  %v1424 = vadd.f32 %v1244, %v1365
  %v1425 = vadd.f32 %v1245, %v1368
  %v1426 = vadd.f32 %v1246, %v1370
  %v1427 = vadd.f32 %v1247, %v1373
  %v1428 = vadd.f32 %v1248, %v1375
  %v1429 = vadd.f32 %v1249, %v1378
  %v1430 = vadd.f32 %v1250, %v1380
  %v1431 = vadd.f32 %v1251, %v1383
  %v1432 = vadd.f32 %v1252, %v1385
  %v1433 = vadd.f32 %v1253, %v1388
  %v1434 = vadd.f32 %v1254, %v1390
  %v1435 = vadd.f32 %v1255, %v1393
  %v1436 = vadd.f32 %v1256, %v1395
  %v1437 = vadd.f32 %v1257, %v1398
  %v1438 = vadd.f32 %v1258, %v1400
  %v1439 = vadd.f32 %v1259, %v1403
  %v1440 = vadd.f32 %v1260, %v1405
  %v1441 = vadd.f32 %v1261, %v1408
  %v1442 = vadd.f32 %v1262, %v1410
  %v1443 = vadd.f32 %v1263, %v1413
  %v1444 = vadd.f32 %v1264, %v1415
  %v1445 = vadd.f32 %v1265, %v1418
  %v1446 = vld [vmem:[%s0 + $0x16] sm:$0xff]
  %v1447 = vld [vmem:[%s0 + $0x1e] sm:$0xff]
  %v1448 = vld [vmem:[%s0 + $0x26] sm:$0xff]
  %v1449 = vld [vmem:[%s0 + $0x2e] sm:$0xff]
  %v1450 = vld [vmem:[%s0 + $0x36] sm:$0xff]
  %v1451 = vld [vmem:[%s0 + $0x3e] sm:$0xff]
  %v1452 = vld [vmem:[%s0 + $0x46] sm:$0xff]
  %v1453 = vld [vmem:[%s0 + $0x4e] sm:$0xff]
  %v1454 = vld [vmem:[%s0 + $0x56] sm:$0xff]
  %v1455 = vld [vmem:[%s0 + $0x5e] sm:$0xff]
  %v1456 = vld [vmem:[%s0 + $0x66] sm:$0xff]
  %v1457 = vld [vmem:[%s0 + $0x6e] sm:$0xff]
  %v1458 = vld [vmem:[%s0 + $0x76] sm:$0xff]
  %v1459 = vld [vmem:[%s0 + $0x7e] sm:$0xff]
  %v1460 = vld [vmem:[%s0 + $0x86] sm:$0xff]
  %v1461 = vld [vmem:[%s0 + $0x8e] sm:$0xff]
  %v1462 = vld [vmem:[%s0 + $0x96] sm:$0xff]
  %v1463 = vld [vmem:[%s0 + $0x9e] sm:$0xff]
  %v1464 = vld [vmem:[%s0 + $0xa6] sm:$0xff]
  %v1465 = vld [vmem:[%s0 + $0xae] sm:$0xff]
  %v1466 = vld [vmem:[%s0 + $0xb6] sm:$0xff]
  %v1467 = vld [vmem:[%s0 + $0xbe] sm:$0xff]
  %v1468 = vld [vmem:[%s0 + $0xc6] sm:$0xff]
  %v1469 = vld [vmem:[%s0 + $0xce] sm:$0xff]
  %v1470 = vld [vmem:[%s0 + $0xd6] sm:$0xff]
  %v1471 = vpack.c.bf16 %v1447, %v1446
  %v1472 = vpack.c.bf16 %v1449, %v1448
  %v1473 = vpack.c.bf16 %v1451, %v1450
  %v1474 = vpack.c.bf16 %v1453, %v1452
  %v1475 = vpack.c.bf16 %v1455, %v1454
  %v1476 = vpack.c.bf16 %v1457, %v1456
  %v1477 = vpack.c.bf16 %v1459, %v1458
  %v1478 = vpack.c.bf16 %v1461, %v1460
  %v1479 = vpack.c.bf16 %v1463, %v1462
  %v1480 = vpack.c.bf16 %v1465, %v1464
  %v1481 = vpack.c.bf16 %v1467, %v1466
  %v1482 = vpack.c.bf16 %v1469, %v1468
  %v1483 = vpack.c.bf16 %v1470, %v1470
  %s1484 = scalar_lea.vmem %s1, 16
  %v1485 = vld [vmem:[%s1484] sm:$0x3]
  %v1487 = vsel %vm134, %v1471, 0
  %v1490 = vsel %vm134, %v1472, 0
  %v1493 = vsel %vm134, %v1473, 0
  %v1496 = vsel %vm134, %v1474, 0
  %v1499 = vsel %vm134, %v1475, 0
  %v1502 = vsel %vm134, %v1476, 0
  %v1505 = vsel %vm134, %v1477, 0
  %v1508 = vsel %vm134, %v1478, 0
  %v1511 = vsel %vm134, %v1479, 0
  %v1514 = vsel %vm134, %v1480, 0
  %v1517 = vsel %vm134, %v1481, 0
  %v1520 = vsel %vm134, %v1482, 0
  %v1523 = vsel %vm134, %v1483, 0
  %v1526 = vsel %vm174, %v1485, 0
  %1528 = vmatpush.bf16.msra.mxu0 0
  %1529 = vmatpush.bf16.msra.mxu0 0
  %1530 = vmatpush.bf16.msra.mxu0 0
  %1531 = vmatpush.bf16.msra.mxu0 0
  %1532 = vmatpush.bf16.msra.mxu0 0
  %1533 = vmatpush.bf16.msra.mxu0 0
  %1534 = vmatpush.bf16.msra.mxu0 0
  %1535 = vmatpush.bf16.msra.mxu0 %v1526
  %1536 = vmatmul.bf16.gmra.mxu0 %v1487
  %v1537 = vpop.f32.mrf.mxu0
  %v1538 = vadd.f32 0.0, %v1537
  %v1539 = vpop.f32.mrf.mxu0
  %v1540 = vadd.f32 0.0, %v1539
  %1541 = vmatmul.bf16.gmra.mxu0 %v1490
  %v1542 = vpop.f32.mrf.mxu0
  %v1543 = vadd.f32 0.0, %v1542
  %v1544 = vpop.f32.mrf.mxu0
  %v1545 = vadd.f32 0.0, %v1544
  %1546 = vmatmul.bf16.gmra.mxu0 %v1493
  %v1547 = vpop.f32.mrf.mxu0
  %v1548 = vadd.f32 0.0, %v1547
  %v1549 = vpop.f32.mrf.mxu0
  %v1550 = vadd.f32 0.0, %v1549
  %1551 = vmatmul.bf16.gmra.mxu0 %v1496
  %v1552 = vpop.f32.mrf.mxu0
  %v1553 = vadd.f32 0.0, %v1552
  %v1554 = vpop.f32.mrf.mxu0
  %v1555 = vadd.f32 0.0, %v1554
  %1556 = vmatmul.bf16.gmra.mxu0 %v1499
  %v1557 = vpop.f32.mrf.mxu0
  %v1558 = vadd.f32 0.0, %v1557
  %v1559 = vpop.f32.mrf.mxu0
  %v1560 = vadd.f32 0.0, %v1559
  %1561 = vmatmul.bf16.gmra.mxu0 %v1502
  %v1562 = vpop.f32.mrf.mxu0
  %v1563 = vadd.f32 0.0, %v1562
  %v1564 = vpop.f32.mrf.mxu0
  %v1565 = vadd.f32 0.0, %v1564
  %1566 = vmatmul.bf16.gmra.mxu0 %v1505
  %v1567 = vpop.f32.mrf.mxu0
  %v1568 = vadd.f32 0.0, %v1567
  %v1569 = vpop.f32.mrf.mxu0
  %v1570 = vadd.f32 0.0, %v1569
  %1571 = vmatmul.bf16.gmra.mxu0 %v1508
  %v1572 = vpop.f32.mrf.mxu0
  %v1573 = vadd.f32 0.0, %v1572
  %v1574 = vpop.f32.mrf.mxu0
  %v1575 = vadd.f32 0.0, %v1574
  %1576 = vmatmul.bf16.gmra.mxu0 %v1511
  %v1577 = vpop.f32.mrf.mxu0
  %v1578 = vadd.f32 0.0, %v1577
  %v1579 = vpop.f32.mrf.mxu0
  %v1580 = vadd.f32 0.0, %v1579
  %1581 = vmatmul.bf16.gmra.mxu0 %v1514
  %v1582 = vpop.f32.mrf.mxu0
  %v1583 = vadd.f32 0.0, %v1582
  %v1584 = vpop.f32.mrf.mxu0
  %v1585 = vadd.f32 0.0, %v1584
  %1586 = vmatmul.bf16.gmra.mxu0 %v1517
  %v1587 = vpop.f32.mrf.mxu0
  %v1588 = vadd.f32 0.0, %v1587
  %v1589 = vpop.f32.mrf.mxu0
  %v1590 = vadd.f32 0.0, %v1589
  %1591 = vmatmul.bf16.gmra.mxu0 %v1520
  %v1592 = vpop.f32.mrf.mxu0
  %v1593 = vadd.f32 0.0, %v1592
  %v1594 = vpop.f32.mrf.mxu0
  %v1595 = vadd.f32 0.0, %v1594
  %1596 = vmatmul.bf16.gmra.mxu0 %v1523
  %v1597 = vpop.f32.mrf.mxu0
  %v1598 = vadd.f32 0.0, %v1597
  %v1599 = vpop.f32.mrf.mxu0
  %1600 = vdwg.mxu0
  %v1601 = vadd.f32 %v1421, %v1538
  %v1602 = vadd.f32 %v1422, %v1540
  %v1603 = vadd.f32 %v1423, %v1543
  %v1604 = vadd.f32 %v1424, %v1545
  %v1605 = vadd.f32 %v1425, %v1548
  %v1606 = vadd.f32 %v1426, %v1550
  %v1607 = vadd.f32 %v1427, %v1553
  %v1608 = vadd.f32 %v1428, %v1555
  %v1609 = vadd.f32 %v1429, %v1558
  %v1610 = vadd.f32 %v1430, %v1560
  %v1611 = vadd.f32 %v1431, %v1563
  %v1612 = vadd.f32 %v1432, %v1565
  %v1613 = vadd.f32 %v1433, %v1568
  %v1614 = vadd.f32 %v1434, %v1570
  %v1615 = vadd.f32 %v1435, %v1573
  %v1616 = vadd.f32 %v1436, %v1575
  %v1617 = vadd.f32 %v1437, %v1578
  %v1618 = vadd.f32 %v1438, %v1580
  %v1619 = vadd.f32 %v1439, %v1583
  %v1620 = vadd.f32 %v1440, %v1585
  %v1621 = vadd.f32 %v1441, %v1588
  %v1622 = vadd.f32 %v1442, %v1590
  %v1623 = vadd.f32 %v1443, %v1593
  %v1624 = vadd.f32 %v1444, %v1595
  %v1625 = vadd.f32 %v1445, %v1598
  %1627 = vset.pattern.permute.xlu0 0
  %1628 = vperm.xlu0 %1627, %v30
  %v1629 = vpop.permute.xlu0 %1628
  %1632 = vset.pattern.permute.xlu0 0
  %1633 = vperm.xlu0 %1632, %v31
  %v1634 = vpop.permute.xlu0 %1633
  %1637 = vset.pattern.permute.xlu0 0
  %1638 = vperm.xlu0 %1637, %v32
  %v1639 = vpop.permute.xlu0 %1638
  %1642 = vset.pattern.permute.xlu0 0
  %1643 = vperm.xlu0 %1642, %v33
  %v1644 = vpop.permute.xlu0 %1643
  %1647 = vset.pattern.permute.xlu0 0
  %1648 = vperm.xlu0 %1647, %v34
  %v1649 = vpop.permute.xlu0 %1648
  %1652 = vset.pattern.permute.xlu0 0
  %1653 = vperm.xlu0 %1652, %v35
  %v1654 = vpop.permute.xlu0 %1653
  %1657 = vset.pattern.permute.xlu0 0
  %1658 = vperm.xlu0 %1657, %v36
  %v1659 = vpop.permute.xlu0 %1658
  %1662 = vset.pattern.permute.xlu0 0
  %1663 = vperm.xlu0 %1662, %v37
  %v1664 = vpop.permute.xlu0 %1663
  %1667 = vset.pattern.permute.xlu0 0
  %1668 = vperm.xlu0 %1667, %v38
  %v1669 = vpop.permute.xlu0 %1668
  %1672 = vset.pattern.permute.xlu0 0
  %1673 = vperm.xlu0 %1672, %v39
  %v1674 = vpop.permute.xlu0 %1673
  %1677 = vset.pattern.permute.xlu0 0
  %1678 = vperm.xlu0 %1677, %v40
  %v1679 = vpop.permute.xlu0 %1678
  %1682 = vset.pattern.permute.xlu0 0
  %1683 = vperm.xlu0 %1682, %v41
  %v1684 = vpop.permute.xlu0 %1683
  %1687 = vset.pattern.permute.xlu0 0
  %1688 = vperm.xlu0 %1687, %v42
  %v1689 = vpop.permute.xlu0 %1688
  %1692 = vset.pattern.permute.xlu0 0
  %1693 = vperm.xlu0 %1692, %v43
  %v1694 = vpop.permute.xlu0 %1693
  %1697 = vset.pattern.permute.xlu0 0
  %1698 = vperm.xlu0 %1697, %v44
  %v1699 = vpop.permute.xlu0 %1698
  %1702 = vset.pattern.permute.xlu0 0
  %1703 = vperm.xlu0 %1702, %v45
  %v1704 = vpop.permute.xlu0 %1703
  %1707 = vset.pattern.permute.xlu0 0
  %1708 = vperm.xlu0 %1707, %v46
  %v1709 = vpop.permute.xlu0 %1708
  %1712 = vset.pattern.permute.xlu0 0
  %1713 = vperm.xlu0 %1712, %v47
  %v1714 = vpop.permute.xlu0 %1713
  %1717 = vset.pattern.permute.xlu0 0
  %1718 = vperm.xlu0 %1717, %v48
  %v1719 = vpop.permute.xlu0 %1718
  %1722 = vset.pattern.permute.xlu0 0
  %1723 = vperm.xlu0 %1722, %v49
  %v1724 = vpop.permute.xlu0 %1723
  %1727 = vset.pattern.permute.xlu0 0
  %1728 = vperm.xlu0 %1727, %v50
  %v1729 = vpop.permute.xlu0 %1728
  %1732 = vset.pattern.permute.xlu0 0
  %1733 = vperm.xlu0 %1732, %v51
  %v1734 = vpop.permute.xlu0 %1733
  %1737 = vset.pattern.permute.xlu0 0
  %1738 = vperm.xlu0 %1737, %v52
  %v1739 = vpop.permute.xlu0 %1738
  %1742 = vset.pattern.permute.xlu0 0
  %1743 = vperm.xlu0 %1742, %v53
  %v1744 = vpop.permute.xlu0 %1743
  %1747 = vset.pattern.permute.xlu0 0
  %1748 = vperm.xlu0 %1747, %v54
  %v1749 = vpop.permute.xlu0 %1748
  %v1751 = vmul.f32 %v1601, %v1629
  %v1752 = vmul.f32 %v1602, %v1634
  %v1753 = vmul.f32 %v1603, %v1639
  %v1754 = vmul.f32 %v1604, %v1644
  %v1755 = vmul.f32 %v1605, %v1649
  %v1756 = vmul.f32 %v1606, %v1654
  %v1757 = vmul.f32 %v1607, %v1659
  %v1758 = vmul.f32 %v1608, %v1664
  %v1759 = vmul.f32 %v1609, %v1669
  %v1760 = vmul.f32 %v1610, %v1674
  %v1761 = vmul.f32 %v1611, %v1679
  %v1762 = vmul.f32 %v1612, %v1684
  %v1763 = vmul.f32 %v1613, %v1689
  %v1764 = vmul.f32 %v1614, %v1694
  %v1765 = vmul.f32 %v1615, %v1699
  %v1766 = vmul.f32 %v1616, %v1704
  %v1767 = vmul.f32 %v1617, %v1709
  %v1768 = vmul.f32 %v1618, %v1714
  %v1769 = vmul.f32 %v1619, %v1719
  %v1770 = vmul.f32 %v1620, %v1724
  %v1771 = vmul.f32 %v1621, %v1729
  %v1772 = vmul.f32 %v1622, %v1734
  %v1773 = vmul.f32 %v1623, %v1739
  %v1774 = vmul.f32 %v1624, %v1744
  %v1775 = vmul.f32 %v1625, %v1749
  %v1776 = vadd.f32 %v1751, %v1752
  %v1777 = vadd.f32 %v1776, %v1753
  %v1778 = vadd.f32 %v1777, %v1754
  %v1779 = vadd.f32 %v1778, %v1755
  %v1780 = vadd.f32 %v1779, %v1756
  %v1781 = vadd.f32 %v1780, %v1757
  %v1782 = vadd.f32 %v1781, %v1758
  %v1783 = vadd.f32 %v1782, %v1759
  %v1784 = vadd.f32 %v1783, %v1760
  %v1785 = vadd.f32 %v1784, %v1761
  %v1786 = vadd.f32 %v1785, %v1762
  %v1787 = vadd.f32 %v1786, %v1763
  %v1788 = vadd.f32 %v1787, %v1764
  %v1789 = vadd.f32 %v1788, %v1765
  %v1790 = vadd.f32 %v1789, %v1766
  %v1791 = vadd.f32 %v1790, %v1767
  %v1792 = vadd.f32 %v1791, %v1768
  %v1793 = vadd.f32 %v1792, %v1769
  %v1794 = vadd.f32 %v1793, %v1770
  %v1795 = vadd.f32 %v1794, %v1771
  %v1796 = vadd.f32 %v1795, %v1772
  %v1797 = vadd.f32 %v1796, %v1773
  %v1798 = vadd.f32 %v1797, %v1774
  %v1799 = vadd.f32 %v1798, %v1775
  %v1800 = vrot.slane %v1799, 4
  %v1801 = vadd.f32 %v1799, %v1800
  %v1802 = vrot.slane %v1801, 2
  %v1803 = vadd.f32 %v1801, %v1802
  %v1804 = vrot.slane %v1803, 1
  %v1805 = vadd.f32 %v1803, %v1804
  %v1806 = vmul.f32 %v1805, 0.0078125
  %v1807 = vsub.f32 %v1601, %v1806
  %v1808 = vsub.f32 %v1602, %v1806
  %v1809 = vsub.f32 %v1603, %v1806
  %v1810 = vsub.f32 %v1604, %v1806
  %v1811 = vsub.f32 %v1605, %v1806
  %v1812 = vsub.f32 %v1606, %v1806
  %v1813 = vsub.f32 %v1607, %v1806
  %v1814 = vsub.f32 %v1608, %v1806
  %v1815 = vsub.f32 %v1609, %v1806
  %v1816 = vsub.f32 %v1610, %v1806
  %v1817 = vsub.f32 %v1611, %v1806
  %v1818 = vsub.f32 %v1612, %v1806
  %v1819 = vsub.f32 %v1613, %v1806
  %v1820 = vsub.f32 %v1614, %v1806
  %v1821 = vsub.f32 %v1615, %v1806
  %v1822 = vsub.f32 %v1616, %v1806
  %v1823 = vsub.f32 %v1617, %v1806
  %v1824 = vsub.f32 %v1618, %v1806
  %v1825 = vsub.f32 %v1619, %v1806
  %v1826 = vsub.f32 %v1620, %v1806
  %v1827 = vsub.f32 %v1621, %v1806
  %v1828 = vsub.f32 %v1622, %v1806
  %v1829 = vsub.f32 %v1623, %v1806
  %v1830 = vsub.f32 %v1624, %v1806
  %v1831 = vsub.f32 %v1625, %v1806
  %v1832 = vmul.f32 %v1807, %v1807
  %v1833 = vmul.f32 %v1808, %v1808
  %v1834 = vmul.f32 %v1809, %v1809
  %v1835 = vmul.f32 %v1810, %v1810
  %v1836 = vmul.f32 %v1811, %v1811
  %v1837 = vmul.f32 %v1812, %v1812
  %v1838 = vmul.f32 %v1813, %v1813
  %v1839 = vmul.f32 %v1814, %v1814
  %v1840 = vmul.f32 %v1815, %v1815
  %v1841 = vmul.f32 %v1816, %v1816
  %v1842 = vmul.f32 %v1817, %v1817
  %v1843 = vmul.f32 %v1818, %v1818
  %v1844 = vmul.f32 %v1819, %v1819
  %v1845 = vmul.f32 %v1820, %v1820
  %v1846 = vmul.f32 %v1821, %v1821
  %v1847 = vmul.f32 %v1822, %v1822
  %v1848 = vmul.f32 %v1823, %v1823
  %v1849 = vmul.f32 %v1824, %v1824
  %v1850 = vmul.f32 %v1825, %v1825
  %v1851 = vmul.f32 %v1826, %v1826
  %v1852 = vmul.f32 %v1827, %v1827
  %v1853 = vmul.f32 %v1828, %v1828
  %v1854 = vmul.f32 %v1829, %v1829
  %v1855 = vmul.f32 %v1830, %v1830
  %v1856 = vmul.f32 %v1831, %v1831
  %v1857 = vmul.f32 %v1832, %v1629
  %v1858 = vmul.f32 %v1833, %v1634
  %v1859 = vmul.f32 %v1834, %v1639
  %v1860 = vmul.f32 %v1835, %v1644
  %v1861 = vmul.f32 %v1836, %v1649
  %v1862 = vmul.f32 %v1837, %v1654
  %v1863 = vmul.f32 %v1838, %v1659
  %v1864 = vmul.f32 %v1839, %v1664
  %v1865 = vmul.f32 %v1840, %v1669
  %v1866 = vmul.f32 %v1841, %v1674
  %v1867 = vmul.f32 %v1842, %v1679
  %v1868 = vmul.f32 %v1843, %v1684
  %v1869 = vmul.f32 %v1844, %v1689
  %v1870 = vmul.f32 %v1845, %v1694
  %v1871 = vmul.f32 %v1846, %v1699
  %v1872 = vmul.f32 %v1847, %v1704
  %v1873 = vmul.f32 %v1848, %v1709
  %v1874 = vmul.f32 %v1849, %v1714
  %v1875 = vmul.f32 %v1850, %v1719
  %v1876 = vmul.f32 %v1851, %v1724
  %v1877 = vmul.f32 %v1852, %v1729
  %v1878 = vmul.f32 %v1853, %v1734
  %v1879 = vmul.f32 %v1854, %v1739
  %v1880 = vmul.f32 %v1855, %v1744
  %v1881 = vmul.f32 %v1856, %v1749
  %v1882 = vadd.f32 %v1857, %v1858
  %v1883 = vadd.f32 %v1882, %v1859
  %v1884 = vadd.f32 %v1883, %v1860
  %v1885 = vadd.f32 %v1884, %v1861
  %v1886 = vadd.f32 %v1885, %v1862
  %v1887 = vadd.f32 %v1886, %v1863
  %v1888 = vadd.f32 %v1887, %v1864
  %v1889 = vadd.f32 %v1888, %v1865
  %v1890 = vadd.f32 %v1889, %v1866
  %v1891 = vadd.f32 %v1890, %v1867
  %v1892 = vadd.f32 %v1891, %v1868
  %v1893 = vadd.f32 %v1892, %v1869
  %v1894 = vadd.f32 %v1893, %v1870
  %v1895 = vadd.f32 %v1894, %v1871
  %v1896 = vadd.f32 %v1895, %v1872
  %v1897 = vadd.f32 %v1896, %v1873
  %v1898 = vadd.f32 %v1897, %v1874
  %v1899 = vadd.f32 %v1898, %v1875
  %v1900 = vadd.f32 %v1899, %v1876
  %v1901 = vadd.f32 %v1900, %v1877
  %v1902 = vadd.f32 %v1901, %v1878
  %v1903 = vadd.f32 %v1902, %v1879
  %v1904 = vadd.f32 %v1903, %v1880
  %v1905 = vadd.f32 %v1904, %v1881
  %v1906 = vrot.slane %v1905, 4
  %v1907 = vadd.f32 %v1905, %v1906
  %v1908 = vrot.slane %v1907, 2
  %v1909 = vadd.f32 %v1907, %v1908
  %v1910 = vrot.slane %v1909, 1
  %v1911 = vadd.f32 %v1909, %v1910
  %v1912 = vmul.f32 %v1911, 0.0078125
  %v1913 = vadd.f32 %v1912, 1e-05
  %v1914 = vrsqrt.pop %v1913
  %v1915 = vmul.f32 %v1914, %v1913
  %v1916 = vmul.f32 %v1915, %v1914
  %v1917 = vmul.f32 0.5, %v1916
  %v1918 = vsub.f32 1.5, %v1917
  %v1919 = vmul.f32 %v1914, %v1918
  %vm1920 = vweird.f32 %v1913
  %vm1921 = vweird.f32 %v1914
  %vm1922 = vmor %vm1920, %vm1921
  %v1923 = vsel %vm1922, %v1914, %v1919
  %v1924 = vmul.f32 %v1807, %v1923
  %v1925 = vmul.f32 %v1808, %v1923
  %v1926 = vmul.f32 %v1809, %v1923
  %v1927 = vmul.f32 %v1810, %v1923
  %v1928 = vmul.f32 %v1811, %v1923
  %v1929 = vmul.f32 %v1812, %v1923
  %v1930 = vmul.f32 %v1813, %v1923
  %v1931 = vmul.f32 %v1814, %v1923
  %v1932 = vmul.f32 %v1815, %v1923
  %v1933 = vmul.f32 %v1816, %v1923
  %v1934 = vmul.f32 %v1817, %v1923
  %v1935 = vmul.f32 %v1818, %v1923
  %v1936 = vmul.f32 %v1819, %v1923
  %v1937 = vmul.f32 %v1820, %v1923
  %v1938 = vmul.f32 %v1821, %v1923
  %v1939 = vmul.f32 %v1822, %v1923
  %v1940 = vmul.f32 %v1823, %v1923
  %v1941 = vmul.f32 %v1824, %v1923
  %v1942 = vmul.f32 %v1825, %v1923
  %v1943 = vmul.f32 %v1826, %v1923
  %v1944 = vmul.f32 %v1827, %v1923
  %v1945 = vmul.f32 %v1828, %v1923
  %v1946 = vmul.f32 %v1829, %v1923
  %v1947 = vmul.f32 %v1830, %v1923
  %v1948 = vmul.f32 %v1831, %v1923
  %v1949 = vld [vmem:[%s2] sm:$0x1]
  %v1951 = vperm.slane %v1949, 0
  %v1953 = vmul.f32 %v1924, %v1951
  %v1954 = vmul.f32 %v1925, %v1951
  %v1955 = vmul.f32 %v1926, %v1951
  %v1956 = vmul.f32 %v1927, %v1951
  %v1957 = vmul.f32 %v1928, %v1951
  %v1958 = vmul.f32 %v1929, %v1951
  %v1959 = vmul.f32 %v1930, %v1951
  %v1960 = vmul.f32 %v1931, %v1951
  %v1961 = vmul.f32 %v1932, %v1951
  %v1962 = vmul.f32 %v1933, %v1951
  %v1963 = vmul.f32 %v1934, %v1951
  %v1964 = vmul.f32 %v1935, %v1951
  %v1965 = vmul.f32 %v1936, %v1951
  %v1966 = vmul.f32 %v1937, %v1951
  %v1967 = vmul.f32 %v1938, %v1951
  %v1968 = vmul.f32 %v1939, %v1951
  %v1969 = vmul.f32 %v1940, %v1951
  %v1970 = vmul.f32 %v1941, %v1951
  %v1971 = vmul.f32 %v1942, %v1951
  %v1972 = vmul.f32 %v1943, %v1951
  %v1973 = vmul.f32 %v1944, %v1951
  %v1974 = vmul.f32 %v1945, %v1951
  %v1975 = vmul.f32 %v1946, %v1951
  %v1976 = vmul.f32 %v1947, %v1951
  %v1977 = vmul.f32 %v1948, %v1951
  %v1978 = vld [vmem:[%s3] sm:$0x1]
  %v1980 = vperm.slane %v1978, 0
  %v1982 = vadd.f32 %v1953, %v1980
  %v1983 = vadd.f32 %v1954, %v1980
  %v1984 = vadd.f32 %v1955, %v1980
  %v1985 = vadd.f32 %v1956, %v1980
  %v1986 = vadd.f32 %v1957, %v1980
  %v1987 = vadd.f32 %v1958, %v1980
  %v1988 = vadd.f32 %v1959, %v1980
  %v1989 = vadd.f32 %v1960, %v1980
  %v1990 = vadd.f32 %v1961, %v1980
  %v1991 = vadd.f32 %v1962, %v1980
  %v1992 = vadd.f32 %v1963, %v1980
  %v1993 = vadd.f32 %v1964, %v1980
  %v1994 = vadd.f32 %v1965, %v1980
  %v1995 = vadd.f32 %v1966, %v1980
  %v1996 = vadd.f32 %v1967, %v1980
  %v1997 = vadd.f32 %v1968, %v1980
  %v1998 = vadd.f32 %v1969, %v1980
  %v1999 = vadd.f32 %v1970, %v1980
  %v2000 = vadd.f32 %v1971, %v1980
  %v2001 = vadd.f32 %v1972, %v1980
  %v2002 = vadd.f32 %v1973, %v1980
  %v2003 = vadd.f32 %v1974, %v1980
  %v2004 = vadd.f32 %v1975, %v1980
  %v2005 = vadd.f32 %v1976, %v1980
  %v2006 = vadd.f32 %v1977, %v1980
  %v2007 = vmax.f32 %v1982, 0.0
  %v2008 = vmax.f32 %v1983, 0.0
  %v2009 = vmax.f32 %v1984, 0.0
  %v2010 = vmax.f32 %v1985, 0.0
  %v2011 = vmax.f32 %v1986, 0.0
  %v2012 = vmax.f32 %v1987, 0.0
  %v2013 = vmax.f32 %v1988, 0.0
  %v2014 = vmax.f32 %v1989, 0.0
  %v2015 = vmax.f32 %v1990, 0.0
  %v2016 = vmax.f32 %v1991, 0.0
  %v2017 = vmax.f32 %v1992, 0.0
  %v2018 = vmax.f32 %v1993, 0.0
  %v2019 = vmax.f32 %v1994, 0.0
  %v2020 = vmax.f32 %v1995, 0.0
  %v2021 = vmax.f32 %v1996, 0.0
  %v2022 = vmax.f32 %v1997, 0.0
  %v2023 = vmax.f32 %v1998, 0.0
  %v2024 = vmax.f32 %v1999, 0.0
  %v2025 = vmax.f32 %v2000, 0.0
  %v2026 = vmax.f32 %v2001, 0.0
  %v2027 = vmax.f32 %v2002, 0.0
  %v2028 = vmax.f32 %v2003, 0.0
  %v2029 = vmax.f32 %v2004, 0.0
  %v2030 = vmax.f32 %v2005, 0.0
  %v2031 = vmax.f32 %v2006, 0.0
  %v2032 = vmul.f32 %v2007, %v1629
  %v2033 = vmul.f32 %v2008, %v1634
  %v2034 = vmul.f32 %v2009, %v1639
  %v2035 = vmul.f32 %v2010, %v1644
  %v2036 = vmul.f32 %v2011, %v1649
  %v2037 = vmul.f32 %v2012, %v1654
  %v2038 = vmul.f32 %v2013, %v1659
  %v2039 = vmul.f32 %v2014, %v1664
  %v2040 = vmul.f32 %v2015, %v1669
  %v2041 = vmul.f32 %v2016, %v1674
  %v2042 = vmul.f32 %v2017, %v1679
  %v2043 = vmul.f32 %v2018, %v1684
  %v2044 = vmul.f32 %v2019, %v1689
  %v2045 = vmul.f32 %v2020, %v1694
  %v2046 = vmul.f32 %v2021, %v1699
  %v2047 = vmul.f32 %v2022, %v1704
  %v2048 = vmul.f32 %v2023, %v1709
  %v2049 = vmul.f32 %v2024, %v1714
  %v2050 = vmul.f32 %v2025, %v1719
  %v2051 = vmul.f32 %v2026, %v1724
  %v2052 = vmul.f32 %v2027, %v1729
  %v2053 = vmul.f32 %v2028, %v1734
  %v2054 = vmul.f32 %v2029, %v1739
  %v2055 = vmul.f32 %v2030, %v1744
  %v2056 = vmul.f32 %v2031, %v1749
  %2057 = vst [vmem:[#allocation2] sm:$0xff] 0.0
  %2058 = vst [vmem:[#allocation2 + $0x8] sm:$0xff] 0.0
  %2059 = vst [vmem:[#allocation2 + $0x10] sm:$0xff] 0.0
  %2060 = vst [vmem:[#allocation2 + $0x18] sm:$0xff] 0.0
  %2061 = vst [vmem:[#allocation2 + $0x20] sm:$0xff] 0.0
  %2062 = vst [vmem:[#allocation2 + $0x28] sm:$0xff] 0.0
  %2063 = vst [vmem:[#allocation2 + $0x30] sm:$0xff] 0.0
  %2064 = vst [vmem:[#allocation2 + $0x38] sm:$0xff] 0.0
  %2065 = vst [vmem:[#allocation2 + $0x40] sm:$0xff] 0.0
  %2066 = vst [vmem:[#allocation2 + $0x48] sm:$0xff] 0.0
  %2067 = vst [vmem:[#allocation2 + $0x50] sm:$0xff] 0.0
  %2068 = vst [vmem:[#allocation2 + $0x58] sm:$0xff] 0.0
  %2069 = vst [vmem:[#allocation2 + $0x60] sm:$0xff] 0.0
  %2070 = vst [vmem:[#allocation2 + $0x68] sm:$0xff] 0.0
  %2071 = vst [vmem:[#allocation2 + $0x70] sm:$0xff] 0.0
  %2072 = vst [vmem:[#allocation2 + $0x78] sm:$0xff] 0.0
  %2073 = vst [vmem:[#allocation2 + $0x80] sm:$0xff] 0.0
  %2074 = vst [vmem:[#allocation2 + $0x88] sm:$0xff] 0.0
  %2075 = vst [vmem:[#allocation2 + $0x90] sm:$0xff] 0.0
  %2076 = vst [vmem:[#allocation2 + $0x98] sm:$0xff] 0.0
  %2077 = vst [vmem:[#allocation2 + $0xa0] sm:$0xff] 0.0
  %2078 = vst [vmem:[#allocation2 + $0xa8] sm:$0xff] 0.0
  %2079 = vst [vmem:[#allocation2 + $0xb0] sm:$0xff] 0.0
  %2080 = vst [vmem:[#allocation2 + $0xb8] sm:$0xff] 0.0
  %2081 = vst [vmem:[#allocation2 + $0xc0] sm:$0xff] 0.0
  %2082 = vst [vmem:[#allocation2 + $0xc8] sm:$0xff] 0.0
  %2083 = vst [vmem:[#allocation2 + $0xd0] sm:$0xff] 0.0
  %2084 = vst [vmem:[#allocation2 + $0xd8] sm:$0xff] 0.0
  %2085 = vst [vmem:[#allocation2 + $0xb] sm:$0xff] %v2032
  %2086 = vst [vmem:[#allocation2 + $0x13] sm:$0xff] %v2033
  %2087 = vst [vmem:[#allocation2 + $0x1b] sm:$0xff] %v2034
  %2088 = vst [vmem:[#allocation2 + $0x23] sm:$0xff] %v2035
  %2089 = vst [vmem:[#allocation2 + $0x2b] sm:$0xff] %v2036
  %2090 = vst [vmem:[#allocation2 + $0x33] sm:$0xff] %v2037
  %2091 = vst [vmem:[#allocation2 + $0x3b] sm:$0xff] %v2038
  %2092 = vst [vmem:[#allocation2 + $0x43] sm:$0xff] %v2039
  %2093 = vst [vmem:[#allocation2 + $0x4b] sm:$0xff] %v2040
  %2094 = vst [vmem:[#allocation2 + $0x53] sm:$0xff] %v2041
  %2095 = vst [vmem:[#allocation2 + $0x5b] sm:$0xff] %v2042
  %2096 = vst [vmem:[#allocation2 + $0x63] sm:$0xff] %v2043
  %2097 = vst [vmem:[#allocation2 + $0x6b] sm:$0xff] %v2044
  %2098 = vst [vmem:[#allocation2 + $0x73] sm:$0xff] %v2045
  %2099 = vst [vmem:[#allocation2 + $0x7b] sm:$0xff] %v2046
  %2100 = vst [vmem:[#allocation2 + $0x83] sm:$0xff] %v2047
  %2101 = vst [vmem:[#allocation2 + $0x8b] sm:$0xff] %v2048
  %2102 = vst [vmem:[#allocation2 + $0x93] sm:$0xff] %v2049
  %2103 = vst [vmem:[#allocation2 + $0x9b] sm:$0xff] %v2050
  %2104 = vst [vmem:[#allocation2 + $0xa3] sm:$0xff] %v2051
  %2105 = vst [vmem:[#allocation2 + $0xab] sm:$0xff] %v2052
  %2106 = vst [vmem:[#allocation2 + $0xb3] sm:$0xff] %v2053
  %2107 = vst [vmem:[#allocation2 + $0xbb] sm:$0xff] %v2054
  %2108 = vst [vmem:[#allocation2 + $0xc3] sm:$0xff] %v2055
  %2109 = vst [vmem:[#allocation2 + $0xcb] sm:$0xff] %v2056
  %v2110 = vld [vmem:[#allocation2] sm:$0xff]
  %v2111 = vld [vmem:[#allocation2 + $0x8] sm:$0xff]
  %v2112 = vld [vmem:[#allocation2 + $0x10] sm:$0xff]
  %v2113 = vld [vmem:[#allocation2 + $0x18] sm:$0xff]
  %v2114 = vld [vmem:[#allocation2 + $0x20] sm:$0xff]
  %v2115 = vld [vmem:[#allocation2 + $0x28] sm:$0xff]
  %v2116 = vld [vmem:[#allocation2 + $0x30] sm:$0xff]
  %v2117 = vld [vmem:[#allocation2 + $0x38] sm:$0xff]
  %v2118 = vld [vmem:[#allocation2 + $0x40] sm:$0xff]
  %v2119 = vld [vmem:[#allocation2 + $0x48] sm:$0xff]
  %v2120 = vld [vmem:[#allocation2 + $0x50] sm:$0xff]
  %v2121 = vld [vmem:[#allocation2 + $0x58] sm:$0xff]
  %v2122 = vld [vmem:[#allocation2 + $0x60] sm:$0xff]
  %v2123 = vld [vmem:[#allocation2 + $0x68] sm:$0xff]
  %v2124 = vld [vmem:[#allocation2 + $0x70] sm:$0xff]
  %v2125 = vld [vmem:[#allocation2 + $0x78] sm:$0xff]
  %v2126 = vld [vmem:[#allocation2 + $0x80] sm:$0xff]
  %v2127 = vld [vmem:[#allocation2 + $0x88] sm:$0xff]
  %v2128 = vld [vmem:[#allocation2 + $0x90] sm:$0xff]
  %v2129 = vld [vmem:[#allocation2 + $0x98] sm:$0xff]
  %v2130 = vld [vmem:[#allocation2 + $0xa0] sm:$0xff]
  %v2131 = vld [vmem:[#allocation2 + $0xa8] sm:$0xff]
  %v2132 = vld [vmem:[#allocation2 + $0xb0] sm:$0xff]
  %v2133 = vld [vmem:[#allocation2 + $0xb8] sm:$0xff]
  %v2134 = vld [vmem:[#allocation2 + $0xc0] sm:$0xff]
  %v2135 = vpack.c.bf16 %v2111, %v2110
  %v2136 = vpack.c.bf16 %v2113, %v2112
  %v2137 = vpack.c.bf16 %v2115, %v2114
  %v2138 = vpack.c.bf16 %v2117, %v2116
  %v2139 = vpack.c.bf16 %v2119, %v2118
  %v2140 = vpack.c.bf16 %v2121, %v2120
  %v2141 = vpack.c.bf16 %v2123, %v2122
  %v2142 = vpack.c.bf16 %v2125, %v2124
  %v2143 = vpack.c.bf16 %v2127, %v2126
  %v2144 = vpack.c.bf16 %v2129, %v2128
  %v2145 = vpack.c.bf16 %v2131, %v2130
  %v2146 = vpack.c.bf16 %v2133, %v2132
  %v2147 = vpack.c.bf16 %v2134, %v2134
  %v2148 = vld [vmem:[%s4] sm:$0xf]
  %v2149 = vld [vmem:[%s4 + $0x4] sm:$0xf]
  %v2150 = vld [vmem:[%s4 + $0x8] sm:$0xf]
  %v2151 = vld [vmem:[%s4 + $0xc] sm:$0xf]
  %v2152 = vld [vmem:[%s4 + $0x10] sm:$0xf]
  %v2153 = vld [vmem:[%s4 + $0x14] sm:$0xf]
  %v2154 = vld [vmem:[%s4 + $0x18] sm:$0xf]
  %v2155 = vld [vmem:[%s4 + $0x1c] sm:$0xf]
  %v2156 = vld [vmem:[%s4 + $0x20] sm:$0xf]
  %v2157 = vld [vmem:[%s4 + $0x24] sm:$0xf]
  %v2158 = vld [vmem:[%s4 + $0x28] sm:$0xf]
  %v2159 = vld [vmem:[%s4 + $0x2c] sm:$0xf]
  %v2160 = vld [vmem:[%s4 + $0x30] sm:$0xf]
  %v2161 = vld [vmem:[%s4 + $0x34] sm:$0xf]
  %v2162 = vld [vmem:[%s4 + $0x38] sm:$0xf]
  %v2163 = vld [vmem:[%s4 + $0x3c] sm:$0xf]
  %v2164 = vld [vmem:[#allocation2 + $0x1] sm:$0xff]
  %v2165 = vld [vmem:[#allocation2 + $0x9] sm:$0xff]
  %v2166 = vld [vmem:[#allocation2 + $0x11] sm:$0xff]
  %v2167 = vld [vmem:[#allocation2 + $0x19] sm:$0xff]
  %v2168 = vld [vmem:[#allocation2 + $0x21] sm:$0xff]
  %v2169 = vld [vmem:[#allocation2 + $0x29] sm:$0xff]
  %v2170 = vld [vmem:[#allocation2 + $0x31] sm:$0xff]
  %v2171 = vld [vmem:[#allocation2 + $0x39] sm:$0xff]
  %v2172 = vld [vmem:[#allocation2 + $0x41] sm:$0xff]
  %v2173 = vld [vmem:[#allocation2 + $0x49] sm:$0xff]
  %v2174 = vld [vmem:[#allocation2 + $0x51] sm:$0xff]
  %v2175 = vld [vmem:[#allocation2 + $0x59] sm:$0xff]
  %v2176 = vld [vmem:[#allocation2 + $0x61] sm:$0xff]
  %v2177 = vld [vmem:[#allocation2 + $0x69] sm:$0xff]
  %v2178 = vld [vmem:[#allocation2 + $0x71] sm:$0xff]
  %v2179 = vld [vmem:[#allocation2 + $0x79] sm:$0xff]
  %v2180 = vld [vmem:[#allocation2 + $0x81] sm:$0xff]
  %v2181 = vld [vmem:[#allocation2 + $0x89] sm:$0xff]
  %v2182 = vld [vmem:[#allocation2 + $0x91] sm:$0xff]
  %v2183 = vld [vmem:[#allocation2 + $0x99] sm:$0xff]
  %v2184 = vld [vmem:[#allocation2 + $0xa1] sm:$0xff]
  %v2185 = vld [vmem:[#allocation2 + $0xa9] sm:$0xff]
  %v2186 = vld [vmem:[#allocation2 + $0xb1] sm:$0xff]
  %v2187 = vld [vmem:[#allocation2 + $0xb9] sm:$0xff]
  %v2188 = vld [vmem:[#allocation2 + $0xc1] sm:$0xff]
  %v2189 = vpack.c.bf16 %v2165, %v2164
  %v2190 = vpack.c.bf16 %v2167, %v2166
  %v2191 = vpack.c.bf16 %v2169, %v2168
  %v2192 = vpack.c.bf16 %v2171, %v2170
  %v2193 = vpack.c.bf16 %v2173, %v2172
  %v2194 = vpack.c.bf16 %v2175, %v2174
  %v2195 = vpack.c.bf16 %v2177, %v2176
  %v2196 = vpack.c.bf16 %v2179, %v2178
  %v2197 = vpack.c.bf16 %v2181, %v2180
  %v2198 = vpack.c.bf16 %v2183, %v2182
  %v2199 = vpack.c.bf16 %v2185, %v2184
  %v2200 = vpack.c.bf16 %v2187, %v2186
  %v2201 = vpack.c.bf16 %v2188, %v2188
  %s2202 = scalar_lea.vmem %s4, 64
  %v2203 = vld [vmem:[%s2202] sm:$0xf]
  %v2204 = vld [vmem:[%s2202 + $0x4] sm:$0xf]
  %v2205 = vld [vmem:[%s2202 + $0x8] sm:$0xf]
  %v2206 = vld [vmem:[%s2202 + $0xc] sm:$0xf]
  %v2207 = vld [vmem:[%s2202 + $0x10] sm:$0xf]
  %v2208 = vld [vmem:[%s2202 + $0x14] sm:$0xf]
  %v2209 = vld [vmem:[%s2202 + $0x18] sm:$0xf]
  %v2210 = vld [vmem:[%s2202 + $0x1c] sm:$0xf]
  %v2211 = vld [vmem:[%s2202 + $0x20] sm:$0xf]
  %v2212 = vld [vmem:[%s2202 + $0x24] sm:$0xf]
  %v2213 = vld [vmem:[%s2202 + $0x28] sm:$0xf]
  %v2214 = vld [vmem:[%s2202 + $0x2c] sm:$0xf]
  %v2215 = vld [vmem:[%s2202 + $0x30] sm:$0xf]
  %v2216 = vld [vmem:[%s2202 + $0x34] sm:$0xf]
  %v2217 = vld [vmem:[%s2202 + $0x38] sm:$0xf]
  %v2218 = vld [vmem:[%s2202 + $0x3c] sm:$0xf]
  %v2235 = vunpack.c.l.b16 %v2203
  %v2236 = vunpack.c.l.b16 %v2204
  %v2237 = vunpack.c.l.b16 %v2205
  %v2238 = vunpack.c.l.b16 %v2206
  %v2239 = vunpack.c.l.b16 %v2207
  %v2240 = vunpack.c.l.b16 %v2208
  %v2241 = vunpack.c.l.b16 %v2209
  %v2242 = vunpack.c.l.b16 %v2210
  %v2243 = vunpack.c.l.b16 %v2211
  %v2244 = vunpack.c.l.b16 %v2212
  %v2245 = vunpack.c.l.b16 %v2213
  %v2246 = vunpack.c.l.b16 %v2214
  %v2247 = vunpack.c.l.b16 %v2215
  %v2248 = vunpack.c.l.b16 %v2216
  %v2249 = vunpack.c.l.b16 %v2217
  %v2250 = vunpack.c.l.b16 %v2218
  %v2251 = vpack.c.b16 %v2236, %v2235
  %v2252 = vpack.c.b16 %v2238, %v2237
  %v2253 = vpack.c.b16 %v2240, %v2239
  %v2254 = vpack.c.b16 %v2242, %v2241
  %v2255 = vpack.c.b16 %v2244, %v2243
  %v2256 = vpack.c.b16 %v2246, %v2245
  %v2257 = vpack.c.b16 %v2248, %v2247
  %v2258 = vpack.c.b16 %v2250, %v2249
  %2267 = vmatpush.bf16.msra.mxu0 %v2258
  %2268 = vmatpush.bf16.msra.mxu0 %v2257
  %2269 = vmatpush.bf16.msra.mxu0 %v2256
  %2270 = vmatpush.bf16.msra.mxu0 %v2255
  %2271 = vmatpush.bf16.msra.mxu0 %v2254
  %2272 = vmatpush.bf16.msra.mxu0 %v2253
  %2273 = vmatpush.bf16.msra.mxu0 %v2252
  %2274 = vmatpush.bf16.msra.mxu0 %v2251
  %2275 = vmatmul.bf16.gmra.mxu0 %v2189
  %v2276 = vpop.f32.mrf.mxu0
  %v2277 = vadd.f32 0.0, %v2276
  %v2278 = vpop.f32.mrf.mxu0
  %v2279 = vadd.f32 0.0, %v2278
  %2280 = vmatmul.bf16.gmra.mxu0 %v2190
  %v2281 = vpop.f32.mrf.mxu0
  %v2282 = vadd.f32 0.0, %v2281
  %v2283 = vpop.f32.mrf.mxu0
  %v2284 = vadd.f32 0.0, %v2283
  %2285 = vmatmul.bf16.gmra.mxu0 %v2191
  %v2286 = vpop.f32.mrf.mxu0
  %v2287 = vadd.f32 0.0, %v2286
  %v2288 = vpop.f32.mrf.mxu0
  %v2289 = vadd.f32 0.0, %v2288
  %2290 = vmatmul.bf16.gmra.mxu0 %v2192
  %v2291 = vpop.f32.mrf.mxu0
  %v2292 = vadd.f32 0.0, %v2291
  %v2293 = vpop.f32.mrf.mxu0
  %v2294 = vadd.f32 0.0, %v2293
  %2295 = vmatmul.bf16.gmra.mxu0 %v2193
  %v2296 = vpop.f32.mrf.mxu0
  %v2297 = vadd.f32 0.0, %v2296
  %v2298 = vpop.f32.mrf.mxu0
  %v2299 = vadd.f32 0.0, %v2298
  %2300 = vmatmul.bf16.gmra.mxu0 %v2194
  %v2301 = vpop.f32.mrf.mxu0
  %v2302 = vadd.f32 0.0, %v2301
  %v2303 = vpop.f32.mrf.mxu0
  %v2304 = vadd.f32 0.0, %v2303
  %2305 = vmatmul.bf16.gmra.mxu0 %v2195
  %v2306 = vpop.f32.mrf.mxu0
  %v2307 = vadd.f32 0.0, %v2306
  %v2308 = vpop.f32.mrf.mxu0
  %v2309 = vadd.f32 0.0, %v2308
  %2310 = vmatmul.bf16.gmra.mxu0 %v2196
  %v2311 = vpop.f32.mrf.mxu0
  %v2312 = vadd.f32 0.0, %v2311
  %v2313 = vpop.f32.mrf.mxu0
  %v2314 = vadd.f32 0.0, %v2313
  %2315 = vmatmul.bf16.gmra.mxu0 %v2197
  %v2316 = vpop.f32.mrf.mxu0
  %v2317 = vadd.f32 0.0, %v2316
  %v2318 = vpop.f32.mrf.mxu0
  %v2319 = vadd.f32 0.0, %v2318
  %2320 = vmatmul.bf16.gmra.mxu0 %v2198
  %v2321 = vpop.f32.mrf.mxu0
  %v2322 = vadd.f32 0.0, %v2321
  %v2323 = vpop.f32.mrf.mxu0
  %v2324 = vadd.f32 0.0, %v2323
  %2325 = vmatmul.bf16.gmra.mxu0 %v2199
  %v2326 = vpop.f32.mrf.mxu0
  %v2327 = vadd.f32 0.0, %v2326
  %v2328 = vpop.f32.mrf.mxu0
  %v2329 = vadd.f32 0.0, %v2328
  %2330 = vmatmul.bf16.gmra.mxu0 %v2200
  %v2331 = vpop.f32.mrf.mxu0
  %v2332 = vadd.f32 0.0, %v2331
  %v2333 = vpop.f32.mrf.mxu0
  %v2334 = vadd.f32 0.0, %v2333
  %2335 = vmatmul.bf16.gmra.mxu0 %v2201
  %v2336 = vpop.f32.mrf.mxu0
  %v2337 = vadd.f32 0.0, %v2336
  %v2338 = vpop.f32.mrf.mxu0
  %2339 = vdwg.mxu0
  %v2356 = vunpack.c.l.b16 %v2148
  %v2357 = vunpack.c.l.b16 %v2149
  %v2358 = vunpack.c.l.b16 %v2150
  %v2359 = vunpack.c.l.b16 %v2151
  %v2360 = vunpack.c.l.b16 %v2152
  %v2361 = vunpack.c.l.b16 %v2153
  %v2362 = vunpack.c.l.b16 %v2154
  %v2363 = vunpack.c.l.b16 %v2155
  %v2364 = vunpack.c.l.b16 %v2156
  %v2365 = vunpack.c.l.b16 %v2157
  %v2366 = vunpack.c.l.b16 %v2158
  %v2367 = vunpack.c.l.b16 %v2159
  %v2368 = vunpack.c.l.b16 %v2160
  %v2369 = vunpack.c.l.b16 %v2161
  %v2370 = vunpack.c.l.b16 %v2162
  %v2371 = vunpack.c.l.b16 %v2163
  %v2372 = vpack.c.b16 %v2357, %v2356
  %v2373 = vpack.c.b16 %v2359, %v2358
  %v2374 = vpack.c.b16 %v2361, %v2360
  %v2375 = vpack.c.b16 %v2363, %v2362
  %v2376 = vpack.c.b16 %v2365, %v2364
  %v2377 = vpack.c.b16 %v2367, %v2366
  %v2378 = vpack.c.b16 %v2369, %v2368
  %v2379 = vpack.c.b16 %v2371, %v2370
  %2388 = vmatpush.bf16.msra.mxu0 %v2379
  %2389 = vmatpush.bf16.msra.mxu0 %v2378
  %2390 = vmatpush.bf16.msra.mxu0 %v2377
  %2391 = vmatpush.bf16.msra.mxu0 %v2376
  %2392 = vmatpush.bf16.msra.mxu0 %v2375
  %2393 = vmatpush.bf16.msra.mxu0 %v2374
  %2394 = vmatpush.bf16.msra.mxu0 %v2373
  %2395 = vmatpush.bf16.msra.mxu0 %v2372
  %2396 = vmatmul.bf16.gmra.mxu0 %v2135
  %v2397 = vpop.f32.mrf.mxu0
  %v2398 = vadd.f32 %v2277, %v2397
  %v2399 = vpop.f32.mrf.mxu0
  %v2400 = vadd.f32 %v2279, %v2399
  %2401 = vmatmul.bf16.gmra.mxu0 %v2136
  %v2402 = vpop.f32.mrf.mxu0
  %v2403 = vadd.f32 %v2282, %v2402
  %v2404 = vpop.f32.mrf.mxu0
  %v2405 = vadd.f32 %v2284, %v2404
  %2406 = vmatmul.bf16.gmra.mxu0 %v2137
  %v2407 = vpop.f32.mrf.mxu0
  %v2408 = vadd.f32 %v2287, %v2407
  %v2409 = vpop.f32.mrf.mxu0
  %v2410 = vadd.f32 %v2289, %v2409
  %2411 = vmatmul.bf16.gmra.mxu0 %v2138
  %v2412 = vpop.f32.mrf.mxu0
  %v2413 = vadd.f32 %v2292, %v2412
  %v2414 = vpop.f32.mrf.mxu0
  %v2415 = vadd.f32 %v2294, %v2414
  %2416 = vmatmul.bf16.gmra.mxu0 %v2139
  %v2417 = vpop.f32.mrf.mxu0
  %v2418 = vadd.f32 %v2297, %v2417
  %v2419 = vpop.f32.mrf.mxu0
  %v2420 = vadd.f32 %v2299, %v2419
  %2421 = vmatmul.bf16.gmra.mxu0 %v2140
  %v2422 = vpop.f32.mrf.mxu0
  %v2423 = vadd.f32 %v2302, %v2422
  %v2424 = vpop.f32.mrf.mxu0
  %v2425 = vadd.f32 %v2304, %v2424
  %2426 = vmatmul.bf16.gmra.mxu0 %v2141
  %v2427 = vpop.f32.mrf.mxu0
  %v2428 = vadd.f32 %v2307, %v2427
  %v2429 = vpop.f32.mrf.mxu0
  %v2430 = vadd.f32 %v2309, %v2429
  %2431 = vmatmul.bf16.gmra.mxu0 %v2142
  %v2432 = vpop.f32.mrf.mxu0
  %v2433 = vadd.f32 %v2312, %v2432
  %v2434 = vpop.f32.mrf.mxu0
  %v2435 = vadd.f32 %v2314, %v2434
  %2436 = vmatmul.bf16.gmra.mxu0 %v2143
  %v2437 = vpop.f32.mrf.mxu0
  %v2438 = vadd.f32 %v2317, %v2437
  %v2439 = vpop.f32.mrf.mxu0
  %v2440 = vadd.f32 %v2319, %v2439
  %2441 = vmatmul.bf16.gmra.mxu0 %v2144
  %v2442 = vpop.f32.mrf.mxu0
  %v2443 = vadd.f32 %v2322, %v2442
  %v2444 = vpop.f32.mrf.mxu0
  %v2445 = vadd.f32 %v2324, %v2444
  %2446 = vmatmul.bf16.gmra.mxu0 %v2145
  %v2447 = vpop.f32.mrf.mxu0
  %v2448 = vadd.f32 %v2327, %v2447
  %v2449 = vpop.f32.mrf.mxu0
  %v2450 = vadd.f32 %v2329, %v2449
  %2451 = vmatmul.bf16.gmra.mxu0 %v2146
  %v2452 = vpop.f32.mrf.mxu0
  %v2453 = vadd.f32 %v2332, %v2452
  %v2454 = vpop.f32.mrf.mxu0
  %v2455 = vadd.f32 %v2334, %v2454
  %2456 = vmatmul.bf16.gmra.mxu0 %v2147
  %v2457 = vpop.f32.mrf.mxu0
  %v2458 = vadd.f32 %v2337, %v2457
  %v2459 = vpop.f32.mrf.mxu0
  %2460 = vdwg.mxu0
  %v2461 = vld [vmem:[#allocation2 + $0x2] sm:$0xff]
  %v2462 = vld [vmem:[#allocation2 + $0xa] sm:$0xff]
  %v2463 = vld [vmem:[#allocation2 + $0x12] sm:$0xff]
  %v2464 = vld [vmem:[#allocation2 + $0x1a] sm:$0xff]
  %v2465 = vld [vmem:[#allocation2 + $0x22] sm:$0xff]
  %v2466 = vld [vmem:[#allocation2 + $0x2a] sm:$0xff]
  %v2467 = vld [vmem:[#allocation2 + $0x32] sm:$0xff]
  %v2468 = vld [vmem:[#allocation2 + $0x3a] sm:$0xff]
  %v2469 = vld [vmem:[#allocation2 + $0x42] sm:$0xff]
  %v2470 = vld [vmem:[#allocation2 + $0x4a] sm:$0xff]
  %v2471 = vld [vmem:[#allocation2 + $0x52] sm:$0xff]
  %v2472 = vld [vmem:[#allocation2 + $0x5a] sm:$0xff]
  %v2473 = vld [vmem:[#allocation2 + $0x62] sm:$0xff]
  %v2474 = vld [vmem:[#allocation2 + $0x6a] sm:$0xff]
  %v2475 = vld [vmem:[#allocation2 + $0x72] sm:$0xff]
  %v2476 = vld [vmem:[#allocation2 + $0x7a] sm:$0xff]
  %v2477 = vld [vmem:[#allocation2 + $0x82] sm:$0xff]
  %v2478 = vld [vmem:[#allocation2 + $0x8a] sm:$0xff]
  %v2479 = vld [vmem:[#allocation2 + $0x92] sm:$0xff]
  %v2480 = vld [vmem:[#allocation2 + $0x9a] sm:$0xff]
  %v2481 = vld [vmem:[#allocation2 + $0xa2] sm:$0xff]
  %v2482 = vld [vmem:[#allocation2 + $0xaa] sm:$0xff]
  %v2483 = vld [vmem:[#allocation2 + $0xb2] sm:$0xff]
  %v2484 = vld [vmem:[#allocation2 + $0xba] sm:$0xff]
  %v2485 = vld [vmem:[#allocation2 + $0xc2] sm:$0xff]
  %v2486 = vpack.c.bf16 %v2462, %v2461
  %v2487 = vpack.c.bf16 %v2464, %v2463
  %v2488 = vpack.c.bf16 %v2466, %v2465
  %v2489 = vpack.c.bf16 %v2468, %v2467
  %v2490 = vpack.c.bf16 %v2470, %v2469
  %v2491 = vpack.c.bf16 %v2472, %v2471
  %v2492 = vpack.c.bf16 %v2474, %v2473
  %v2493 = vpack.c.bf16 %v2476, %v2475
  %v2494 = vpack.c.bf16 %v2478, %v2477
  %v2495 = vpack.c.bf16 %v2480, %v2479
  %v2496 = vpack.c.bf16 %v2482, %v2481
  %v2497 = vpack.c.bf16 %v2484, %v2483
  %v2498 = vpack.c.bf16 %v2485, %v2485
  %s2499 = scalar_lea.vmem %s4, 128
  %v2500 = vld [vmem:[%s2499] sm:$0xf]
  %v2501 = vld [vmem:[%s2499 + $0x4] sm:$0xf]
  %v2502 = vld [vmem:[%s2499 + $0x8] sm:$0xf]
  %v2503 = vld [vmem:[%s2499 + $0xc] sm:$0xf]
  %v2504 = vld [vmem:[%s2499 + $0x10] sm:$0xf]
  %v2505 = vld [vmem:[%s2499 + $0x14] sm:$0xf]
  %v2506 = vld [vmem:[%s2499 + $0x18] sm:$0xf]
  %v2507 = vld [vmem:[%s2499 + $0x1c] sm:$0xf]
  %v2508 = vld [vmem:[%s2499 + $0x20] sm:$0xf]
  %v2509 = vld [vmem:[%s2499 + $0x24] sm:$0xf]
  %v2510 = vld [vmem:[%s2499 + $0x28] sm:$0xf]
  %v2511 = vld [vmem:[%s2499 + $0x2c] sm:$0xf]
  %v2512 = vld [vmem:[%s2499 + $0x30] sm:$0xf]
  %v2513 = vld [vmem:[%s2499 + $0x34] sm:$0xf]
  %v2514 = vld [vmem:[%s2499 + $0x38] sm:$0xf]
  %v2515 = vld [vmem:[%s2499 + $0x3c] sm:$0xf]
  %v2532 = vunpack.c.l.b16 %v2500
  %v2533 = vunpack.c.l.b16 %v2501
  %v2534 = vunpack.c.l.b16 %v2502
  %v2535 = vunpack.c.l.b16 %v2503
  %v2536 = vunpack.c.l.b16 %v2504
  %v2537 = vunpack.c.l.b16 %v2505
  %v2538 = vunpack.c.l.b16 %v2506
  %v2539 = vunpack.c.l.b16 %v2507
  %v2540 = vunpack.c.l.b16 %v2508
  %v2541 = vunpack.c.l.b16 %v2509
  %v2542 = vunpack.c.l.b16 %v2510
  %v2543 = vunpack.c.l.b16 %v2511
  %v2544 = vunpack.c.l.b16 %v2512
  %v2545 = vunpack.c.l.b16 %v2513
  %v2546 = vunpack.c.l.b16 %v2514
  %v2547 = vunpack.c.l.b16 %v2515
  %v2548 = vpack.c.b16 %v2533, %v2532
  %v2549 = vpack.c.b16 %v2535, %v2534
  %v2550 = vpack.c.b16 %v2537, %v2536
  %v2551 = vpack.c.b16 %v2539, %v2538
  %v2552 = vpack.c.b16 %v2541, %v2540
  %v2553 = vpack.c.b16 %v2543, %v2542
  %v2554 = vpack.c.b16 %v2545, %v2544
  %v2555 = vpack.c.b16 %v2547, %v2546
  %2564 = vmatpush.bf16.msra.mxu0 %v2555
  %2565 = vmatpush.bf16.msra.mxu0 %v2554
  %2566 = vmatpush.bf16.msra.mxu0 %v2553
  %2567 = vmatpush.bf16.msra.mxu0 %v2552
  %2568 = vmatpush.bf16.msra.mxu0 %v2551
  %2569 = vmatpush.bf16.msra.mxu0 %v2550
  %2570 = vmatpush.bf16.msra.mxu0 %v2549
  %2571 = vmatpush.bf16.msra.mxu0 %v2548
  %2572 = vmatmul.bf16.gmra.mxu0 %v2486
  %v2573 = vpop.f32.mrf.mxu0
  %v2574 = vadd.f32 0.0, %v2573
  %v2575 = vpop.f32.mrf.mxu0
  %v2576 = vadd.f32 0.0, %v2575
  %2577 = vmatmul.bf16.gmra.mxu0 %v2487
  %v2578 = vpop.f32.mrf.mxu0
  %v2579 = vadd.f32 0.0, %v2578
  %v2580 = vpop.f32.mrf.mxu0
  %v2581 = vadd.f32 0.0, %v2580
  %2582 = vmatmul.bf16.gmra.mxu0 %v2488
  %v2583 = vpop.f32.mrf.mxu0
  %v2584 = vadd.f32 0.0, %v2583
  %v2585 = vpop.f32.mrf.mxu0
  %v2586 = vadd.f32 0.0, %v2585
  %2587 = vmatmul.bf16.gmra.mxu0 %v2489
  %v2588 = vpop.f32.mrf.mxu0
  %v2589 = vadd.f32 0.0, %v2588
  %v2590 = vpop.f32.mrf.mxu0
  %v2591 = vadd.f32 0.0, %v2590
  %2592 = vmatmul.bf16.gmra.mxu0 %v2490
  %v2593 = vpop.f32.mrf.mxu0
  %v2594 = vadd.f32 0.0, %v2593
  %v2595 = vpop.f32.mrf.mxu0
  %v2596 = vadd.f32 0.0, %v2595
  %2597 = vmatmul.bf16.gmra.mxu0 %v2491
  %v2598 = vpop.f32.mrf.mxu0
  %v2599 = vadd.f32 0.0, %v2598
  %v2600 = vpop.f32.mrf.mxu0
  %v2601 = vadd.f32 0.0, %v2600
  %2602 = vmatmul.bf16.gmra.mxu0 %v2492
  %v2603 = vpop.f32.mrf.mxu0
  %v2604 = vadd.f32 0.0, %v2603
  %v2605 = vpop.f32.mrf.mxu0
  %v2606 = vadd.f32 0.0, %v2605
  %2607 = vmatmul.bf16.gmra.mxu0 %v2493
  %v2608 = vpop.f32.mrf.mxu0
  %v2609 = vadd.f32 0.0, %v2608
  %v2610 = vpop.f32.mrf.mxu0
  %v2611 = vadd.f32 0.0, %v2610
  %2612 = vmatmul.bf16.gmra.mxu0 %v2494
  %v2613 = vpop.f32.mrf.mxu0
  %v2614 = vadd.f32 0.0, %v2613
  %v2615 = vpop.f32.mrf.mxu0
  %v2616 = vadd.f32 0.0, %v2615
  %2617 = vmatmul.bf16.gmra.mxu0 %v2495
  %v2618 = vpop.f32.mrf.mxu0
  %v2619 = vadd.f32 0.0, %v2618
  %v2620 = vpop.f32.mrf.mxu0
  %v2621 = vadd.f32 0.0, %v2620
  %2622 = vmatmul.bf16.gmra.mxu0 %v2496
  %v2623 = vpop.f32.mrf.mxu0
  %v2624 = vadd.f32 0.0, %v2623
  %v2625 = vpop.f32.mrf.mxu0
  %v2626 = vadd.f32 0.0, %v2625
  %2627 = vmatmul.bf16.gmra.mxu0 %v2497
  %v2628 = vpop.f32.mrf.mxu0
  %v2629 = vadd.f32 0.0, %v2628
  %v2630 = vpop.f32.mrf.mxu0
  %v2631 = vadd.f32 0.0, %v2630
  %2632 = vmatmul.bf16.gmra.mxu0 %v2498
  %v2633 = vpop.f32.mrf.mxu0
  %v2634 = vadd.f32 0.0, %v2633
  %v2635 = vpop.f32.mrf.mxu0
  %2636 = vdwg.mxu0
  %v2637 = vadd.f32 %v2398, %v2574
  %v2638 = vadd.f32 %v2400, %v2576
  %v2639 = vadd.f32 %v2403, %v2579
  %v2640 = vadd.f32 %v2405, %v2581
  %v2641 = vadd.f32 %v2408, %v2584
  %v2642 = vadd.f32 %v2410, %v2586
  %v2643 = vadd.f32 %v2413, %v2589
  %v2644 = vadd.f32 %v2415, %v2591
  %v2645 = vadd.f32 %v2418, %v2594
  %v2646 = vadd.f32 %v2420, %v2596
  %v2647 = vadd.f32 %v2423, %v2599
  %v2648 = vadd.f32 %v2425, %v2601
  %v2649 = vadd.f32 %v2428, %v2604
  %v2650 = vadd.f32 %v2430, %v2606
  %v2651 = vadd.f32 %v2433, %v2609
  %v2652 = vadd.f32 %v2435, %v2611
  %v2653 = vadd.f32 %v2438, %v2614
  %v2654 = vadd.f32 %v2440, %v2616
  %v2655 = vadd.f32 %v2443, %v2619
  %v2656 = vadd.f32 %v2445, %v2621
  %v2657 = vadd.f32 %v2448, %v2624
  %v2658 = vadd.f32 %v2450, %v2626
  %v2659 = vadd.f32 %v2453, %v2629
  %v2660 = vadd.f32 %v2455, %v2631
  %v2661 = vadd.f32 %v2458, %v2634
  %v2662 = vld [vmem:[#allocation2 + $0xa] sm:$0xff]
  %v2663 = vld [vmem:[#allocation2 + $0x12] sm:$0xff]
  %v2664 = vld [vmem:[#allocation2 + $0x1a] sm:$0xff]
  %v2665 = vld [vmem:[#allocation2 + $0x22] sm:$0xff]
  %v2666 = vld [vmem:[#allocation2 + $0x2a] sm:$0xff]
  %v2667 = vld [vmem:[#allocation2 + $0x32] sm:$0xff]
  %v2668 = vld [vmem:[#allocation2 + $0x3a] sm:$0xff]
  %v2669 = vld [vmem:[#allocation2 + $0x42] sm:$0xff]
  %v2670 = vld [vmem:[#allocation2 + $0x4a] sm:$0xff]
  %v2671 = vld [vmem:[#allocation2 + $0x52] sm:$0xff]
  %v2672 = vld [vmem:[#allocation2 + $0x5a] sm:$0xff]
  %v2673 = vld [vmem:[#allocation2 + $0x62] sm:$0xff]
  %v2674 = vld [vmem:[#allocation2 + $0x6a] sm:$0xff]
  %v2675 = vld [vmem:[#allocation2 + $0x72] sm:$0xff]
  %v2676 = vld [vmem:[#allocation2 + $0x7a] sm:$0xff]
  %v2677 = vld [vmem:[#allocation2 + $0x82] sm:$0xff]
  %v2678 = vld [vmem:[#allocation2 + $0x8a] sm:$0xff]
  %v2679 = vld [vmem:[#allocation2 + $0x92] sm:$0xff]
  %v2680 = vld [vmem:[#allocation2 + $0x9a] sm:$0xff]
  %v2681 = vld [vmem:[#allocation2 + $0xa2] sm:$0xff]
  %v2682 = vld [vmem:[#allocation2 + $0xaa] sm:$0xff]
  %v2683 = vld [vmem:[#allocation2 + $0xb2] sm:$0xff]
  %v2684 = vld [vmem:[#allocation2 + $0xba] sm:$0xff]
  %v2685 = vld [vmem:[#allocation2 + $0xc2] sm:$0xff]
  %v2686 = vld [vmem:[#allocation2 + $0xca] sm:$0xff]
  %v2687 = vpack.c.bf16 %v2663, %v2662
  %v2688 = vpack.c.bf16 %v2665, %v2664
  %v2689 = vpack.c.bf16 %v2667, %v2666
  %v2690 = vpack.c.bf16 %v2669, %v2668
  %v2691 = vpack.c.bf16 %v2671, %v2670
  %v2692 = vpack.c.bf16 %v2673, %v2672
  %v2693 = vpack.c.bf16 %v2675, %v2674
  %v2694 = vpack.c.bf16 %v2677, %v2676
  %v2695 = vpack.c.bf16 %v2679, %v2678
  %v2696 = vpack.c.bf16 %v2681, %v2680
  %v2697 = vpack.c.bf16 %v2683, %v2682
  %v2698 = vpack.c.bf16 %v2685, %v2684
  %v2699 = vpack.c.bf16 %v2686, %v2686
  %s2700 = scalar_lea.vmem %s4, 192
  %v2701 = vld [vmem:[%s2700] sm:$0xf]
  %v2702 = vld [vmem:[%s2700 + $0x4] sm:$0xf]
  %v2703 = vld [vmem:[%s2700 + $0x8] sm:$0xf]
  %v2704 = vld [vmem:[%s2700 + $0xc] sm:$0xf]
  %v2705 = vld [vmem:[%s2700 + $0x10] sm:$0xf]
  %v2706 = vld [vmem:[%s2700 + $0x14] sm:$0xf]
  %v2707 = vld [vmem:[%s2700 + $0x18] sm:$0xf]
  %v2708 = vld [vmem:[%s2700 + $0x1c] sm:$0xf]
  %v2709 = vld [vmem:[%s2700 + $0x20] sm:$0xf]
  %v2710 = vld [vmem:[%s2700 + $0x24] sm:$0xf]
  %v2711 = vld [vmem:[%s2700 + $0x28] sm:$0xf]
  %v2712 = vld [vmem:[%s2700 + $0x2c] sm:$0xf]
  %v2713 = vld [vmem:[%s2700 + $0x30] sm:$0xf]
  %v2714 = vld [vmem:[%s2700 + $0x34] sm:$0xf]
  %v2715 = vld [vmem:[%s2700 + $0x38] sm:$0xf]
  %v2716 = vld [vmem:[%s2700 + $0x3c] sm:$0xf]
  %v2733 = vunpack.c.l.b16 %v2701
  %v2734 = vunpack.c.l.b16 %v2702
  %v2735 = vunpack.c.l.b16 %v2703
  %v2736 = vunpack.c.l.b16 %v2704
  %v2737 = vunpack.c.l.b16 %v2705
  %v2738 = vunpack.c.l.b16 %v2706
  %v2739 = vunpack.c.l.b16 %v2707
  %v2740 = vunpack.c.l.b16 %v2708
  %v2741 = vunpack.c.l.b16 %v2709
  %v2742 = vunpack.c.l.b16 %v2710
  %v2743 = vunpack.c.l.b16 %v2711
  %v2744 = vunpack.c.l.b16 %v2712
  %v2745 = vunpack.c.l.b16 %v2713
  %v2746 = vunpack.c.l.b16 %v2714
  %v2747 = vunpack.c.l.b16 %v2715
  %v2748 = vunpack.c.l.b16 %v2716
  %v2749 = vpack.c.b16 %v2734, %v2733
  %v2750 = vpack.c.b16 %v2736, %v2735
  %v2751 = vpack.c.b16 %v2738, %v2737
  %v2752 = vpack.c.b16 %v2740, %v2739
  %v2753 = vpack.c.b16 %v2742, %v2741
  %v2754 = vpack.c.b16 %v2744, %v2743
  %v2755 = vpack.c.b16 %v2746, %v2745
  %v2756 = vpack.c.b16 %v2748, %v2747
  %2765 = vmatpush.bf16.msra.mxu0 %v2756
  %2766 = vmatpush.bf16.msra.mxu0 %v2755
  %2767 = vmatpush.bf16.msra.mxu0 %v2754
  %2768 = vmatpush.bf16.msra.mxu0 %v2753
  %2769 = vmatpush.bf16.msra.mxu0 %v2752
  %2770 = vmatpush.bf16.msra.mxu0 %v2751
  %2771 = vmatpush.bf16.msra.mxu0 %v2750
  %2772 = vmatpush.bf16.msra.mxu0 %v2749
  %2773 = vmatmul.bf16.gmra.mxu0 %v2687
  %v2774 = vpop.f32.mrf.mxu0
  %v2775 = vadd.f32 0.0, %v2774
  %v2776 = vpop.f32.mrf.mxu0
  %v2777 = vadd.f32 0.0, %v2776
  %2778 = vmatmul.bf16.gmra.mxu0 %v2688
  %v2779 = vpop.f32.mrf.mxu0
  %v2780 = vadd.f32 0.0, %v2779
  %v2781 = vpop.f32.mrf.mxu0
  %v2782 = vadd.f32 0.0, %v2781
  %2783 = vmatmul.bf16.gmra.mxu0 %v2689
  %v2784 = vpop.f32.mrf.mxu0
  %v2785 = vadd.f32 0.0, %v2784
  %v2786 = vpop.f32.mrf.mxu0
  %v2787 = vadd.f32 0.0, %v2786
  %2788 = vmatmul.bf16.gmra.mxu0 %v2690
  %v2789 = vpop.f32.mrf.mxu0
  %v2790 = vadd.f32 0.0, %v2789
  %v2791 = vpop.f32.mrf.mxu0
  %v2792 = vadd.f32 0.0, %v2791
  %2793 = vmatmul.bf16.gmra.mxu0 %v2691
  %v2794 = vpop.f32.mrf.mxu0
  %v2795 = vadd.f32 0.0, %v2794
  %v2796 = vpop.f32.mrf.mxu0
  %v2797 = vadd.f32 0.0, %v2796
  %2798 = vmatmul.bf16.gmra.mxu0 %v2692
  %v2799 = vpop.f32.mrf.mxu0
  %v2800 = vadd.f32 0.0, %v2799
  %v2801 = vpop.f32.mrf.mxu0
  %v2802 = vadd.f32 0.0, %v2801
  %2803 = vmatmul.bf16.gmra.mxu0 %v2693
  %v2804 = vpop.f32.mrf.mxu0
  %v2805 = vadd.f32 0.0, %v2804
  %v2806 = vpop.f32.mrf.mxu0
  %v2807 = vadd.f32 0.0, %v2806
  %2808 = vmatmul.bf16.gmra.mxu0 %v2694
  %v2809 = vpop.f32.mrf.mxu0
  %v2810 = vadd.f32 0.0, %v2809
  %v2811 = vpop.f32.mrf.mxu0
  %v2812 = vadd.f32 0.0, %v2811
  %2813 = vmatmul.bf16.gmra.mxu0 %v2695
  %v2814 = vpop.f32.mrf.mxu0
  %v2815 = vadd.f32 0.0, %v2814
  %v2816 = vpop.f32.mrf.mxu0
  %v2817 = vadd.f32 0.0, %v2816
  %2818 = vmatmul.bf16.gmra.mxu0 %v2696
  %v2819 = vpop.f32.mrf.mxu0
  %v2820 = vadd.f32 0.0, %v2819
  %v2821 = vpop.f32.mrf.mxu0
  %v2822 = vadd.f32 0.0, %v2821
  %2823 = vmatmul.bf16.gmra.mxu0 %v2697
  %v2824 = vpop.f32.mrf.mxu0
  %v2825 = vadd.f32 0.0, %v2824
  %v2826 = vpop.f32.mrf.mxu0
  %v2827 = vadd.f32 0.0, %v2826
  %2828 = vmatmul.bf16.gmra.mxu0 %v2698
  %v2829 = vpop.f32.mrf.mxu0
  %v2830 = vadd.f32 0.0, %v2829
  %v2831 = vpop.f32.mrf.mxu0
  %v2832 = vadd.f32 0.0, %v2831
  %2833 = vmatmul.bf16.gmra.mxu0 %v2699
  %v2834 = vpop.f32.mrf.mxu0
  %v2835 = vadd.f32 0.0, %v2834
  %v2836 = vpop.f32.mrf.mxu0
  %2837 = vdwg.mxu0
  %v2838 = vadd.f32 %v2637, %v2775
  %v2839 = vadd.f32 %v2638, %v2777
  %v2840 = vadd.f32 %v2639, %v2780
  %v2841 = vadd.f32 %v2640, %v2782
  %v2842 = vadd.f32 %v2641, %v2785
  %v2843 = vadd.f32 %v2642, %v2787
  %v2844 = vadd.f32 %v2643, %v2790
  %v2845 = vadd.f32 %v2644, %v2792
  %v2846 = vadd.f32 %v2645, %v2795
  %v2847 = vadd.f32 %v2646, %v2797
  %v2848 = vadd.f32 %v2647, %v2800
  %v2849 = vadd.f32 %v2648, %v2802
  %v2850 = vadd.f32 %v2649, %v2805
  %v2851 = vadd.f32 %v2650, %v2807
  %v2852 = vadd.f32 %v2651, %v2810
  %v2853 = vadd.f32 %v2652, %v2812
  %v2854 = vadd.f32 %v2653, %v2815
  %v2855 = vadd.f32 %v2654, %v2817
  %v2856 = vadd.f32 %v2655, %v2820
  %v2857 = vadd.f32 %v2656, %v2822
  %v2858 = vadd.f32 %v2657, %v2825
  %v2859 = vadd.f32 %v2658, %v2827
  %v2860 = vadd.f32 %v2659, %v2830
  %v2861 = vadd.f32 %v2660, %v2832
  %v2862 = vadd.f32 %v2661, %v2835
  %v2863 = vld [vmem:[#allocation2 + $0xb] sm:$0xff]
  %v2864 = vld [vmem:[#allocation2 + $0x13] sm:$0xff]
  %v2865 = vld [vmem:[#allocation2 + $0x1b] sm:$0xff]
  %v2866 = vld [vmem:[#allocation2 + $0x23] sm:$0xff]
  %v2867 = vld [vmem:[#allocation2 + $0x2b] sm:$0xff]
  %v2868 = vld [vmem:[#allocation2 + $0x33] sm:$0xff]
  %v2869 = vld [vmem:[#allocation2 + $0x3b] sm:$0xff]
  %v2870 = vld [vmem:[#allocation2 + $0x43] sm:$0xff]
  %v2871 = vld [vmem:[#allocation2 + $0x4b] sm:$0xff]
  %v2872 = vld [vmem:[#allocation2 + $0x53] sm:$0xff]
  %v2873 = vld [vmem:[#allocation2 + $0x5b] sm:$0xff]
  %v2874 = vld [vmem:[#allocation2 + $0x63] sm:$0xff]
  %v2875 = vld [vmem:[#allocation2 + $0x6b] sm:$0xff]
  %v2876 = vld [vmem:[#allocation2 + $0x73] sm:$0xff]
  %v2877 = vld [vmem:[#allocation2 + $0x7b] sm:$0xff]
  %v2878 = vld [vmem:[#allocation2 + $0x83] sm:$0xff]
  %v2879 = vld [vmem:[#allocation2 + $0x8b] sm:$0xff]
  %v2880 = vld [vmem:[#allocation2 + $0x93] sm:$0xff]
  %v2881 = vld [vmem:[#allocation2 + $0x9b] sm:$0xff]
  %v2882 = vld [vmem:[#allocation2 + $0xa3] sm:$0xff]
  %v2883 = vld [vmem:[#allocation2 + $0xab] sm:$0xff]
  %v2884 = vld [vmem:[#allocation2 + $0xb3] sm:$0xff]
  %v2885 = vld [vmem:[#allocation2 + $0xbb] sm:$0xff]
  %v2886 = vld [vmem:[#allocation2 + $0xc3] sm:$0xff]
  %v2887 = vld [vmem:[#allocation2 + $0xcb] sm:$0xff]
  %v2888 = vpack.c.bf16 %v2864, %v2863
  %v2889 = vpack.c.bf16 %v2866, %v2865
  %v2890 = vpack.c.bf16 %v2868, %v2867
  %v2891 = vpack.c.bf16 %v2870, %v2869
  %v2892 = vpack.c.bf16 %v2872, %v2871
  %v2893 = vpack.c.bf16 %v2874, %v2873
  %v2894 = vpack.c.bf16 %v2876, %v2875
  %v2895 = vpack.c.bf16 %v2878, %v2877
  %v2896 = vpack.c.bf16 %v2880, %v2879
  %v2897 = vpack.c.bf16 %v2882, %v2881
  %v2898 = vpack.c.bf16 %v2884, %v2883
  %v2899 = vpack.c.bf16 %v2886, %v2885
  %v2900 = vpack.c.bf16 %v2887, %v2887
  %s2901 = scalar_lea.vmem %s4, 256
  %v2902 = vld [vmem:[%s2901] sm:$0xf]
  %v2903 = vld [vmem:[%s2901 + $0x4] sm:$0xf]
  %v2904 = vld [vmem:[%s2901 + $0x8] sm:$0xf]
  %v2905 = vld [vmem:[%s2901 + $0xc] sm:$0xf]
  %v2906 = vld [vmem:[%s2901 + $0x10] sm:$0xf]
  %v2907 = vld [vmem:[%s2901 + $0x14] sm:$0xf]
  %v2908 = vld [vmem:[%s2901 + $0x18] sm:$0xf]
  %v2909 = vld [vmem:[%s2901 + $0x1c] sm:$0xf]
  %v2910 = vld [vmem:[%s2901 + $0x20] sm:$0xf]
  %v2911 = vld [vmem:[%s2901 + $0x24] sm:$0xf]
  %v2912 = vld [vmem:[%s2901 + $0x28] sm:$0xf]
  %v2913 = vld [vmem:[%s2901 + $0x2c] sm:$0xf]
  %v2914 = vld [vmem:[%s2901 + $0x30] sm:$0xf]
  %v2915 = vld [vmem:[%s2901 + $0x34] sm:$0xf]
  %v2916 = vld [vmem:[%s2901 + $0x38] sm:$0xf]
  %v2917 = vld [vmem:[%s2901 + $0x3c] sm:$0xf]
  %v2934 = vunpack.c.l.b16 %v2902
  %v2935 = vunpack.c.l.b16 %v2903
  %v2936 = vunpack.c.l.b16 %v2904
  %v2937 = vunpack.c.l.b16 %v2905
  %v2938 = vunpack.c.l.b16 %v2906
  %v2939 = vunpack.c.l.b16 %v2907
  %v2940 = vunpack.c.l.b16 %v2908
  %v2941 = vunpack.c.l.b16 %v2909
  %v2942 = vunpack.c.l.b16 %v2910
  %v2943 = vunpack.c.l.b16 %v2911
  %v2944 = vunpack.c.l.b16 %v2912
  %v2945 = vunpack.c.l.b16 %v2913
  %v2946 = vunpack.c.l.b16 %v2914
  %v2947 = vunpack.c.l.b16 %v2915
  %v2948 = vunpack.c.l.b16 %v2916
  %v2949 = vunpack.c.l.b16 %v2917
  %v2950 = vpack.c.b16 %v2935, %v2934
  %v2951 = vpack.c.b16 %v2937, %v2936
  %v2952 = vpack.c.b16 %v2939, %v2938
  %v2953 = vpack.c.b16 %v2941, %v2940
  %v2954 = vpack.c.b16 %v2943, %v2942
  %v2955 = vpack.c.b16 %v2945, %v2944
  %v2956 = vpack.c.b16 %v2947, %v2946
  %v2957 = vpack.c.b16 %v2949, %v2948
  %2966 = vmatpush.bf16.msra.mxu0 %v2957
  %2967 = vmatpush.bf16.msra.mxu0 %v2956
  %2968 = vmatpush.bf16.msra.mxu0 %v2955
  %2969 = vmatpush.bf16.msra.mxu0 %v2954
  %2970 = vmatpush.bf16.msra.mxu0 %v2953
  %2971 = vmatpush.bf16.msra.mxu0 %v2952
  %2972 = vmatpush.bf16.msra.mxu0 %v2951
  %2973 = vmatpush.bf16.msra.mxu0 %v2950
  %2974 = vmatmul.bf16.gmra.mxu0 %v2888
  %v2975 = vpop.f32.mrf.mxu0
  %v2976 = vadd.f32 0.0, %v2975
  %v2977 = vpop.f32.mrf.mxu0
  %v2978 = vadd.f32 0.0, %v2977
  %2979 = vmatmul.bf16.gmra.mxu0 %v2889
  %v2980 = vpop.f32.mrf.mxu0
  %v2981 = vadd.f32 0.0, %v2980
  %v2982 = vpop.f32.mrf.mxu0
  %v2983 = vadd.f32 0.0, %v2982
  %2984 = vmatmul.bf16.gmra.mxu0 %v2890
  %v2985 = vpop.f32.mrf.mxu0
  %v2986 = vadd.f32 0.0, %v2985
  %v2987 = vpop.f32.mrf.mxu0
  %v2988 = vadd.f32 0.0, %v2987
  %2989 = vmatmul.bf16.gmra.mxu0 %v2891
  %v2990 = vpop.f32.mrf.mxu0
  %v2991 = vadd.f32 0.0, %v2990
  %v2992 = vpop.f32.mrf.mxu0
  %v2993 = vadd.f32 0.0, %v2992
  %2994 = vmatmul.bf16.gmra.mxu0 %v2892
  %v2995 = vpop.f32.mrf.mxu0
  %v2996 = vadd.f32 0.0, %v2995
  %v2997 = vpop.f32.mrf.mxu0
  %v2998 = vadd.f32 0.0, %v2997
  %2999 = vmatmul.bf16.gmra.mxu0 %v2893
  %v3000 = vpop.f32.mrf.mxu0
  %v3001 = vadd.f32 0.0, %v3000
  %v3002 = vpop.f32.mrf.mxu0
  %v3003 = vadd.f32 0.0, %v3002
  %3004 = vmatmul.bf16.gmra.mxu0 %v2894
  %v3005 = vpop.f32.mrf.mxu0
  %v3006 = vadd.f32 0.0, %v3005
  %v3007 = vpop.f32.mrf.mxu0
  %v3008 = vadd.f32 0.0, %v3007
  %3009 = vmatmul.bf16.gmra.mxu0 %v2895
  %v3010 = vpop.f32.mrf.mxu0
  %v3011 = vadd.f32 0.0, %v3010
  %v3012 = vpop.f32.mrf.mxu0
  %v3013 = vadd.f32 0.0, %v3012
  %3014 = vmatmul.bf16.gmra.mxu0 %v2896
  %v3015 = vpop.f32.mrf.mxu0
  %v3016 = vadd.f32 0.0, %v3015
  %v3017 = vpop.f32.mrf.mxu0
  %v3018 = vadd.f32 0.0, %v3017
  %3019 = vmatmul.bf16.gmra.mxu0 %v2897
  %v3020 = vpop.f32.mrf.mxu0
  %v3021 = vadd.f32 0.0, %v3020
  %v3022 = vpop.f32.mrf.mxu0
  %v3023 = vadd.f32 0.0, %v3022
  %3024 = vmatmul.bf16.gmra.mxu0 %v2898
  %v3025 = vpop.f32.mrf.mxu0
  %v3026 = vadd.f32 0.0, %v3025
  %v3027 = vpop.f32.mrf.mxu0
  %v3028 = vadd.f32 0.0, %v3027
  %3029 = vmatmul.bf16.gmra.mxu0 %v2899
  %v3030 = vpop.f32.mrf.mxu0
  %v3031 = vadd.f32 0.0, %v3030
  %v3032 = vpop.f32.mrf.mxu0
  %v3033 = vadd.f32 0.0, %v3032
  %3034 = vmatmul.bf16.gmra.mxu0 %v2900
  %v3035 = vpop.f32.mrf.mxu0
  %v3036 = vadd.f32 0.0, %v3035
  %v3037 = vpop.f32.mrf.mxu0
  %3038 = vdwg.mxu0
  %v3039 = vadd.f32 %v2838, %v2976
  %v3040 = vadd.f32 %v2839, %v2978
  %v3041 = vadd.f32 %v2840, %v2981
  %v3042 = vadd.f32 %v2841, %v2983
  %v3043 = vadd.f32 %v2842, %v2986
  %v3044 = vadd.f32 %v2843, %v2988
  %v3045 = vadd.f32 %v2844, %v2991
  %v3046 = vadd.f32 %v2845, %v2993
  %v3047 = vadd.f32 %v2846, %v2996
  %v3048 = vadd.f32 %v2847, %v2998
  %v3049 = vadd.f32 %v2848, %v3001
  %v3050 = vadd.f32 %v2849, %v3003
  %v3051 = vadd.f32 %v2850, %v3006
  %v3052 = vadd.f32 %v2851, %v3008
  %v3053 = vadd.f32 %v2852, %v3011
  %v3054 = vadd.f32 %v2853, %v3013
  %v3055 = vadd.f32 %v2854, %v3016
  %v3056 = vadd.f32 %v2855, %v3018
  %v3057 = vadd.f32 %v2856, %v3021
  %v3058 = vadd.f32 %v2857, %v3023
  %v3059 = vadd.f32 %v2858, %v3026
  %v3060 = vadd.f32 %v2859, %v3028
  %v3061 = vadd.f32 %v2860, %v3031
  %v3062 = vadd.f32 %v2861, %v3033
  %v3063 = vadd.f32 %v2862, %v3036
  %v3064 = vld [vmem:[#allocation2 + $0xc] sm:$0xff]
  %v3065 = vld [vmem:[#allocation2 + $0x14] sm:$0xff]
  %v3066 = vld [vmem:[#allocation2 + $0x1c] sm:$0xff]
  %v3067 = vld [vmem:[#allocation2 + $0x24] sm:$0xff]
  %v3068 = vld [vmem:[#allocation2 + $0x2c] sm:$0xff]
  %v3069 = vld [vmem:[#allocation2 + $0x34] sm:$0xff]
  %v3070 = vld [vmem:[#allocation2 + $0x3c] sm:$0xff]
  %v3071 = vld [vmem:[#allocation2 + $0x44] sm:$0xff]
  %v3072 = vld [vmem:[#allocation2 + $0x4c] sm:$0xff]
  %v3073 = vld [vmem:[#allocation2 + $0x54] sm:$0xff]
  %v3074 = vld [vmem:[#allocation2 + $0x5c] sm:$0xff]
  %v3075 = vld [vmem:[#allocation2 + $0x64] sm:$0xff]
  %v3076 = vld [vmem:[#allocation2 + $0x6c] sm:$0xff]
  %v3077 = vld [vmem:[#allocation2 + $0x74] sm:$0xff]
  %v3078 = vld [vmem:[#allocation2 + $0x7c] sm:$0xff]
  %v3079 = vld [vmem:[#allocation2 + $0x84] sm:$0xff]
  %v3080 = vld [vmem:[#allocation2 + $0x8c] sm:$0xff]
  %v3081 = vld [vmem:[#allocation2 + $0x94] sm:$0xff]
  %v3082 = vld [vmem:[#allocation2 + $0x9c] sm:$0xff]
  %v3083 = vld [vmem:[#allocation2 + $0xa4] sm:$0xff]
  %v3084 = vld [vmem:[#allocation2 + $0xac] sm:$0xff]
  %v3085 = vld [vmem:[#allocation2 + $0xb4] sm:$0xff]
  %v3086 = vld [vmem:[#allocation2 + $0xbc] sm:$0xff]
  %v3087 = vld [vmem:[#allocation2 + $0xc4] sm:$0xff]
  %v3088 = vld [vmem:[#allocation2 + $0xcc] sm:$0xff]
  %v3089 = vpack.c.bf16 %v3065, %v3064
  %v3090 = vpack.c.bf16 %v3067, %v3066
  %v3091 = vpack.c.bf16 %v3069, %v3068
  %v3092 = vpack.c.bf16 %v3071, %v3070
  %v3093 = vpack.c.bf16 %v3073, %v3072
  %v3094 = vpack.c.bf16 %v3075, %v3074
  %v3095 = vpack.c.bf16 %v3077, %v3076
  %v3096 = vpack.c.bf16 %v3079, %v3078
  %v3097 = vpack.c.bf16 %v3081, %v3080
  %v3098 = vpack.c.bf16 %v3083, %v3082
  %v3099 = vpack.c.bf16 %v3085, %v3084
  %v3100 = vpack.c.bf16 %v3087, %v3086
  %v3101 = vpack.c.bf16 %v3088, %v3088
  %s3102 = scalar_lea.vmem %s4, 320
  %v3103 = vld [vmem:[%s3102] sm:$0xf]
  %v3104 = vld [vmem:[%s3102 + $0x4] sm:$0xf]
  %v3105 = vld [vmem:[%s3102 + $0x8] sm:$0xf]
  %v3106 = vld [vmem:[%s3102 + $0xc] sm:$0xf]
  %v3107 = vld [vmem:[%s3102 + $0x10] sm:$0xf]
  %v3108 = vld [vmem:[%s3102 + $0x14] sm:$0xf]
  %v3109 = vld [vmem:[%s3102 + $0x18] sm:$0xf]
  %v3110 = vld [vmem:[%s3102 + $0x1c] sm:$0xf]
  %v3111 = vld [vmem:[%s3102 + $0x20] sm:$0xf]
  %v3112 = vld [vmem:[%s3102 + $0x24] sm:$0xf]
  %v3113 = vld [vmem:[%s3102 + $0x28] sm:$0xf]
  %v3114 = vld [vmem:[%s3102 + $0x2c] sm:$0xf]
  %v3115 = vld [vmem:[%s3102 + $0x30] sm:$0xf]
  %v3116 = vld [vmem:[%s3102 + $0x34] sm:$0xf]
  %v3117 = vld [vmem:[%s3102 + $0x38] sm:$0xf]
  %v3118 = vld [vmem:[%s3102 + $0x3c] sm:$0xf]
  %v3135 = vunpack.c.l.b16 %v3103
  %v3136 = vunpack.c.l.b16 %v3104
  %v3137 = vunpack.c.l.b16 %v3105
  %v3138 = vunpack.c.l.b16 %v3106
  %v3139 = vunpack.c.l.b16 %v3107
  %v3140 = vunpack.c.l.b16 %v3108
  %v3141 = vunpack.c.l.b16 %v3109
  %v3142 = vunpack.c.l.b16 %v3110
  %v3143 = vunpack.c.l.b16 %v3111
  %v3144 = vunpack.c.l.b16 %v3112
  %v3145 = vunpack.c.l.b16 %v3113
  %v3146 = vunpack.c.l.b16 %v3114
  %v3147 = vunpack.c.l.b16 %v3115
  %v3148 = vunpack.c.l.b16 %v3116
  %v3149 = vunpack.c.l.b16 %v3117
  %v3150 = vunpack.c.l.b16 %v3118
  %v3151 = vpack.c.b16 %v3136, %v3135
  %v3152 = vpack.c.b16 %v3138, %v3137
  %v3153 = vpack.c.b16 %v3140, %v3139
  %v3154 = vpack.c.b16 %v3142, %v3141
  %v3155 = vpack.c.b16 %v3144, %v3143
  %v3156 = vpack.c.b16 %v3146, %v3145
  %v3157 = vpack.c.b16 %v3148, %v3147
  %v3158 = vpack.c.b16 %v3150, %v3149
  %3167 = vmatpush.bf16.msra.mxu0 %v3158
  %3168 = vmatpush.bf16.msra.mxu0 %v3157
  %3169 = vmatpush.bf16.msra.mxu0 %v3156
  %3170 = vmatpush.bf16.msra.mxu0 %v3155
  %3171 = vmatpush.bf16.msra.mxu0 %v3154
  %3172 = vmatpush.bf16.msra.mxu0 %v3153
  %3173 = vmatpush.bf16.msra.mxu0 %v3152
  %3174 = vmatpush.bf16.msra.mxu0 %v3151
  %3175 = vmatmul.bf16.gmra.mxu0 %v3089
  %v3176 = vpop.f32.mrf.mxu0
  %v3177 = vadd.f32 0.0, %v3176
  %v3178 = vpop.f32.mrf.mxu0
  %v3179 = vadd.f32 0.0, %v3178
  %3180 = vmatmul.bf16.gmra.mxu0 %v3090
  %v3181 = vpop.f32.mrf.mxu0
  %v3182 = vadd.f32 0.0, %v3181
  %v3183 = vpop.f32.mrf.mxu0
  %v3184 = vadd.f32 0.0, %v3183
  %3185 = vmatmul.bf16.gmra.mxu0 %v3091
  %v3186 = vpop.f32.mrf.mxu0
  %v3187 = vadd.f32 0.0, %v3186
  %v3188 = vpop.f32.mrf.mxu0
  %v3189 = vadd.f32 0.0, %v3188
  %3190 = vmatmul.bf16.gmra.mxu0 %v3092
  %v3191 = vpop.f32.mrf.mxu0
  %v3192 = vadd.f32 0.0, %v3191
  %v3193 = vpop.f32.mrf.mxu0
  %v3194 = vadd.f32 0.0, %v3193
  %3195 = vmatmul.bf16.gmra.mxu0 %v3093
  %v3196 = vpop.f32.mrf.mxu0
  %v3197 = vadd.f32 0.0, %v3196
  %v3198 = vpop.f32.mrf.mxu0
  %v3199 = vadd.f32 0.0, %v3198
  %3200 = vmatmul.bf16.gmra.mxu0 %v3094
  %v3201 = vpop.f32.mrf.mxu0
  %v3202 = vadd.f32 0.0, %v3201
  %v3203 = vpop.f32.mrf.mxu0
  %v3204 = vadd.f32 0.0, %v3203
  %3205 = vmatmul.bf16.gmra.mxu0 %v3095
  %v3206 = vpop.f32.mrf.mxu0
  %v3207 = vadd.f32 0.0, %v3206
  %v3208 = vpop.f32.mrf.mxu0
  %v3209 = vadd.f32 0.0, %v3208
  %3210 = vmatmul.bf16.gmra.mxu0 %v3096
  %v3211 = vpop.f32.mrf.mxu0
  %v3212 = vadd.f32 0.0, %v3211
  %v3213 = vpop.f32.mrf.mxu0
  %v3214 = vadd.f32 0.0, %v3213
  %3215 = vmatmul.bf16.gmra.mxu0 %v3097
  %v3216 = vpop.f32.mrf.mxu0
  %v3217 = vadd.f32 0.0, %v3216
  %v3218 = vpop.f32.mrf.mxu0
  %v3219 = vadd.f32 0.0, %v3218
  %3220 = vmatmul.bf16.gmra.mxu0 %v3098
  %v3221 = vpop.f32.mrf.mxu0
  %v3222 = vadd.f32 0.0, %v3221
  %v3223 = vpop.f32.mrf.mxu0
  %v3224 = vadd.f32 0.0, %v3223
  %3225 = vmatmul.bf16.gmra.mxu0 %v3099
  %v3226 = vpop.f32.mrf.mxu0
  %v3227 = vadd.f32 0.0, %v3226
  %v3228 = vpop.f32.mrf.mxu0
  %v3229 = vadd.f32 0.0, %v3228
  %3230 = vmatmul.bf16.gmra.mxu0 %v3100
  %v3231 = vpop.f32.mrf.mxu0
  %v3232 = vadd.f32 0.0, %v3231
  %v3233 = vpop.f32.mrf.mxu0
  %v3234 = vadd.f32 0.0, %v3233
  %3235 = vmatmul.bf16.gmra.mxu0 %v3101
  %v3236 = vpop.f32.mrf.mxu0
  %v3237 = vadd.f32 0.0, %v3236
  %v3238 = vpop.f32.mrf.mxu0
  %3239 = vdwg.mxu0
  %v3240 = vadd.f32 %v3039, %v3177
  %v3241 = vadd.f32 %v3040, %v3179
  %v3242 = vadd.f32 %v3041, %v3182
  %v3243 = vadd.f32 %v3042, %v3184
  %v3244 = vadd.f32 %v3043, %v3187
  %v3245 = vadd.f32 %v3044, %v3189
  %v3246 = vadd.f32 %v3045, %v3192
  %v3247 = vadd.f32 %v3046, %v3194
  %v3248 = vadd.f32 %v3047, %v3197
  %v3249 = vadd.f32 %v3048, %v3199
  %v3250 = vadd.f32 %v3049, %v3202
  %v3251 = vadd.f32 %v3050, %v3204
  %v3252 = vadd.f32 %v3051, %v3207
  %v3253 = vadd.f32 %v3052, %v3209
  %v3254 = vadd.f32 %v3053, %v3212
  %v3255 = vadd.f32 %v3054, %v3214
  %v3256 = vadd.f32 %v3055, %v3217
  %v3257 = vadd.f32 %v3056, %v3219
  %v3258 = vadd.f32 %v3057, %v3222
  %v3259 = vadd.f32 %v3058, %v3224
  %v3260 = vadd.f32 %v3059, %v3227
  %v3261 = vadd.f32 %v3060, %v3229
  %v3262 = vadd.f32 %v3061, %v3232
  %v3263 = vadd.f32 %v3062, %v3234
  %v3264 = vadd.f32 %v3063, %v3237
  %v3265 = vld [vmem:[#allocation2 + $0x14] sm:$0xff]
  %v3266 = vld [vmem:[#allocation2 + $0x1c] sm:$0xff]
  %v3267 = vld [vmem:[#allocation2 + $0x24] sm:$0xff]
  %v3268 = vld [vmem:[#allocation2 + $0x2c] sm:$0xff]
  %v3269 = vld [vmem:[#allocation2 + $0x34] sm:$0xff]
  %v3270 = vld [vmem:[#allocation2 + $0x3c] sm:$0xff]
  %v3271 = vld [vmem:[#allocation2 + $0x44] sm:$0xff]
  %v3272 = vld [vmem:[#allocation2 + $0x4c] sm:$0xff]
  %v3273 = vld [vmem:[#allocation2 + $0x54] sm:$0xff]
  %v3274 = vld [vmem:[#allocation2 + $0x5c] sm:$0xff]
  %v3275 = vld [vmem:[#allocation2 + $0x64] sm:$0xff]
  %v3276 = vld [vmem:[#allocation2 + $0x6c] sm:$0xff]
  %v3277 = vld [vmem:[#allocation2 + $0x74] sm:$0xff]
  %v3278 = vld [vmem:[#allocation2 + $0x7c] sm:$0xff]
  %v3279 = vld [vmem:[#allocation2 + $0x84] sm:$0xff]
  %v3280 = vld [vmem:[#allocation2 + $0x8c] sm:$0xff]
  %v3281 = vld [vmem:[#allocation2 + $0x94] sm:$0xff]
  %v3282 = vld [vmem:[#allocation2 + $0x9c] sm:$0xff]
  %v3283 = vld [vmem:[#allocation2 + $0xa4] sm:$0xff]
  %v3284 = vld [vmem:[#allocation2 + $0xac] sm:$0xff]
  %v3285 = vld [vmem:[#allocation2 + $0xb4] sm:$0xff]
  %v3286 = vld [vmem:[#allocation2 + $0xbc] sm:$0xff]
  %v3287 = vld [vmem:[#allocation2 + $0xc4] sm:$0xff]
  %v3288 = vld [vmem:[#allocation2 + $0xcc] sm:$0xff]
  %v3289 = vld [vmem:[#allocation2 + $0xd4] sm:$0xff]
  %v3290 = vpack.c.bf16 %v3266, %v3265
  %v3291 = vpack.c.bf16 %v3268, %v3267
  %v3292 = vpack.c.bf16 %v3270, %v3269
  %v3293 = vpack.c.bf16 %v3272, %v3271
  %v3294 = vpack.c.bf16 %v3274, %v3273
  %v3295 = vpack.c.bf16 %v3276, %v3275
  %v3296 = vpack.c.bf16 %v3278, %v3277
  %v3297 = vpack.c.bf16 %v3280, %v3279
  %v3298 = vpack.c.bf16 %v3282, %v3281
  %v3299 = vpack.c.bf16 %v3284, %v3283
  %v3300 = vpack.c.bf16 %v3286, %v3285
  %v3301 = vpack.c.bf16 %v3288, %v3287
  %v3302 = vpack.c.bf16 %v3289, %v3289
  %s3303 = scalar_lea.vmem %s4, 384
  %v3304 = vld [vmem:[%s3303] sm:$0xf]
  %v3305 = vld [vmem:[%s3303 + $0x4] sm:$0xf]
  %v3306 = vld [vmem:[%s3303 + $0x8] sm:$0xf]
  %v3307 = vld [vmem:[%s3303 + $0xc] sm:$0xf]
  %v3308 = vld [vmem:[%s3303 + $0x10] sm:$0xf]
  %v3309 = vld [vmem:[%s3303 + $0x14] sm:$0xf]
  %v3310 = vld [vmem:[%s3303 + $0x18] sm:$0xf]
  %v3311 = vld [vmem:[%s3303 + $0x1c] sm:$0xf]
  %v3312 = vld [vmem:[%s3303 + $0x20] sm:$0xf]
  %v3313 = vld [vmem:[%s3303 + $0x24] sm:$0xf]
  %v3314 = vld [vmem:[%s3303 + $0x28] sm:$0xf]
  %v3315 = vld [vmem:[%s3303 + $0x2c] sm:$0xf]
  %v3316 = vld [vmem:[%s3303 + $0x30] sm:$0xf]
  %v3317 = vld [vmem:[%s3303 + $0x34] sm:$0xf]
  %v3318 = vld [vmem:[%s3303 + $0x38] sm:$0xf]
  %v3319 = vld [vmem:[%s3303 + $0x3c] sm:$0xf]
  %v3336 = vunpack.c.l.b16 %v3304
  %v3337 = vunpack.c.l.b16 %v3305
  %v3338 = vunpack.c.l.b16 %v3306
  %v3339 = vunpack.c.l.b16 %v3307
  %v3340 = vunpack.c.l.b16 %v3308
  %v3341 = vunpack.c.l.b16 %v3309
  %v3342 = vunpack.c.l.b16 %v3310
  %v3343 = vunpack.c.l.b16 %v3311
  %v3344 = vunpack.c.l.b16 %v3312
  %v3345 = vunpack.c.l.b16 %v3313
  %v3346 = vunpack.c.l.b16 %v3314
  %v3347 = vunpack.c.l.b16 %v3315
  %v3348 = vunpack.c.l.b16 %v3316
  %v3349 = vunpack.c.l.b16 %v3317
  %v3350 = vunpack.c.l.b16 %v3318
  %v3351 = vunpack.c.l.b16 %v3319
  %v3352 = vpack.c.b16 %v3337, %v3336
  %v3353 = vpack.c.b16 %v3339, %v3338
  %v3354 = vpack.c.b16 %v3341, %v3340
  %v3355 = vpack.c.b16 %v3343, %v3342
  %v3356 = vpack.c.b16 %v3345, %v3344
  %v3357 = vpack.c.b16 %v3347, %v3346
  %v3358 = vpack.c.b16 %v3349, %v3348
  %v3359 = vpack.c.b16 %v3351, %v3350
  %3368 = vmatpush.bf16.msra.mxu0 %v3359
  %3369 = vmatpush.bf16.msra.mxu0 %v3358
  %3370 = vmatpush.bf16.msra.mxu0 %v3357
  %3371 = vmatpush.bf16.msra.mxu0 %v3356
  %3372 = vmatpush.bf16.msra.mxu0 %v3355
  %3373 = vmatpush.bf16.msra.mxu0 %v3354
  %3374 = vmatpush.bf16.msra.mxu0 %v3353
  %3375 = vmatpush.bf16.msra.mxu0 %v3352
  %3376 = vmatmul.bf16.gmra.mxu0 %v3290
  %v3377 = vpop.f32.mrf.mxu0
  %v3378 = vadd.f32 0.0, %v3377
  %v3379 = vpop.f32.mrf.mxu0
  %v3380 = vadd.f32 0.0, %v3379
  %3381 = vmatmul.bf16.gmra.mxu0 %v3291
  %v3382 = vpop.f32.mrf.mxu0
  %v3383 = vadd.f32 0.0, %v3382
  %v3384 = vpop.f32.mrf.mxu0
  %v3385 = vadd.f32 0.0, %v3384
  %3386 = vmatmul.bf16.gmra.mxu0 %v3292
  %v3387 = vpop.f32.mrf.mxu0
  %v3388 = vadd.f32 0.0, %v3387
  %v3389 = vpop.f32.mrf.mxu0
  %v3390 = vadd.f32 0.0, %v3389
  %3391 = vmatmul.bf16.gmra.mxu0 %v3293
  %v3392 = vpop.f32.mrf.mxu0
  %v3393 = vadd.f32 0.0, %v3392
  %v3394 = vpop.f32.mrf.mxu0
  %v3395 = vadd.f32 0.0, %v3394
  %3396 = vmatmul.bf16.gmra.mxu0 %v3294
  %v3397 = vpop.f32.mrf.mxu0
  %v3398 = vadd.f32 0.0, %v3397
  %v3399 = vpop.f32.mrf.mxu0
  %v3400 = vadd.f32 0.0, %v3399
  %3401 = vmatmul.bf16.gmra.mxu0 %v3295
  %v3402 = vpop.f32.mrf.mxu0
  %v3403 = vadd.f32 0.0, %v3402
  %v3404 = vpop.f32.mrf.mxu0
  %v3405 = vadd.f32 0.0, %v3404
  %3406 = vmatmul.bf16.gmra.mxu0 %v3296
  %v3407 = vpop.f32.mrf.mxu0
  %v3408 = vadd.f32 0.0, %v3407
  %v3409 = vpop.f32.mrf.mxu0
  %v3410 = vadd.f32 0.0, %v3409
  %3411 = vmatmul.bf16.gmra.mxu0 %v3297
  %v3412 = vpop.f32.mrf.mxu0
  %v3413 = vadd.f32 0.0, %v3412
  %v3414 = vpop.f32.mrf.mxu0
  %v3415 = vadd.f32 0.0, %v3414
  %3416 = vmatmul.bf16.gmra.mxu0 %v3298
  %v3417 = vpop.f32.mrf.mxu0
  %v3418 = vadd.f32 0.0, %v3417
  %v3419 = vpop.f32.mrf.mxu0
  %v3420 = vadd.f32 0.0, %v3419
  %3421 = vmatmul.bf16.gmra.mxu0 %v3299
  %v3422 = vpop.f32.mrf.mxu0
  %v3423 = vadd.f32 0.0, %v3422
  %v3424 = vpop.f32.mrf.mxu0
  %v3425 = vadd.f32 0.0, %v3424
  %3426 = vmatmul.bf16.gmra.mxu0 %v3300
  %v3427 = vpop.f32.mrf.mxu0
  %v3428 = vadd.f32 0.0, %v3427
  %v3429 = vpop.f32.mrf.mxu0
  %v3430 = vadd.f32 0.0, %v3429
  %3431 = vmatmul.bf16.gmra.mxu0 %v3301
  %v3432 = vpop.f32.mrf.mxu0
  %v3433 = vadd.f32 0.0, %v3432
  %v3434 = vpop.f32.mrf.mxu0
  %v3435 = vadd.f32 0.0, %v3434
  %3436 = vmatmul.bf16.gmra.mxu0 %v3302
  %v3437 = vpop.f32.mrf.mxu0
  %v3438 = vadd.f32 0.0, %v3437
  %v3439 = vpop.f32.mrf.mxu0
  %3440 = vdwg.mxu0
  %v3441 = vadd.f32 %v3240, %v3378
  %v3442 = vadd.f32 %v3241, %v3380
  %v3443 = vadd.f32 %v3242, %v3383
  %v3444 = vadd.f32 %v3243, %v3385
  %v3445 = vadd.f32 %v3244, %v3388
  %v3446 = vadd.f32 %v3245, %v3390
  %v3447 = vadd.f32 %v3246, %v3393
  %v3448 = vadd.f32 %v3247, %v3395
  %v3449 = vadd.f32 %v3248, %v3398
  %v3450 = vadd.f32 %v3249, %v3400
  %v3451 = vadd.f32 %v3250, %v3403
  %v3452 = vadd.f32 %v3251, %v3405
  %v3453 = vadd.f32 %v3252, %v3408
  %v3454 = vadd.f32 %v3253, %v3410
  %v3455 = vadd.f32 %v3254, %v3413
  %v3456 = vadd.f32 %v3255, %v3415
  %v3457 = vadd.f32 %v3256, %v3418
  %v3458 = vadd.f32 %v3257, %v3420
  %v3459 = vadd.f32 %v3258, %v3423
  %v3460 = vadd.f32 %v3259, %v3425
  %v3461 = vadd.f32 %v3260, %v3428
  %v3462 = vadd.f32 %v3261, %v3430
  %v3463 = vadd.f32 %v3262, %v3433
  %v3464 = vadd.f32 %v3263, %v3435
  %v3465 = vadd.f32 %v3264, %v3438
  %v3466 = vld [vmem:[#allocation2 + $0x15] sm:$0xff]
  %v3467 = vld [vmem:[#allocation2 + $0x1d] sm:$0xff]
  %v3468 = vld [vmem:[#allocation2 + $0x25] sm:$0xff]
  %v3469 = vld [vmem:[#allocation2 + $0x2d] sm:$0xff]
  %v3470 = vld [vmem:[#allocation2 + $0x35] sm:$0xff]
  %v3471 = vld [vmem:[#allocation2 + $0x3d] sm:$0xff]
  %v3472 = vld [vmem:[#allocation2 + $0x45] sm:$0xff]
  %v3473 = vld [vmem:[#allocation2 + $0x4d] sm:$0xff]
  %v3474 = vld [vmem:[#allocation2 + $0x55] sm:$0xff]
  %v3475 = vld [vmem:[#allocation2 + $0x5d] sm:$0xff]
  %v3476 = vld [vmem:[#allocation2 + $0x65] sm:$0xff]
  %v3477 = vld [vmem:[#allocation2 + $0x6d] sm:$0xff]
  %v3478 = vld [vmem:[#allocation2 + $0x75] sm:$0xff]
  %v3479 = vld [vmem:[#allocation2 + $0x7d] sm:$0xff]
  %v3480 = vld [vmem:[#allocation2 + $0x85] sm:$0xff]
  %v3481 = vld [vmem:[#allocation2 + $0x8d] sm:$0xff]
  %v3482 = vld [vmem:[#allocation2 + $0x95] sm:$0xff]
  %v3483 = vld [vmem:[#allocation2 + $0x9d] sm:$0xff]
  %v3484 = vld [vmem:[#allocation2 + $0xa5] sm:$0xff]
  %v3485 = vld [vmem:[#allocation2 + $0xad] sm:$0xff]
  %v3486 = vld [vmem:[#allocation2 + $0xb5] sm:$0xff]
  %v3487 = vld [vmem:[#allocation2 + $0xbd] sm:$0xff]
  %v3488 = vld [vmem:[#allocation2 + $0xc5] sm:$0xff]
  %v3489 = vld [vmem:[#allocation2 + $0xcd] sm:$0xff]
  %v3490 = vld [vmem:[#allocation2 + $0xd5] sm:$0xff]
  %v3491 = vpack.c.bf16 %v3467, %v3466
  %v3492 = vpack.c.bf16 %v3469, %v3468
  %v3493 = vpack.c.bf16 %v3471, %v3470
  %v3494 = vpack.c.bf16 %v3473, %v3472
  %v3495 = vpack.c.bf16 %v3475, %v3474
  %v3496 = vpack.c.bf16 %v3477, %v3476
  %v3497 = vpack.c.bf16 %v3479, %v3478
  %v3498 = vpack.c.bf16 %v3481, %v3480
  %v3499 = vpack.c.bf16 %v3483, %v3482
  %v3500 = vpack.c.bf16 %v3485, %v3484
  %v3501 = vpack.c.bf16 %v3487, %v3486
  %v3502 = vpack.c.bf16 %v3489, %v3488
  %v3503 = vpack.c.bf16 %v3490, %v3490
  %s3504 = scalar_lea.vmem %s4, 448
  %v3505 = vld [vmem:[%s3504] sm:$0xf]
  %v3506 = vld [vmem:[%s3504 + $0x4] sm:$0xf]
  %v3507 = vld [vmem:[%s3504 + $0x8] sm:$0xf]
  %v3508 = vld [vmem:[%s3504 + $0xc] sm:$0xf]
  %v3509 = vld [vmem:[%s3504 + $0x10] sm:$0xf]
  %v3510 = vld [vmem:[%s3504 + $0x14] sm:$0xf]
  %v3511 = vld [vmem:[%s3504 + $0x18] sm:$0xf]
  %v3512 = vld [vmem:[%s3504 + $0x1c] sm:$0xf]
  %v3513 = vld [vmem:[%s3504 + $0x20] sm:$0xf]
  %v3514 = vld [vmem:[%s3504 + $0x24] sm:$0xf]
  %v3515 = vld [vmem:[%s3504 + $0x28] sm:$0xf]
  %v3516 = vld [vmem:[%s3504 + $0x2c] sm:$0xf]
  %v3517 = vld [vmem:[%s3504 + $0x30] sm:$0xf]
  %v3518 = vld [vmem:[%s3504 + $0x34] sm:$0xf]
  %v3519 = vld [vmem:[%s3504 + $0x38] sm:$0xf]
  %v3520 = vld [vmem:[%s3504 + $0x3c] sm:$0xf]
  %v3537 = vunpack.c.l.b16 %v3505
  %v3538 = vunpack.c.l.b16 %v3506
  %v3539 = vunpack.c.l.b16 %v3507
  %v3540 = vunpack.c.l.b16 %v3508
  %v3541 = vunpack.c.l.b16 %v3509
  %v3542 = vunpack.c.l.b16 %v3510
  %v3543 = vunpack.c.l.b16 %v3511
  %v3544 = vunpack.c.l.b16 %v3512
  %v3545 = vunpack.c.l.b16 %v3513
  %v3546 = vunpack.c.l.b16 %v3514
  %v3547 = vunpack.c.l.b16 %v3515
  %v3548 = vunpack.c.l.b16 %v3516
  %v3549 = vunpack.c.l.b16 %v3517
  %v3550 = vunpack.c.l.b16 %v3518
  %v3551 = vunpack.c.l.b16 %v3519
  %v3552 = vunpack.c.l.b16 %v3520
  %v3553 = vpack.c.b16 %v3538, %v3537
  %v3554 = vpack.c.b16 %v3540, %v3539
  %v3555 = vpack.c.b16 %v3542, %v3541
  %v3556 = vpack.c.b16 %v3544, %v3543
  %v3557 = vpack.c.b16 %v3546, %v3545
  %v3558 = vpack.c.b16 %v3548, %v3547
  %v3559 = vpack.c.b16 %v3550, %v3549
  %v3560 = vpack.c.b16 %v3552, %v3551
  %3569 = vmatpush.bf16.msra.mxu0 %v3560
  %3570 = vmatpush.bf16.msra.mxu0 %v3559
  %3571 = vmatpush.bf16.msra.mxu0 %v3558
  %3572 = vmatpush.bf16.msra.mxu0 %v3557
  %3573 = vmatpush.bf16.msra.mxu0 %v3556
  %3574 = vmatpush.bf16.msra.mxu0 %v3555
  %3575 = vmatpush.bf16.msra.mxu0 %v3554
  %3576 = vmatpush.bf16.msra.mxu0 %v3553
  %3577 = vmatmul.bf16.gmra.mxu0 %v3491
  %v3578 = vpop.f32.mrf.mxu0
  %v3579 = vadd.f32 0.0, %v3578
  %v3580 = vpop.f32.mrf.mxu0
  %v3581 = vadd.f32 0.0, %v3580
  %3582 = vmatmul.bf16.gmra.mxu0 %v3492
  %v3583 = vpop.f32.mrf.mxu0
  %v3584 = vadd.f32 0.0, %v3583
  %v3585 = vpop.f32.mrf.mxu0
  %v3586 = vadd.f32 0.0, %v3585
  %3587 = vmatmul.bf16.gmra.mxu0 %v3493
  %v3588 = vpop.f32.mrf.mxu0
  %v3589 = vadd.f32 0.0, %v3588
  %v3590 = vpop.f32.mrf.mxu0
  %v3591 = vadd.f32 0.0, %v3590
  %3592 = vmatmul.bf16.gmra.mxu0 %v3494
  %v3593 = vpop.f32.mrf.mxu0
  %v3594 = vadd.f32 0.0, %v3593
  %v3595 = vpop.f32.mrf.mxu0
  %v3596 = vadd.f32 0.0, %v3595
  %3597 = vmatmul.bf16.gmra.mxu0 %v3495
  %v3598 = vpop.f32.mrf.mxu0
  %v3599 = vadd.f32 0.0, %v3598
  %v3600 = vpop.f32.mrf.mxu0
  %v3601 = vadd.f32 0.0, %v3600
  %3602 = vmatmul.bf16.gmra.mxu0 %v3496
  %v3603 = vpop.f32.mrf.mxu0
  %v3604 = vadd.f32 0.0, %v3603
  %v3605 = vpop.f32.mrf.mxu0
  %v3606 = vadd.f32 0.0, %v3605
  %3607 = vmatmul.bf16.gmra.mxu0 %v3497
  %v3608 = vpop.f32.mrf.mxu0
  %v3609 = vadd.f32 0.0, %v3608
  %v3610 = vpop.f32.mrf.mxu0
  %v3611 = vadd.f32 0.0, %v3610
  %3612 = vmatmul.bf16.gmra.mxu0 %v3498
  %v3613 = vpop.f32.mrf.mxu0
  %v3614 = vadd.f32 0.0, %v3613
  %v3615 = vpop.f32.mrf.mxu0
  %v3616 = vadd.f32 0.0, %v3615
  %3617 = vmatmul.bf16.gmra.mxu0 %v3499
  %v3618 = vpop.f32.mrf.mxu0
  %v3619 = vadd.f32 0.0, %v3618
  %v3620 = vpop.f32.mrf.mxu0
  %v3621 = vadd.f32 0.0, %v3620
  %3622 = vmatmul.bf16.gmra.mxu0 %v3500
  %v3623 = vpop.f32.mrf.mxu0
  %v3624 = vadd.f32 0.0, %v3623
  %v3625 = vpop.f32.mrf.mxu0
  %v3626 = vadd.f32 0.0, %v3625
  %3627 = vmatmul.bf16.gmra.mxu0 %v3501
  %v3628 = vpop.f32.mrf.mxu0
  %v3629 = vadd.f32 0.0, %v3628
  %v3630 = vpop.f32.mrf.mxu0
  %v3631 = vadd.f32 0.0, %v3630
  %3632 = vmatmul.bf16.gmra.mxu0 %v3502
  %v3633 = vpop.f32.mrf.mxu0
  %v3634 = vadd.f32 0.0, %v3633
  %v3635 = vpop.f32.mrf.mxu0
  %v3636 = vadd.f32 0.0, %v3635
  %3637 = vmatmul.bf16.gmra.mxu0 %v3503
  %v3638 = vpop.f32.mrf.mxu0
  %v3639 = vadd.f32 0.0, %v3638
  %v3640 = vpop.f32.mrf.mxu0
  %3641 = vdwg.mxu0
  %v3642 = vadd.f32 %v3441, %v3579
  %v3643 = vadd.f32 %v3442, %v3581
  %v3644 = vadd.f32 %v3443, %v3584
  %v3645 = vadd.f32 %v3444, %v3586
  %v3646 = vadd.f32 %v3445, %v3589
  %v3647 = vadd.f32 %v3446, %v3591
  %v3648 = vadd.f32 %v3447, %v3594
  %v3649 = vadd.f32 %v3448, %v3596
  %v3650 = vadd.f32 %v3449, %v3599
  %v3651 = vadd.f32 %v3450, %v3601
  %v3652 = vadd.f32 %v3451, %v3604
  %v3653 = vadd.f32 %v3452, %v3606
  %v3654 = vadd.f32 %v3453, %v3609
  %v3655 = vadd.f32 %v3454, %v3611
  %v3656 = vadd.f32 %v3455, %v3614
  %v3657 = vadd.f32 %v3456, %v3616
  %v3658 = vadd.f32 %v3457, %v3619
  %v3659 = vadd.f32 %v3458, %v3621
  %v3660 = vadd.f32 %v3459, %v3624
  %v3661 = vadd.f32 %v3460, %v3626
  %v3662 = vadd.f32 %v3461, %v3629
  %v3663 = vadd.f32 %v3462, %v3631
  %v3664 = vadd.f32 %v3463, %v3634
  %v3665 = vadd.f32 %v3464, %v3636
  %v3666 = vadd.f32 %v3465, %v3639
  %v3667 = vld [vmem:[#allocation2 + $0x16] sm:$0xff]
  %v3668 = vld [vmem:[#allocation2 + $0x1e] sm:$0xff]
  %v3669 = vld [vmem:[#allocation2 + $0x26] sm:$0xff]
  %v3670 = vld [vmem:[#allocation2 + $0x2e] sm:$0xff]
  %v3671 = vld [vmem:[#allocation2 + $0x36] sm:$0xff]
  %v3672 = vld [vmem:[#allocation2 + $0x3e] sm:$0xff]
  %v3673 = vld [vmem:[#allocation2 + $0x46] sm:$0xff]
  %v3674 = vld [vmem:[#allocation2 + $0x4e] sm:$0xff]
  %v3675 = vld [vmem:[#allocation2 + $0x56] sm:$0xff]
  %v3676 = vld [vmem:[#allocation2 + $0x5e] sm:$0xff]
  %v3677 = vld [vmem:[#allocation2 + $0x66] sm:$0xff]
  %v3678 = vld [vmem:[#allocation2 + $0x6e] sm:$0xff]
  %v3679 = vld [vmem:[#allocation2 + $0x76] sm:$0xff]
  %v3680 = vld [vmem:[#allocation2 + $0x7e] sm:$0xff]
  %v3681 = vld [vmem:[#allocation2 + $0x86] sm:$0xff]
  %v3682 = vld [vmem:[#allocation2 + $0x8e] sm:$0xff]
  %v3683 = vld [vmem:[#allocation2 + $0x96] sm:$0xff]
  %v3684 = vld [vmem:[#allocation2 + $0x9e] sm:$0xff]
  %v3685 = vld [vmem:[#allocation2 + $0xa6] sm:$0xff]
  %v3686 = vld [vmem:[#allocation2 + $0xae] sm:$0xff]
  %v3687 = vld [vmem:[#allocation2 + $0xb6] sm:$0xff]
  %v3688 = vld [vmem:[#allocation2 + $0xbe] sm:$0xff]
  %v3689 = vld [vmem:[#allocation2 + $0xc6] sm:$0xff]
  %v3690 = vld [vmem:[#allocation2 + $0xce] sm:$0xff]
  %v3691 = vld [vmem:[#allocation2 + $0xd6] sm:$0xff]
  %v3692 = vpack.c.bf16 %v3668, %v3667
  %v3693 = vpack.c.bf16 %v3670, %v3669
  %v3694 = vpack.c.bf16 %v3672, %v3671
  %v3695 = vpack.c.bf16 %v3674, %v3673
  %v3696 = vpack.c.bf16 %v3676, %v3675
  %v3697 = vpack.c.bf16 %v3678, %v3677
  %v3698 = vpack.c.bf16 %v3680, %v3679
  %v3699 = vpack.c.bf16 %v3682, %v3681
  %v3700 = vpack.c.bf16 %v3684, %v3683
  %v3701 = vpack.c.bf16 %v3686, %v3685
  %v3702 = vpack.c.bf16 %v3688, %v3687
  %v3703 = vpack.c.bf16 %v3690, %v3689
  %v3704 = vpack.c.bf16 %v3691, %v3691
  %s3705 = scalar_lea.vmem %s4, 512
  %v3706 = vld [vmem:[%s3705] sm:$0xf]
  %v3707 = vld [vmem:[%s3705 + $0x4] sm:$0xf]
  %v3708 = vld [vmem:[%s3705 + $0x8] sm:$0xf]
  %v3709 = vld [vmem:[%s3705 + $0xc] sm:$0xf]
  %v3710 = vld [vmem:[%s3705 + $0x10] sm:$0xf]
  %v3711 = vld [vmem:[%s3705 + $0x14] sm:$0xf]
  %v3712 = vld [vmem:[%s3705 + $0x18] sm:$0xf]
  %v3713 = vld [vmem:[%s3705 + $0x1c] sm:$0xf]
  %v3714 = vld [vmem:[%s3705 + $0x20] sm:$0xf]
  %v3715 = vld [vmem:[%s3705 + $0x24] sm:$0xf]
  %v3716 = vld [vmem:[%s3705 + $0x28] sm:$0xf]
  %v3717 = vld [vmem:[%s3705 + $0x2c] sm:$0xf]
  %v3718 = vld [vmem:[%s3705 + $0x30] sm:$0xf]
  %v3719 = vld [vmem:[%s3705 + $0x34] sm:$0xf]
  %v3720 = vld [vmem:[%s3705 + $0x38] sm:$0xf]
  %v3721 = vld [vmem:[%s3705 + $0x3c] sm:$0xf]
  %v3738 = vunpack.c.l.b16 %v3706
  %v3739 = vunpack.c.l.b16 %v3707
  %v3740 = vunpack.c.l.b16 %v3708
  %v3741 = vunpack.c.l.b16 %v3709
  %v3742 = vunpack.c.l.b16 %v3710
  %v3743 = vunpack.c.l.b16 %v3711
  %v3744 = vunpack.c.l.b16 %v3712
  %v3745 = vunpack.c.l.b16 %v3713
  %v3746 = vunpack.c.l.b16 %v3714
  %v3747 = vunpack.c.l.b16 %v3715
  %v3748 = vunpack.c.l.b16 %v3716
  %v3749 = vunpack.c.l.b16 %v3717
  %v3750 = vunpack.c.l.b16 %v3718
  %v3751 = vunpack.c.l.b16 %v3719
  %v3752 = vunpack.c.l.b16 %v3720
  %v3753 = vunpack.c.l.b16 %v3721
  %v3754 = vpack.c.b16 %v3739, %v3738
  %v3755 = vpack.c.b16 %v3741, %v3740
  %v3756 = vpack.c.b16 %v3743, %v3742
  %v3757 = vpack.c.b16 %v3745, %v3744
  %v3758 = vpack.c.b16 %v3747, %v3746
  %v3759 = vpack.c.b16 %v3749, %v3748
  %v3760 = vpack.c.b16 %v3751, %v3750
  %v3761 = vpack.c.b16 %v3753, %v3752
  %3770 = vmatpush.bf16.msra.mxu0 %v3761
  %3771 = vmatpush.bf16.msra.mxu0 %v3760
  %3772 = vmatpush.bf16.msra.mxu0 %v3759
  %3773 = vmatpush.bf16.msra.mxu0 %v3758
  %3774 = vmatpush.bf16.msra.mxu0 %v3757
  %3775 = vmatpush.bf16.msra.mxu0 %v3756
  %3776 = vmatpush.bf16.msra.mxu0 %v3755
  %3777 = vmatpush.bf16.msra.mxu0 %v3754
  %3778 = vmatmul.bf16.gmra.mxu0 %v3692
  %v3779 = vpop.f32.mrf.mxu0
  %v3780 = vadd.f32 0.0, %v3779
  %v3781 = vpop.f32.mrf.mxu0
  %v3782 = vadd.f32 0.0, %v3781
  %3783 = vmatmul.bf16.gmra.mxu0 %v3693
  %v3784 = vpop.f32.mrf.mxu0
  %v3785 = vadd.f32 0.0, %v3784
  %v3786 = vpop.f32.mrf.mxu0
  %v3787 = vadd.f32 0.0, %v3786
  %3788 = vmatmul.bf16.gmra.mxu0 %v3694
  %v3789 = vpop.f32.mrf.mxu0
  %v3790 = vadd.f32 0.0, %v3789
  %v3791 = vpop.f32.mrf.mxu0
  %v3792 = vadd.f32 0.0, %v3791
  %3793 = vmatmul.bf16.gmra.mxu0 %v3695
  %v3794 = vpop.f32.mrf.mxu0
  %v3795 = vadd.f32 0.0, %v3794
  %v3796 = vpop.f32.mrf.mxu0
  %v3797 = vadd.f32 0.0, %v3796
  %3798 = vmatmul.bf16.gmra.mxu0 %v3696
  %v3799 = vpop.f32.mrf.mxu0
  %v3800 = vadd.f32 0.0, %v3799
  %v3801 = vpop.f32.mrf.mxu0
  %v3802 = vadd.f32 0.0, %v3801
  %3803 = vmatmul.bf16.gmra.mxu0 %v3697
  %v3804 = vpop.f32.mrf.mxu0
  %v3805 = vadd.f32 0.0, %v3804
  %v3806 = vpop.f32.mrf.mxu0
  %v3807 = vadd.f32 0.0, %v3806
  %3808 = vmatmul.bf16.gmra.mxu0 %v3698
  %v3809 = vpop.f32.mrf.mxu0
  %v3810 = vadd.f32 0.0, %v3809
  %v3811 = vpop.f32.mrf.mxu0
  %v3812 = vadd.f32 0.0, %v3811
  %3813 = vmatmul.bf16.gmra.mxu0 %v3699
  %v3814 = vpop.f32.mrf.mxu0
  %v3815 = vadd.f32 0.0, %v3814
  %v3816 = vpop.f32.mrf.mxu0
  %v3817 = vadd.f32 0.0, %v3816
  %3818 = vmatmul.bf16.gmra.mxu0 %v3700
  %v3819 = vpop.f32.mrf.mxu0
  %v3820 = vadd.f32 0.0, %v3819
  %v3821 = vpop.f32.mrf.mxu0
  %v3822 = vadd.f32 0.0, %v3821
  %3823 = vmatmul.bf16.gmra.mxu0 %v3701
  %v3824 = vpop.f32.mrf.mxu0
  %v3825 = vadd.f32 0.0, %v3824
  %v3826 = vpop.f32.mrf.mxu0
  %v3827 = vadd.f32 0.0, %v3826
  %3828 = vmatmul.bf16.gmra.mxu0 %v3702
  %v3829 = vpop.f32.mrf.mxu0
  %v3830 = vadd.f32 0.0, %v3829
  %v3831 = vpop.f32.mrf.mxu0
  %v3832 = vadd.f32 0.0, %v3831
  %3833 = vmatmul.bf16.gmra.mxu0 %v3703
  %v3834 = vpop.f32.mrf.mxu0
  %v3835 = vadd.f32 0.0, %v3834
  %v3836 = vpop.f32.mrf.mxu0
  %v3837 = vadd.f32 0.0, %v3836
  %3838 = vmatmul.bf16.gmra.mxu0 %v3704
  %v3839 = vpop.f32.mrf.mxu0
  %v3840 = vadd.f32 0.0, %v3839
  %v3841 = vpop.f32.mrf.mxu0
  %3842 = vdwg.mxu0
  %v3843 = vadd.f32 %v3642, %v3780
  %v3844 = vadd.f32 %v3643, %v3782
  %v3845 = vadd.f32 %v3644, %v3785
  %v3846 = vadd.f32 %v3645, %v3787
  %v3847 = vadd.f32 %v3646, %v3790
  %v3848 = vadd.f32 %v3647, %v3792
  %v3849 = vadd.f32 %v3648, %v3795
  %v3850 = vadd.f32 %v3649, %v3797
  %v3851 = vadd.f32 %v3650, %v3800
  %v3852 = vadd.f32 %v3651, %v3802
  %v3853 = vadd.f32 %v3652, %v3805
  %v3854 = vadd.f32 %v3653, %v3807
  %v3855 = vadd.f32 %v3654, %v3810
  %v3856 = vadd.f32 %v3655, %v3812
  %v3857 = vadd.f32 %v3656, %v3815
  %v3858 = vadd.f32 %v3657, %v3817
  %v3859 = vadd.f32 %v3658, %v3820
  %v3860 = vadd.f32 %v3659, %v3822
  %v3861 = vadd.f32 %v3660, %v3825
  %v3862 = vadd.f32 %v3661, %v3827
  %v3863 = vadd.f32 %v3662, %v3830
  %v3864 = vadd.f32 %v3663, %v3832
  %v3865 = vadd.f32 %v3664, %v3835
  %v3866 = vadd.f32 %v3665, %v3837
  %v3867 = vadd.f32 %v3666, %v3840
  %v3868 = vmul.f32 %v3843, %v1629
  %v3869 = vmul.f32 %v3844, %v1634
  %v3870 = vmul.f32 %v3845, %v1639
  %v3871 = vmul.f32 %v3846, %v1644
  %v3872 = vmul.f32 %v3847, %v1649
  %v3873 = vmul.f32 %v3848, %v1654
  %v3874 = vmul.f32 %v3849, %v1659
  %v3875 = vmul.f32 %v3850, %v1664
  %v3876 = vmul.f32 %v3851, %v1669
  %v3877 = vmul.f32 %v3852, %v1674
  %v3878 = vmul.f32 %v3853, %v1679
  %v3879 = vmul.f32 %v3854, %v1684
  %v3880 = vmul.f32 %v3855, %v1689
  %v3881 = vmul.f32 %v3856, %v1694
  %v3882 = vmul.f32 %v3857, %v1699
  %v3883 = vmul.f32 %v3858, %v1704
  %v3884 = vmul.f32 %v3859, %v1709
  %v3885 = vmul.f32 %v3860, %v1714
  %v3886 = vmul.f32 %v3861, %v1719
  %v3887 = vmul.f32 %v3862, %v1724
  %v3888 = vmul.f32 %v3863, %v1729
  %v3889 = vmul.f32 %v3864, %v1734
  %v3890 = vmul.f32 %v3865, %v1739
  %v3891 = vmul.f32 %v3866, %v1744
  %v3892 = vmul.f32 %v3867, %v1749
  %v3893 = vadd.f32 %v3868, %v3869
  %v3894 = vadd.f32 %v3893, %v3870
  %v3895 = vadd.f32 %v3894, %v3871
  %v3896 = vadd.f32 %v3895, %v3872
  %v3897 = vadd.f32 %v3896, %v3873
  %v3898 = vadd.f32 %v3897, %v3874
  %v3899 = vadd.f32 %v3898, %v3875
  %v3900 = vadd.f32 %v3899, %v3876
  %v3901 = vadd.f32 %v3900, %v3877
  %v3902 = vadd.f32 %v3901, %v3878
  %v3903 = vadd.f32 %v3902, %v3879
  %v3904 = vadd.f32 %v3903, %v3880
  %v3905 = vadd.f32 %v3904, %v3881
  %v3906 = vadd.f32 %v3905, %v3882
  %v3907 = vadd.f32 %v3906, %v3883
  %v3908 = vadd.f32 %v3907, %v3884
  %v3909 = vadd.f32 %v3908, %v3885
  %v3910 = vadd.f32 %v3909, %v3886
  %v3911 = vadd.f32 %v3910, %v3887
  %v3912 = vadd.f32 %v3911, %v3888
  %v3913 = vadd.f32 %v3912, %v3889
  %v3914 = vadd.f32 %v3913, %v3890
  %v3915 = vadd.f32 %v3914, %v3891
  %v3916 = vadd.f32 %v3915, %v3892
  %v3917 = vrot.slane %v3916, 4
  %v3918 = vadd.f32 %v3916, %v3917
  %v3919 = vrot.slane %v3918, 2
  %v3920 = vadd.f32 %v3918, %v3919
  %v3921 = vrot.slane %v3920, 1
  %v3922 = vadd.f32 %v3920, %v3921
  %v3923 = vmul.f32 %v3922, 0.0078125
  %v3924 = vsub.f32 %v3843, %v3923
  %v3925 = vsub.f32 %v3844, %v3923
  %v3926 = vsub.f32 %v3845, %v3923
  %v3927 = vsub.f32 %v3846, %v3923
  %v3928 = vsub.f32 %v3847, %v3923
  %v3929 = vsub.f32 %v3848, %v3923
  %v3930 = vsub.f32 %v3849, %v3923
  %v3931 = vsub.f32 %v3850, %v3923
  %v3932 = vsub.f32 %v3851, %v3923
  %v3933 = vsub.f32 %v3852, %v3923
  %v3934 = vsub.f32 %v3853, %v3923
  %v3935 = vsub.f32 %v3854, %v3923
  %v3936 = vsub.f32 %v3855, %v3923
  %v3937 = vsub.f32 %v3856, %v3923
  %v3938 = vsub.f32 %v3857, %v3923
  %v3939 = vsub.f32 %v3858, %v3923
  %v3940 = vsub.f32 %v3859, %v3923
  %v3941 = vsub.f32 %v3860, %v3923
  %v3942 = vsub.f32 %v3861, %v3923
  %v3943 = vsub.f32 %v3862, %v3923
  %v3944 = vsub.f32 %v3863, %v3923
  %v3945 = vsub.f32 %v3864, %v3923
  %v3946 = vsub.f32 %v3865, %v3923
  %v3947 = vsub.f32 %v3866, %v3923
  %v3948 = vsub.f32 %v3867, %v3923
  %v3949 = vmul.f32 %v3924, %v3924
  %v3950 = vmul.f32 %v3925, %v3925
  %v3951 = vmul.f32 %v3926, %v3926
  %v3952 = vmul.f32 %v3927, %v3927
  %v3953 = vmul.f32 %v3928, %v3928
  %v3954 = vmul.f32 %v3929, %v3929
  %v3955 = vmul.f32 %v3930, %v3930
  %v3956 = vmul.f32 %v3931, %v3931
  %v3957 = vmul.f32 %v3932, %v3932
  %v3958 = vmul.f32 %v3933, %v3933
  %v3959 = vmul.f32 %v3934, %v3934
  %v3960 = vmul.f32 %v3935, %v3935
  %v3961 = vmul.f32 %v3936, %v3936
  %v3962 = vmul.f32 %v3937, %v3937
  %v3963 = vmul.f32 %v3938, %v3938
  %v3964 = vmul.f32 %v3939, %v3939
  %v3965 = vmul.f32 %v3940, %v3940
  %v3966 = vmul.f32 %v3941, %v3941
  %v3967 = vmul.f32 %v3942, %v3942
  %v3968 = vmul.f32 %v3943, %v3943
  %v3969 = vmul.f32 %v3944, %v3944
  %v3970 = vmul.f32 %v3945, %v3945
  %v3971 = vmul.f32 %v3946, %v3946
  %v3972 = vmul.f32 %v3947, %v3947
  %v3973 = vmul.f32 %v3948, %v3948
  %v3974 = vmul.f32 %v3949, %v1629
  %v3975 = vmul.f32 %v3950, %v1634
  %v3976 = vmul.f32 %v3951, %v1639
  %v3977 = vmul.f32 %v3952, %v1644
  %v3978 = vmul.f32 %v3953, %v1649
  %v3979 = vmul.f32 %v3954, %v1654
  %v3980 = vmul.f32 %v3955, %v1659
  %v3981 = vmul.f32 %v3956, %v1664
  %v3982 = vmul.f32 %v3957, %v1669
  %v3983 = vmul.f32 %v3958, %v1674
  %v3984 = vmul.f32 %v3959, %v1679
  %v3985 = vmul.f32 %v3960, %v1684
  %v3986 = vmul.f32 %v3961, %v1689
  %v3987 = vmul.f32 %v3962, %v1694
  %v3988 = vmul.f32 %v3963, %v1699
  %v3989 = vmul.f32 %v3964, %v1704
  %v3990 = vmul.f32 %v3965, %v1709
  %v3991 = vmul.f32 %v3966, %v1714
  %v3992 = vmul.f32 %v3967, %v1719
  %v3993 = vmul.f32 %v3968, %v1724
  %v3994 = vmul.f32 %v3969, %v1729
  %v3995 = vmul.f32 %v3970, %v1734
  %v3996 = vmul.f32 %v3971, %v1739
  %v3997 = vmul.f32 %v3972, %v1744
  %v3998 = vmul.f32 %v3973, %v1749
  %v3999 = vadd.f32 %v3974, %v3975
  %v4000 = vadd.f32 %v3999, %v3976
  %v4001 = vadd.f32 %v4000, %v3977
  %v4002 = vadd.f32 %v4001, %v3978
  %v4003 = vadd.f32 %v4002, %v3979
  %v4004 = vadd.f32 %v4003, %v3980
  %v4005 = vadd.f32 %v4004, %v3981
  %v4006 = vadd.f32 %v4005, %v3982
  %v4007 = vadd.f32 %v4006, %v3983
  %v4008 = vadd.f32 %v4007, %v3984
  %v4009 = vadd.f32 %v4008, %v3985
  %v4010 = vadd.f32 %v4009, %v3986
  %v4011 = vadd.f32 %v4010, %v3987
  %v4012 = vadd.f32 %v4011, %v3988
  %v4013 = vadd.f32 %v4012, %v3989
  %v4014 = vadd.f32 %v4013, %v3990
  %v4015 = vadd.f32 %v4014, %v3991
  %v4016 = vadd.f32 %v4015, %v3992
  %v4017 = vadd.f32 %v4016, %v3993
  %v4018 = vadd.f32 %v4017, %v3994
  %v4019 = vadd.f32 %v4018, %v3995
  %v4020 = vadd.f32 %v4019, %v3996
  %v4021 = vadd.f32 %v4020, %v3997
  %v4022 = vadd.f32 %v4021, %v3998
  %v4023 = vrot.slane %v4022, 4
  %v4024 = vadd.f32 %v4022, %v4023
  %v4025 = vrot.slane %v4024, 2
  %v4026 = vadd.f32 %v4024, %v4025
  %v4027 = vrot.slane %v4026, 1
  %v4028 = vadd.f32 %v4026, %v4027
  %v4029 = vmul.f32 %v4028, 0.0078125
  %v4030 = vadd.f32 %v4029, 1e-05
  %v4031 = vrsqrt.pop %v4030
  %v4032 = vmul.f32 %v4031, %v4030
  %v4033 = vmul.f32 %v4032, %v4031
  %v4034 = vmul.f32 0.5, %v4033
  %v4035 = vsub.f32 1.5, %v4034
  %v4036 = vmul.f32 %v4031, %v4035
  %vm4037 = vweird.f32 %v4030
  %vm4038 = vweird.f32 %v4031
  %vm4039 = vmor %vm4037, %vm4038
  %v4040 = vsel %vm4039, %v4031, %v4036
  %v4041 = vmul.f32 %v3924, %v4040
  %v4042 = vmul.f32 %v3925, %v4040
  %v4043 = vmul.f32 %v3926, %v4040
  %v4044 = vmul.f32 %v3927, %v4040
  %v4045 = vmul.f32 %v3928, %v4040
  %v4046 = vmul.f32 %v3929, %v4040
  %v4047 = vmul.f32 %v3930, %v4040
  %v4048 = vmul.f32 %v3931, %v4040
  %v4049 = vmul.f32 %v3932, %v4040
  %v4050 = vmul.f32 %v3933, %v4040
  %v4051 = vmul.f32 %v3934, %v4040
  %v4052 = vmul.f32 %v3935, %v4040
  %v4053 = vmul.f32 %v3936, %v4040
  %v4054 = vmul.f32 %v3937, %v4040
  %v4055 = vmul.f32 %v3938, %v4040
  %v4056 = vmul.f32 %v3939, %v4040
  %v4057 = vmul.f32 %v3940, %v4040
  %v4058 = vmul.f32 %v3941, %v4040
  %v4059 = vmul.f32 %v3942, %v4040
  %v4060 = vmul.f32 %v3943, %v4040
  %v4061 = vmul.f32 %v3944, %v4040
  %v4062 = vmul.f32 %v3945, %v4040
  %v4063 = vmul.f32 %v3946, %v4040
  %v4064 = vmul.f32 %v3947, %v4040
  %v4065 = vmul.f32 %v3948, %v4040
  %v4066 = vld [vmem:[%s5] sm:$0x1]
  %v4068 = vperm.slane %v4066, 0
  %v4070 = vmul.f32 %v4041, %v4068
  %v4071 = vmul.f32 %v4042, %v4068
  %v4072 = vmul.f32 %v4043, %v4068
  %v4073 = vmul.f32 %v4044, %v4068
  %v4074 = vmul.f32 %v4045, %v4068
  %v4075 = vmul.f32 %v4046, %v4068
  %v4076 = vmul.f32 %v4047, %v4068
  %v4077 = vmul.f32 %v4048, %v4068
  %v4078 = vmul.f32 %v4049, %v4068
  %v4079 = vmul.f32 %v4050, %v4068
  %v4080 = vmul.f32 %v4051, %v4068
  %v4081 = vmul.f32 %v4052, %v4068
  %v4082 = vmul.f32 %v4053, %v4068
  %v4083 = vmul.f32 %v4054, %v4068
  %v4084 = vmul.f32 %v4055, %v4068
  %v4085 = vmul.f32 %v4056, %v4068
  %v4086 = vmul.f32 %v4057, %v4068
  %v4087 = vmul.f32 %v4058, %v4068
  %v4088 = vmul.f32 %v4059, %v4068
  %v4089 = vmul.f32 %v4060, %v4068
  %v4090 = vmul.f32 %v4061, %v4068
  %v4091 = vmul.f32 %v4062, %v4068
  %v4092 = vmul.f32 %v4063, %v4068
  %v4093 = vmul.f32 %v4064, %v4068
  %v4094 = vmul.f32 %v4065, %v4068
  %v4095 = vld [vmem:[%s6] sm:$0x1]
  %v4097 = vperm.slane %v4095, 0
  %v4099 = vadd.f32 %v4070, %v4097
  %v4100 = vadd.f32 %v4071, %v4097
  %v4101 = vadd.f32 %v4072, %v4097
  %v4102 = vadd.f32 %v4073, %v4097
  %v4103 = vadd.f32 %v4074, %v4097
  %v4104 = vadd.f32 %v4075, %v4097
  %v4105 = vadd.f32 %v4076, %v4097
  %v4106 = vadd.f32 %v4077, %v4097
  %v4107 = vadd.f32 %v4078, %v4097
  %v4108 = vadd.f32 %v4079, %v4097
  %v4109 = vadd.f32 %v4080, %v4097
  %v4110 = vadd.f32 %v4081, %v4097
  %v4111 = vadd.f32 %v4082, %v4097
  %v4112 = vadd.f32 %v4083, %v4097
  %v4113 = vadd.f32 %v4084, %v4097
  %v4114 = vadd.f32 %v4085, %v4097
  %v4115 = vadd.f32 %v4086, %v4097
  %v4116 = vadd.f32 %v4087, %v4097
  %v4117 = vadd.f32 %v4088, %v4097
  %v4118 = vadd.f32 %v4089, %v4097
  %v4119 = vadd.f32 %v4090, %v4097
  %v4120 = vadd.f32 %v4091, %v4097
  %v4121 = vadd.f32 %v4092, %v4097
  %v4122 = vadd.f32 %v4093, %v4097
  %v4123 = vadd.f32 %v4094, %v4097
  %v4124 = vmax.f32 %v4099, 0.0
  %v4125 = vmax.f32 %v4100, 0.0
  %v4126 = vmax.f32 %v4101, 0.0
  %v4127 = vmax.f32 %v4102, 0.0
  %v4128 = vmax.f32 %v4103, 0.0
  %v4129 = vmax.f32 %v4104, 0.0
  %v4130 = vmax.f32 %v4105, 0.0
  %v4131 = vmax.f32 %v4106, 0.0
  %v4132 = vmax.f32 %v4107, 0.0
  %v4133 = vmax.f32 %v4108, 0.0
  %v4134 = vmax.f32 %v4109, 0.0
  %v4135 = vmax.f32 %v4110, 0.0
  %v4136 = vmax.f32 %v4111, 0.0
  %v4137 = vmax.f32 %v4112, 0.0
  %v4138 = vmax.f32 %v4113, 0.0
  %v4139 = vmax.f32 %v4114, 0.0
  %v4140 = vmax.f32 %v4115, 0.0
  %v4141 = vmax.f32 %v4116, 0.0
  %v4142 = vmax.f32 %v4117, 0.0
  %v4143 = vmax.f32 %v4118, 0.0
  %v4144 = vmax.f32 %v4119, 0.0
  %v4145 = vmax.f32 %v4120, 0.0
  %v4146 = vmax.f32 %v4121, 0.0
  %v4147 = vmax.f32 %v4122, 0.0
  %v4148 = vmax.f32 %v4123, 0.0
  %v4149 = vmul.f32 %v4124, %v1629
  %v4150 = vmul.f32 %v4125, %v1634
  %v4151 = vmul.f32 %v4126, %v1639
  %v4152 = vmul.f32 %v4127, %v1644
  %v4153 = vmul.f32 %v4128, %v1649
  %v4154 = vmul.f32 %v4129, %v1654
  %v4155 = vmul.f32 %v4130, %v1659
  %v4156 = vmul.f32 %v4131, %v1664
  %v4157 = vmul.f32 %v4132, %v1669
  %v4158 = vmul.f32 %v4133, %v1674
  %v4159 = vmul.f32 %v4134, %v1679
  %v4160 = vmul.f32 %v4135, %v1684
  %v4161 = vmul.f32 %v4136, %v1689
  %v4162 = vmul.f32 %v4137, %v1694
  %v4163 = vmul.f32 %v4138, %v1699
  %v4164 = vmul.f32 %v4139, %v1704
  %v4165 = vmul.f32 %v4140, %v1709
  %v4166 = vmul.f32 %v4141, %v1714
  %v4167 = vmul.f32 %v4142, %v1719
  %v4168 = vmul.f32 %v4143, %v1724
  %v4169 = vmul.f32 %v4144, %v1729
  %v4170 = vmul.f32 %v4145, %v1734
  %v4171 = vmul.f32 %v4146, %v1739
  %v4172 = vmul.f32 %v4147, %v1744
  %v4173 = vmul.f32 %v4148, %v1749
  %4174 = vst [vmem:[%s8] sm:$0xff] %v4149
  %4175 = vst [vmem:[%s8 + $0x8] sm:$0xff] %v4150
  %4176 = vst [vmem:[%s8 + $0x10] sm:$0xff] %v4151
  %4177 = vst [vmem:[%s8 + $0x18] sm:$0xff] %v4152
  %4178 = vst [vmem:[%s8 + $0x20] sm:$0xff] %v4153
  %4179 = vst [vmem:[%s8 + $0x28] sm:$0xff] %v4154
  %4180 = vst [vmem:[%s8 + $0x30] sm:$0xff] %v4155
  %4181 = vst [vmem:[%s8 + $0x38] sm:$0xff] %v4156
  %4182 = vst [vmem:[%s8 + $0x40] sm:$0xff] %v4157
  %4183 = vst [vmem:[%s8 + $0x48] sm:$0xff] %v4158
  %4184 = vst [vmem:[%s8 + $0x50] sm:$0xff] %v4159
  %4185 = vst [vmem:[%s8 + $0x58] sm:$0xff] %v4160
  %4186 = vst [vmem:[%s8 + $0x60] sm:$0xff] %v4161
  %4187 = vst [vmem:[%s8 + $0x68] sm:$0xff] %v4162
  %4188 = vst [vmem:[%s8 + $0x70] sm:$0xff] %v4163
  %4189 = vst [vmem:[%s8 + $0x78] sm:$0xff] %v4164
  %4190 = vst [vmem:[%s8 + $0x80] sm:$0xff] %v4165
  %4191 = vst [vmem:[%s8 + $0x88] sm:$0xff] %v4166
  %4192 = vst [vmem:[%s8 + $0x90] sm:$0xff] %v4167
  %4193 = vst [vmem:[%s8 + $0x98] sm:$0xff] %v4168
  %4194 = vst [vmem:[%s8 + $0xa0] sm:$0xff] %v4169
  %4195 = vst [vmem:[%s8 + $0xa8] sm:$0xff] %v4170
  %4196 = vst [vmem:[%s8 + $0xb0] sm:$0xff] %v4171
  %4197 = vst [vmem:[%s8 + $0xb8] sm:$0xff] %v4172
  %4198 = vst [vmem:[%s8 + $0xc0] sm:$0xff] %v4173
  // Predicated region
  $region34: #{down_forward.1} parent=0 // pred_check
    _
  $region35: #{down_forward.1} parent=0 // pred_check_branch
    %4200 = sbr.rel (0) target = $region37
  $region36: #{down_forward.1} parent=0 // pred_region
    _
  $region37: #{down_forward.1} parent=0 // pred_fallthru
    _
  // Predicated region
  $region38: #{down_forward.1} parent=0 // pred_check
    _
  $region39: #{down_forward.1} parent=0 // pred_check_branch
    %4202 = sbr.rel (0) target = $region41
  $region40: #{down_forward.1} parent=0 // pred_region
    _
  $region41: #{down_forward.1} parent=0 // pred_fallthru
    _

</llo_original>
